<compile_context>
chip_gen: v6e
topology: v6e:2x2x1
jax: 0.10.0
libtpu: 0.0.40
codegen_flags: <defaults>
</compile_context>

<pallas_src>
import functools

import jax
import jax.numpy as jnp
from jax import lax
from jax.experimental import pallas as pl
from jax.experimental.pallas import tpu as pltpu


def _heads_per_write(n_heads, head_dim):
    """Smallest head-group size whose context write is a multiple of 128 lanes."""
    for g in range(1, n_heads + 1):
        if n_heads % g == 0 and (g * head_dim) % 128 == 0:
            return g
    return n_heads  # fall back to one full-width write


def mhsa_kernel(x_ref, wqkv_ref, bqkv_ref, wproj_ref, bproj_ref, o_ref,
                k_ref, v_ref, ctx_ref, *, n_heads, head_dim, tq, seq_len,
                cache_kv):
    E = n_heads * head_dim
    n_pad = k_ref.shape[0]
    compute_dtype = x_ref.dtype
    exact_div = compute_dtype == jnp.float32
    bqkv = bqkv_ref[...]                                    # (1, 3E) f32

    # ---- K/V projection over the full (padded) sequence --------------------
    # Two direct matmuls (no (N, 2E) f32 intermediate that is then lane-sliced);
    # results land in VMEM scratch. With cache_kv=True they are computed only
    # once per batch element and reused by every query tile of that batch.
    def compute_kv():
        xfull = x_ref[0]                                    # (N_pad, E)
        k = jnp.dot(xfull, wqkv_ref[:, E:2 * E],
                    preferred_element_type=jnp.float32)
        k_ref[...] = (k + bqkv[:, E:2 * E]).astype(k_ref.dtype)
        v = jnp.dot(xfull, wqkv_ref[:, 2 * E:3 * E],
                    preferred_element_type=jnp.float32)
        v_ref[...] = (v + bqkv[:, 2 * E:3 * E]).astype(v_ref.dtype)

    if cache_kv:
        @pl.when(pl.program_id(1) == 0)
        def _():
            compute_kv()
    else:
        compute_kv()

    # ---- Q projection for this query tile (sliced from the resident block) --
    q_start = pl.multiple_of(pl.program_id(1) * tq, tq)
    xq = x_ref[0, pl.ds(q_start, tq), :]                    # (TQ, E)
    q = jnp.dot(xq, wqkv_ref[:, 0:E], preferred_element_type=jnp.float32)
    q = (q + bqkv[:, 0:E]) * (head_dim ** -0.5)             # fold 1/sqrt(D) once
    q = q.astype(compute_dtype)

    k = k_ref[...]                                          # (N_pad, E)
    v = v_ref[...]                                          # (N_pad, E)

    # Key-padding mask (only materialized when the sequence was padded).
    key_valid = None
    if seq_len < n_pad:
        key_valid = lax.broadcasted_iota(jnp.int32, (tq, n_pad), 1) < seq_len

    # ---- per-head attention; context writes grouped to >=128 lanes ---------
    hg = _heads_per_write(n_heads, head_dim)
    for g0 in range(0, n_heads, hg):
        outs = []
        for h in range(g0, g0 + hg):
            lo = h * head_dim
            hi = lo + head_dim
            qh = q[:, lo:hi]                                # (TQ, D)
            kh = k[:, lo:hi]                                # (N_pad, D)
            vh = v[:, lo:hi]                                # (N_pad, D)

            # logits[i, j] = sum_d qh[i, d] * kh[j, d]  -> (TQ, N_pad), f32 acc.
            logits = lax.dot_general(qh, kh, (((1,), (1,)), ((), ())),
                                     preferred_element_type=jnp.float32)
            if key_valid is not None:
                logits = jnp.where(key_valid, logits, -jnp.inf)

            m = jnp.max(logits, axis=-1, keepdims=True)      # (TQ, 1)
            p = jnp.exp(logits - m)                          # (TQ, N_pad) f32
            denom = jnp.sum(p, axis=-1, keepdims=True)       # (TQ, 1)

            # attention @ V with unnormalized probs; normalize the small
            # (TQ, D) head output instead of the (TQ, N_pad) probabilities.
            ph = jnp.dot(p.astype(compute_dtype), vh,
                         preferred_element_type=jnp.float32)  # (TQ, D) f32
            ph = ph * pl.reciprocal(denom, approx=not exact_div)
            outs.append(ph)
        blk = outs[0] if len(outs) == 1 else jnp.concatenate(outs, axis=-1)
        ctx_ref[:, g0 * head_dim:(g0 + hg) * head_dim] = blk

    # ---- output projection (contraction depth E -> MXU-friendly) -----------
    out = jnp.dot(ctx_ref[...].astype(compute_dtype), wproj_ref[...],
                  preferred_element_type=jnp.float32)
    out = out + bproj_ref[...]                               # (TQ, E) f32
    o_ref[0] = out.astype(o_ref.dtype)


def _pick_query_tile(n_pad, embed_dim, batch):
    # Cap tq at 256 for large E so the working set also fits v7x's 64 MiB VMEM;
    # on v5e/v6e (128 MiB) 512 is comfortable and keeps the MXU M dim full.
    cap = 256 if embed_dim >= 1024 else 512
    for t in (512, 256, 128):
        if t > cap or n_pad % t != 0:
            continue
        if batch == 1 and t == n_pad and n_pad > 128:
            # Keep >=2 query tiles so both v7x TensorCores get work when B==1.
            continue
        return t
    return 128


def multi_head_self_attention(x, wqkv, bqkv, wproj, bproj, *, n_heads,
                              compute_dtype=jnp.bfloat16, tq=None):
    B, N, E = x.shape
    head_dim = E // n_heads
    assert head_dim * n_heads == E, "embed_dim must be divisible by n_heads"

    # Pad the sequence to a lane-aligned multiple of 128; pad keys are masked
    # to -inf inside the kernel and pad query rows are sliced off afterwards.
    n_pad = max(128, ((N + 127) // 128) * 128)

    if tq is None:
        tq = _pick_query_tile(n_pad, E, B)
    assert n_pad % tq == 0 and tq % 8 == 0
    g_tiles = n_pad // tq

    # K/V caching needs a sequential ("arbitrary") query axis; when B == 1 we
    # keep the query axis "parallel" instead so both v7x TensorCores are used.
    cache_kv = (g_tiles > 1) and (B > 1)
    q_semantics = "arbitrary" if cache_kv else "parallel"

    # bf16 MXU operands (halves weight DMA / VMEM); biases & accumulation in f32.
    x_c = x.astype(compute_dtype)
    if n_pad != N:
        x_c = jnp.pad(x_c, ((0, 0), (0, n_pad - N), (0, 0)))
    wqkv_c = wqkv.astype(compute_dtype)
    wproj_c = wproj.astype(compute_dtype)
    bqkv_f = bqkv.astype(jnp.float32)
    bproj_f = bproj.astype(jnp.float32)

    kernel = functools.partial(mhsa_kernel, n_heads=n_heads, head_dim=head_dim,
                               tq=tq, seq_len=N, cache_kv=cache_kv)

    itemsize = jnp.dtype(compute_dtype).itemsize
    proj_flops = 2 * B * n_pad * E * (4 * E)            # qkv (3E) + out proj (E)
    attn_flops = 4 * B * n_pad * n_pad * E               # QK^T + P@V
    cost = pl.CostEstimate(
        flops=proj_flops + attn_flops,
        transcendentals=B * n_heads * n_pad * n_pad,
        bytes_accessed=(B * n_pad * E * itemsize                 # x
                        + 4 * E * E * itemsize + 4 * E * 4       # weights+biases
                        + B * n_pad * E * jnp.dtype(x.dtype).itemsize))  # out

    out = pl.pallas_call(
        kernel,
        out_shape=jax.ShapeDtypeStruct((B, n_pad, E), x.dtype),
        grid_spec=pltpu.PrefetchScalarGridSpec(
            num_scalar_prefetch=0,
            grid=(B, g_tiles),
            in_specs=[
                pl.BlockSpec((1, n_pad, E), lambda b, q: (b, 0, 0)),  # x (full seq)
                pl.BlockSpec((E, 3 * E), lambda b, q: (0, 0)),        # Wqkv
                pl.BlockSpec((1, 3 * E), lambda b, q: (0, 0)),        # bqkv
                pl.BlockSpec((E, E), lambda b, q: (0, 0)),            # Wproj
                pl.BlockSpec((1, E), lambda b, q: (0, 0)),            # bproj
            ],
            out_specs=pl.BlockSpec((1, tq, E), lambda b, q: (b, q, 0)),
            scratch_shapes=[
                pltpu.VMEM((n_pad, E), compute_dtype),   # K cache
                pltpu.VMEM((n_pad, E), compute_dtype),   # V cache
                pltpu.VMEM((tq, E), jnp.float32),        # (TQ, E) context accum
            ],
        ),
        compiler_params=pltpu.CompilerParams(
            dimension_semantics=("parallel", q_semantics),
            vmem_limit_bytes=48 * 1024 * 1024,   # headroom inside v7x's 64 MiB
        ),
        cost_estimate=cost,
    )(x_c, wqkv_c, bqkv_f, wproj_c, bproj_f)

    return out[:, :N, :] if n_pad != N else out


def reference_mhsa(x, wqkv, bqkv, wproj, bproj, *, n_heads):
    """Pure-JAX reference mirroring the PyTorch forward (eval mode)."""
    B, N, E = x.shape
    D = E // n_heads
    qkv = x @ wqkv + bqkv[0]                          # (B, N, 3E)
    qkv = qkv.reshape(B, N, 3, n_heads, D)
    qkv = jnp.transpose(qkv, (2, 0, 3, 1, 4))         # (3, B, H, N, D)
    q, k, v = qkv[0], qkv[1], qkv[2]
    attn = (q @ jnp.swapaxes(k, -2, -1)) * (D ** -0.5)
    attn = jax.nn.softmax(attn, axis=-1)
    out = attn @ v                                    # (B, H, N, D)
    out = jnp.transpose(out, (0, 2, 1, 3)).reshape(B, N, E)
    out = out @ wproj + bproj[0]
    return out


if __name__ == "__main__":
    # Small, module-consistent shapes: batch=2, n_patches=8, embed_dim=32, heads=4.
    # (Real ViT sizes, e.g. B>=8, N=197, E=768, H=12, are where the K/V caching,
    # lane-dense stores and bf16 MXU path actually pay off.)
    B, N, E, H = 2, 8, 32, 4

    key = jax.random.PRNGKey(0)
    k_x, k_wqkv, k_bqkv, k_wproj, k_bproj = jax.random.split(key, 5)

    x = jax.random.normal(k_x, (B, N, E), dtype=jnp.float32)
    wqkv = jax.random.normal(k_wqkv, (E, 3 * E), dtype=jnp.float32) * (E ** -0.5)
    bqkv = jax.random.normal(k_bqkv, (1, 3 * E), dtype=jnp.float32) * 0.01
    wproj = jax.random.normal(k_wproj, (E, E), dtype=jnp.float32) * (E ** -0.5)
    bproj = jax.random.normal(k_bproj, (1, E), dtype=jnp.float32) * 0.01

    ref = reference_mhsa(x, wqkv, bqkv, wproj, bproj, n_heads=H)

    # f32 MXU path: tight check against the pure-JAX reference.
    out_f32 = multi_head_self_attention(
        x, wqkv, bqkv, wproj, bproj, n_heads=H, compute_dtype=jnp.float32)
    out_f32 = jax.block_until_ready(out_f32)
    assert out_f32.shape == (B, N, E)
    err_f32 = jnp.max(jnp.abs(out_f32 - ref))
    assert jnp.allclose(out_f32, ref, atol=1e-4, rtol=1e-4), (
        f"f32 path max abs err {err_f32}")

    # bf16 MXU operands + f32 accumulation (production path).
    out_bf16 = multi_head_self_attention(
        x, wqkv, bqkv, wproj, bproj, n_heads=H, compute_dtype=jnp.bfloat16)
    out_bf16 = jax.block_until_ready(out_bf16)
    assert out_bf16.shape == (B, N, E)
    err_bf16 = jnp.max(jnp.abs(out_bf16 - ref))
    assert jnp.allclose(out_bf16, ref, atol=4e-2, rtol=4e-2), (
        f"bf16 path max abs err {err_bf16}")

    # Exercise the multi-query-tile K/V-cache path (q axis "arbitrary").
    out_tiled = multi_head_self_attention(
        x, wqkv, bqkv, wproj, bproj, n_heads=H, compute_dtype=jnp.float32, tq=64)
    out_tiled = jax.block_until_ready(out_tiled)
    err_tiled = jnp.max(jnp.abs(out_tiled - ref))
    assert jnp.allclose(out_tiled, ref, atol=1e-4, rtol=1e-4), (
        f"tiled K/V-cache path max abs err {err_tiled}")

    print("KERNEL_OK")
</pallas_src>

<mosaic_0001>
module attributes {stable_mosaic.version = 11 : i64} {
  func.func @mhsa_kernel(%arg0: i32, %arg1: i32, %arg2: memref<1x128x32xf32, #tpu.memory_space<vmem>>, %arg3: memref<32x96xf32, #tpu.memory_space<vmem>>, %arg4: memref<1x96xf32, #tpu.memory_space<vmem>>, %arg5: memref<32x32xf32, #tpu.memory_space<vmem>>, %arg6: memref<1x32xf32, #tpu.memory_space<vmem>>, %arg7: memref<1x128x32xf32, #tpu.memory_space<vmem>>, %arg8: memref<128x32xf32, #tpu.memory_space<vmem>>, %arg9: memref<128x32xf32, #tpu.memory_space<vmem>>, %arg10: memref<128x32xf32, #tpu.memory_space<vmem>>) attributes {dimension_semantics = [#tpu.dimension_semantics<parallel>, #tpu.dimension_semantics<parallel>], iteration_bounds = array<i64: 2, 1>, scalar_prefetch = 0 : i64, scratch_operands = 3 : i64, tpu.core_type = #tpu.core_type<tc>, window_params = [{transform_indices = @transform_0, window_bounds = array<i64: 1, 128, 32>}, {pipeline_mode = #tpu.pipeline_mode<synchronous>, transform_indices = @transform_1, window_bounds = array<i64: 32, 96>}, {pipeline_mode = #tpu.pipeline_mode<synchronous>, transform_indices = @transform_2, window_bounds = array<i64: 1, 96>}, {pipeline_mode = #tpu.pipeline_mode<synchronous>, transform_indices = @transform_3, window_bounds = array<i64: 32, 32>}, {pipeline_mode = #tpu.pipeline_mode<synchronous>, transform_indices = @transform_4, window_bounds = array<i64: 1, 32>}, {transform_indices = @transform_5, window_bounds = array<i64: 1, 128, 32>}]} {
    %c0 = arith.constant 0 : index
    %c0_0 = arith.constant 0 : index
    %0 = vector.load %arg4[%c0, %c0_0] : memref<1x96xf32, #tpu.memory_space<vmem>>, vector<1x96xf32>
    %c0_1 = arith.constant 0 : index
    %c0_2 = arith.constant 0 : index
    %c0_3 = arith.constant 0 : index
    %1 = vector.load %arg2[%c0_1, %c0_2, %c0_3] : memref<1x128x32xf32, #tpu.memory_space<vmem>>, vector<1x128x32xf32>
    %2 = vector.shape_cast %1 : vector<1x128x32xf32> to vector<128x32xf32>
    %c0_4 = arith.constant 0 : index
    %c32 = arith.constant 32 : index
    %3 = vector.load %arg3[%c0_4, %c32] : memref<32x96xf32, #tpu.memory_space<vmem>>, vector<32x32xf32>
    %cst = arith.constant dense<0.000000e+00> : vector<128x32xf32>
    %4 = tpu.matmul %2, %3, %cst {dimension_numbers = #tpu.dot_dimension_numbers<[1], [0], [0], [1], [0, 0, 1, 1], [], []>} : vector<128x32xf32>, vector<32x32xf32>, vector<128x32xf32> -> vector<128x32xf32>
    %5 = vector.extract_strided_slice %0 {offsets = [0, 32], sizes = [1, 32], strides = [1, 1]} : vector<1x96xf32> to vector<1x32xf32>
    %6 = vector.broadcast %5 : vector<1x32xf32> to vector<128x32xf32>
    %7 = arith.addf %4, %6 : vector<128x32xf32>
    %c0_5 = arith.constant 0 : index
    %c0_6 = arith.constant 0 : index
    %8 = vector.load %arg8[%c0_5, %c0_6] : memref<128x32xf32, #tpu.memory_space<vmem>>, vector<128x32xf32>
    tpu.vector_store %arg8[%c0_5, %c0_6], %7 {strides = array<i32>} : memref<128x32xf32, #tpu.memory_space<vmem>>, vector<128x32xf32>,
    %c0_7 = arith.constant 0 : index
    %c64 = arith.constant 64 : index
    %9 = vector.load %arg3[%c0_7, %c64] : memref<32x96xf32, #tpu.memory_space<vmem>>, vector<32x32xf32>
    %cst_8 = arith.constant dense<0.000000e+00> : vector<128x32xf32>
    %10 = tpu.matmul %2, %9, %cst_8 {dimension_numbers = #tpu.dot_dimension_numbers<[1], [0], [0], [1], [0, 0, 1, 1], [], []>} : vector<128x32xf32>, vector<32x32xf32>, vector<128x32xf32> -> vector<128x32xf32>
    %11 = vector.extract_strided_slice %0 {offsets = [0, 64], sizes = [1, 32], strides = [1, 1]} : vector<1x96xf32> to vector<1x32xf32>
    %12 = vector.broadcast %11 : vector<1x32xf32> to vector<128x32xf32>
    %13 = arith.addf %10, %12 : vector<128x32xf32>
    %c0_9 = arith.constant 0 : index
    %c0_10 = arith.constant 0 : index
    %14 = vector.load %arg9[%c0_9, %c0_10] : memref<128x32xf32, #tpu.memory_space<vmem>>, vector<128x32xf32>
    tpu.vector_store %arg9[%c0_9, %c0_10], %13 {strides = array<i32>} : memref<128x32xf32, #tpu.memory_space<vmem>>, vector<128x32xf32>,
    %c128_i32 = arith.constant 128 : i32
    %15 = arith.muli %arg1, %c128_i32 : i32
    %16 = tpu.assume_multiple %15, 128 : i32
    %c0_11 = arith.constant 0 : index
    %17 = arith.index_cast %16 : i32 to index
    %c0_12 = arith.constant 0 : index
    %18 = vector.load %arg2[%c0_11, %17, %c0_12] : memref<1x128x32xf32, #tpu.memory_space<vmem>>, vector<1x128x32xf32>
    %19 = vector.shape_cast %18 : vector<1x128x32xf32> to vector<128x32xf32>
    %c0_13 = arith.constant 0 : index
    %c0_14 = arith.constant 0 : index
    %20 = vector.load %arg3[%c0_13, %c0_14] : memref<32x96xf32, #tpu.memory_space<vmem>>, vector<32x32xf32>
    %cst_15 = arith.constant dense<0.000000e+00> : vector<128x32xf32>
    %21 = tpu.matmul %19, %20, %cst_15 {dimension_numbers = #tpu.dot_dimension_numbers<[1], [0], [0], [1], [0, 0, 1, 1], [], []>} : vector<128x32xf32>, vector<32x32xf32>, vector<128x32xf32> -> vector<128x32xf32>
    %22 = vector.extract_strided_slice %0 {offsets = [0, 0], sizes = [1, 32], strides = [1, 1]} : vector<1x96xf32> to vector<1x32xf32>
    %23 = vector.broadcast %22 : vector<1x32xf32> to vector<128x32xf32>
    %24 = arith.addf %21, %23 : vector<128x32xf32>
    %cst_16 = arith.constant 0.353553385 : f32
    %25 = vector.broadcast %cst_16 : f32 to vector<128x32xf32>
    %26 = arith.mulf %24, %25 : vector<128x32xf32>
    %c0_17 = arith.constant 0 : index
    %c0_18 = arith.constant 0 : index
    %27 = vector.load %arg8[%c0_17, %c0_18] : memref<128x32xf32, #tpu.memory_space<vmem>>, vector<128x32xf32>
    %c0_19 = arith.constant 0 : index
    %c0_20 = arith.constant 0 : index
    %28 = vector.load %arg9[%c0_19, %c0_20] : memref<128x32xf32, #tpu.memory_space<vmem>>, vector<128x32xf32>
    %29 = tpu.iota {dimensions = array<i32: 1>} : vector<128x128xi32>
    %c8_i32 = arith.constant 8 : i32
    %30 = vector.broadcast %c8_i32 : i32 to vector<128x128xi32>
    %31 = arith.cmpi slt, %29, %30 : vector<128x128xi32>
    %32 = vector.extract_strided_slice %26 {offsets = [0, 0], sizes = [128, 8], strides = [1, 1]} : vector<128x32xf32> to vector<128x8xf32>
    %33 = vector.extract_strided_slice %27 {offsets = [0, 0], sizes = [128, 8], strides = [1, 1]} : vector<128x32xf32> to vector<128x8xf32>
    %34 = vector.extract_strided_slice %28 {offsets = [0, 0], sizes = [128, 8], strides = [1, 1]} : vector<128x32xf32> to vector<128x8xf32>
    %cst_21 = arith.constant dense<0.000000e+00> : vector<128x128xf32>
    %35 = tpu.matmul %32, %33, %cst_21 {dimension_numbers = #tpu.dot_dimension_numbers<[1], [1], [0], [0], [0, 0, 1, 0], [], []>} : vector<128x8xf32>, vector<128x8xf32>, vector<128x128xf32> -> vector<128x128xf32>
    %cst_22 = arith.constant 0xFF800000 : f32
    %36 = vector.broadcast %cst_22 : f32 to vector<128x128xf32>
    %37 = arith.select %31, %35, %36 : vector<128x128xi1>, vector<128x128xf32>
    %cst_23 = arith.constant dense<0xFF800000> : vector<128xf32>
    %38 = vector.multi_reduction <maximumf>, %37, %cst_23 [1] : vector<128x128xf32> to vector<128xf32>
    %39 = vector.shape_cast %38 : vector<128xf32> to vector<128x1xf32>
    %40 = vector.broadcast %39 : vector<128x1xf32> to vector<128x128xf32>
    %41 = arith.subf %37, %40 : vector<128x128xf32>
    %42 = math.exp %41 : vector<128x128xf32>
    %cst_24 = arith.constant dense<0.000000e+00> : vector<128xf32>
    %43 = vector.multi_reduction <add>, %42, %cst_24 [1] : vector<128x128xf32> to vector<128xf32>
    %44 = vector.shape_cast %43 : vector<128xf32> to vector<128x1xf32>
    %cst_25 = arith.constant dense<0.000000e+00> : vector<128x8xf32>
    %45 = tpu.matmul %42, %34, %cst_25 {dimension_numbers = #tpu.dot_dimension_numbers<[1], [0], [0], [1], [0, 0, 1, 1], [], []>} : vector<128x128xf32>, vector<128x8xf32>, vector<128x8xf32> -> vector<128x8xf32>
    %46 = tpu.reciprocal %44 : vector<128x1xf32> -> vector<128x1xf32>
    %47 = vector.broadcast %46 : vector<128x1xf32> to vector<128x8xf32>
    %48 = arith.mulf %45, %47 : vector<128x8xf32>
    %49 = vector.extract_strided_slice %26 {offsets = [0, 8], sizes = [128, 8], strides = [1, 1]} : vector<128x32xf32> to vector<128x8xf32>
    %50 = vector.extract_strided_slice %27 {offsets = [0, 8], sizes = [128, 8], strides = [1, 1]} : vector<128x32xf32> to vector<128x8xf32>
    %51 = vector.extract_strided_slice %28 {offsets = [0, 8], sizes = [128, 8], strides = [1, 1]} : vector<128x32xf32> to vector<128x8xf32>
    %cst_26 = arith.constant dense<0.000000e+00> : vector<128x128xf32>
    %52 = tpu.matmul %49, %50, %cst_26 {dimension_numbers = #tpu.dot_dimension_numbers<[1], [1], [0], [0], [0, 0, 1, 0], [], []>} : vector<128x8xf32>, vector<128x8xf32>, vector<128x128xf32> -> vector<128x128xf32>
    %cst_27 = arith.constant 0xFF800000 : f32
    %53 = vector.broadcast %cst_27 : f32 to vector<128x128xf32>
    %54 = arith.select %31, %52, %53 : vector<128x128xi1>, vector<128x128xf32>
    %cst_28 = arith.constant dense<0xFF800000> : vector<128xf32>
    %55 = vector.multi_reduction <maximumf>, %54, %cst_28 [1] : vector<128x128xf32> to vector<128xf32>
    %56 = vector.shape_cast %55 : vector<128xf32> to vector<128x1xf32>
    %57 = vector.broadcast %56 : vector<128x1xf32> to vector<128x128xf32>
    %58 = arith.subf %54, %57 : vector<128x128xf32>
    %59 = math.exp %58 : vector<128x128xf32>
    %cst_29 = arith.constant dense<0.000000e+00> : vector<128xf32>
    %60 = vector.multi_reduction <add>, %59, %cst_29 [1] : vector<128x128xf32> to vector<128xf32>
    %61 = vector.shape_cast %60 : vector<128xf32> to vector<128x1xf32>
    %cst_30 = arith.constant dense<0.000000e+00> : vector<128x8xf32>
    %62 = tpu.matmul %59, %51, %cst_30 {dimension_numbers = #tpu.dot_dimension_numbers<[1], [0], [0], [1], [0, 0, 1, 1], [], []>} : vector<128x128xf32>, vector<128x8xf32>, vector<128x8xf32> -> vector<128x8xf32>
    %63 = tpu.reciprocal %61 : vector<128x1xf32> -> vector<128x1xf32>
    %64 = vector.broadcast %63 : vector<128x1xf32> to vector<128x8xf32>
    %65 = arith.mulf %62, %64 : vector<128x8xf32>
    %66 = vector.extract_strided_slice %26 {offsets = [0, 16], sizes = [128, 8], strides = [1, 1]} : vector<128x32xf32> to vector<128x8xf32>
    %67 = vector.extract_strided_slice %27 {offsets = [0, 16], sizes = [128, 8], strides = [1, 1]} : vector<128x32xf32> to vector<128x8xf32>
    %68 = vector.extract_strided_slice %28 {offsets = [0, 16], sizes = [128, 8], strides = [1, 1]} : vector<128x32xf32> to vector<128x8xf32>
    %cst_31 = arith.constant dense<0.000000e+00> : vector<128x128xf32>
    %69 = tpu.matmul %66, %67, %cst_31 {dimension_numbers = #tpu.dot_dimension_numbers<[1], [1], [0], [0], [0, 0, 1, 0], [], []>} : vector<128x8xf32>, vector<128x8xf32>, vector<128x128xf32> -> vector<128x128xf32>
    %cst_32 = arith.constant 0xFF800000 : f32
    %70 = vector.broadcast %cst_32 : f32 to vector<128x128xf32>
    %71 = arith.select %31, %69, %70 : vector<128x128xi1>, vector<128x128xf32>
    %cst_33 = arith.constant dense<0xFF800000> : vector<128xf32>
    %72 = vector.multi_reduction <maximumf>, %71, %cst_33 [1] : vector<128x128xf32> to vector<128xf32>
    %73 = vector.shape_cast %72 : vector<128xf32> to vector<128x1xf32>
    %74 = vector.broadcast %73 : vector<128x1xf32> to vector<128x128xf32>
    %75 = arith.subf %71, %74 : vector<128x128xf32>
    %76 = math.exp %75 : vector<128x128xf32>
    %cst_34 = arith.constant dense<0.000000e+00> : vector<128xf32>
    %77 = vector.multi_reduction <add>, %76, %cst_34 [1] : vector<128x128xf32> to vector<128xf32>
    %78 = vector.shape_cast %77 : vector<128xf32> to vector<128x1xf32>
    %cst_35 = arith.constant dense<0.000000e+00> : vector<128x8xf32>
    %79 = tpu.matmul %76, %68, %cst_35 {dimension_numbers = #tpu.dot_dimension_numbers<[1], [0], [0], [1], [0, 0, 1, 1], [], []>} : vector<128x128xf32>, vector<128x8xf32>, vector<128x8xf32> -> vector<128x8xf32>
    %80 = tpu.reciprocal %78 : vector<128x1xf32> -> vector<128x1xf32>
    %81 = vector.broadcast %80 : vector<128x1xf32> to vector<128x8xf32>
    %82 = arith.mulf %79, %81 : vector<128x8xf32>
    %83 = vector.extract_strided_slice %26 {offsets = [0, 24], sizes = [128, 8], strides = [1, 1]} : vector<128x32xf32> to vector<128x8xf32>
    %84 = vector.extract_strided_slice %27 {offsets = [0, 24], sizes = [128, 8], strides = [1, 1]} : vector<128x32xf32> to vector<128x8xf32>
    %85 = vector.extract_strided_slice %28 {offsets = [0, 24], sizes = [128, 8], strides = [1, 1]} : vector<128x32xf32> to vector<128x8xf32>
    %cst_36 = arith.constant dense<0.000000e+00> : vector<128x128xf32>
    %86 = tpu.matmul %83, %84, %cst_36 {dimension_numbers = #tpu.dot_dimension_numbers<[1], [1], [0], [0], [0, 0, 1, 0], [], []>} : vector<128x8xf32>, vector<128x8xf32>, vector<128x128xf32> -> vector<128x128xf32>
    %cst_37 = arith.constant 0xFF800000 : f32
    %87 = vector.broadcast %cst_37 : f32 to vector<128x128xf32>
    %88 = arith.select %31, %86, %87 : vector<128x128xi1>, vector<128x128xf32>
    %cst_38 = arith.constant dense<0xFF800000> : vector<128xf32>
    %89 = vector.multi_reduction <maximumf>, %88, %cst_38 [1] : vector<128x128xf32> to vector<128xf32>
    %90 = vector.shape_cast %89 : vector<128xf32> to vector<128x1xf32>
    %91 = vector.broadcast %90 : vector<128x1xf32> to vector<128x128xf32>
    %92 = arith.subf %88, %91 : vector<128x128xf32>
    %93 = math.exp %92 : vector<128x128xf32>
    %cst_39 = arith.constant dense<0.000000e+00> : vector<128xf32>
    %94 = vector.multi_reduction <add>, %93, %cst_39 [1] : vector<128x128xf32> to vector<128xf32>
    %95 = vector.shape_cast %94 : vector<128xf32> to vector<128x1xf32>
    %cst_40 = arith.constant dense<0.000000e+00> : vector<128x8xf32>
    %96 = tpu.matmul %93, %85, %cst_40 {dimension_numbers = #tpu.dot_dimension_numbers<[1], [0], [0], [1], [0, 0, 1, 1], [], []>} : vector<128x128xf32>, vector<128x8xf32>, vector<128x8xf32> -> vector<128x8xf32>
    %97 = tpu.reciprocal %95 : vector<128x1xf32> -> vector<128x1xf32>
    %98 = vector.broadcast %97 : vector<128x1xf32> to vector<128x8xf32>
    %99 = arith.mulf %96, %98 : vector<128x8xf32>
    %100 = tpu.concatenate %48, %65, %82, %99 in 1 : vector<128x8xf32>, vector<128x8xf32>, vector<128x8xf32>, vector<128x8xf32> -> vector<128x32xf32>
    %c0_41 = arith.constant 0 : index
    %c0_42 = arith.constant 0 : index
    %101 = vector.load %arg10[%c0_41, %c0_42] : memref<128x32xf32, #tpu.memory_space<vmem>>, vector<128x32xf32>
    tpu.vector_store %arg10[%c0_41, %c0_42], %100 {strides = array<i32>} : memref<128x32xf32, #tpu.memory_space<vmem>>, vector<128x32xf32>,
    %c0_43 = arith.constant 0 : index
    %c0_44 = arith.constant 0 : index
    %102 = vector.load %arg10[%c0_43, %c0_44] : memref<128x32xf32, #tpu.memory_space<vmem>>, vector<128x32xf32>
    %c0_45 = arith.constant 0 : index
    %c0_46 = arith.constant 0 : index
    %103 = vector.load %arg5[%c0_45, %c0_46] : memref<32x32xf32, #tpu.memory_space<vmem>>, vector<32x32xf32>
    %cst_47 = arith.constant dense<0.000000e+00> : vector<128x32xf32>
    %104 = tpu.matmul %102, %103, %cst_47 {dimension_numbers = #tpu.dot_dimension_numbers<[1], [0], [0], [1], [0, 0, 1, 1], [], []>} : vector<128x32xf32>, vector<32x32xf32>, vector<128x32xf32> -> vector<128x32xf32>
    %c0_48 = arith.constant 0 : index
    %c0_49 = arith.constant 0 : index
    %105 = vector.load %arg6[%c0_48, %c0_49] : memref<1x32xf32, #tpu.memory_space<vmem>>, vector<1x32xf32>
    %106 = vector.broadcast %105 : vector<1x32xf32> to vector<128x32xf32>
    %107 = arith.addf %104, %106 : vector<128x32xf32>
    %c0_50 = arith.constant 0 : index
    %c0_51 = arith.constant 0 : index
    %c0_52 = arith.constant 0 : index
    %108 = vector.load %arg7[%c0_50, %c0_51, %c0_52] : memref<1x128x32xf32, #tpu.memory_space<vmem>>, vector<1x128x32xf32>
    %109 = vector.shape_cast %108 : vector<1x128x32xf32> to vector<128x32xf32>
    %110 = vector.shape_cast %107 : vector<128x32xf32> to vector<1x128x32xf32>
    tpu.vector_store %arg7[%c0_50, %c0_51, %c0_52], %110 {strides = array<i32>} : memref<1x128x32xf32, #tpu.memory_space<vmem>>, vector<1x128x32xf32>,
    return
  }
  func.func @transform_0(%arg0: i32, %arg1: i32) -> (i32, i32, i32) {
    %c0_i32 = arith.constant 0 : i32
    %c0_i32_0 = arith.constant 0 : i32
    %c0_i32_1 = arith.constant 0 : i32
    return %arg0, %c0_i32, %c0_i32_0 : i32, i32, i32
  }
  func.func @transform_1(%arg0: i32, %arg1: i32) -> (i32, i32) {
    %c0_i32 = arith.constant 0 : i32
    %c0_i32_0 = arith.constant 0 : i32
    %c0_i32_1 = arith.constant 0 : i32
    return %c0_i32, %c0_i32_0 : i32, i32
  }
  func.func @transform_2(%arg0: i32, %arg1: i32) -> (i32, i32) {
    %c0_i32 = arith.constant 0 : i32
    %c0_i32_0 = arith.constant 0 : i32
    %c0_i32_1 = arith.constant 0 : i32
    return %c0_i32, %c0_i32_0 : i32, i32
  }
  func.func @transform_3(%arg0: i32, %arg1: i32) -> (i32, i32) {
    %c0_i32 = arith.constant 0 : i32
    %c0_i32_0 = arith.constant 0 : i32
    %c0_i32_1 = arith.constant 0 : i32
    return %c0_i32, %c0_i32_0 : i32, i32
  }
  func.func @transform_4(%arg0: i32, %arg1: i32) -> (i32, i32) {
    %c0_i32 = arith.constant 0 : i32
    %c0_i32_0 = arith.constant 0 : i32
    %c0_i32_1 = arith.constant 0 : i32
    return %c0_i32, %c0_i32_0 : i32, i32
  }
  func.func @transform_5(%arg0: i32, %arg1: i32) -> (i32, i32, i32) {
    %c0_i32 = arith.constant 0 : i32
    %c0_i32_0 = arith.constant 0 : i32
    return %arg0, %arg1, %c0_i32 : i32, i32, i32
  }
}

</mosaic_0001>

<llo_original>
// kernel: tpu_custom_call.1
$region0: #{tpu_custom_call.1}
  #allocation0 [shape = 'u32[]', space=smem, size = 0x4, offset = 0x4, fixed_abs, tag = 'smem constant byte address 0x4 - core index']
  #allocation1 [shape = 'u32[144,128]{1,0:T(1,128)}', space=vmem, size = 0x12000, scoped, tag = 'internal scratch']
  #allocation2 [shape = 'f32[128,32]{1,0:T(8,128)}', space=vmem, size = 0x10000, scoped, tag = 'scratch operand']
  #allocation3 [shape = 'f32[128,32]{1,0:T(8,128)}', space=vmem, size = 0x10000, scoped, tag = 'scratch operand']
  #allocation4 [shape = 'f32[128,32]{1,0:T(8,128)}', space=vmem, size = 0x10000, scoped, tag = 'scratch operand']
  %s0 = inlined_call_operand.vmem [shape: f32[2,128,32], index: 0, kind: input, shape index: {}]
  %s1 = inlined_call_operand.vmem [shape: f32[32,96], index: 1, kind: input, shape index: {}]
  %s2 = inlined_call_operand.vmem [shape: f32[1,96], index: 2, kind: input, shape index: {}]
  %s3 = inlined_call_operand.vmem [shape: f32[32,32], index: 3, kind: input, shape index: {}]
  %s4 = inlined_call_operand.vmem [shape: f32[1,32], index: 4, kind: input, shape index: {}]
  %s5 = inlined_call_operand.vmem [shape: f32[2,128,32], index: 5, kind: output, shape index: {}]
  %s6 = sld [smem:[#allocation0]]
  $region53: #{tpu_custom_call.1} parent=0
    _
  %s8 = ssub.s32 1, %s6
  %s9 = scalar_select 0, %s8, %s6
  loop: start=0, step=1, limit=4
  $region2: #{tpu_custom_call.1} parent=0 // loop_pre_header
    _
  $region3: #{tpu_custom_call.1} parent=0 // loop_header
    %s11 = sphi 0, %s15
    %p12 = scmp.ge.s32.totalorder %s11, 4
    %s18 = sphi 0, %s30
    %s19 = sphi 0, %s26
    %s20 = sphi 0, %s18
    %s21 = sphi 0, %s19
    %s22 = sphi 0, %s20
    %s23 = sphi 0, %s21
    %s33 = sphi 0, %s35
    %s36 = sphi 0, %s33
    %s37 = sphi 0, %s36
    %s53 = sphi 0, %s37
    %s57 = sphi 0, %s57
    %s59 = sphi 0, %s57
    %s60 = sphi 0, %s59
    %s74 = sphi 0, %s60
    %s78 = sphi 0, %s78
    %s80 = sphi 0, %s78
    %s81 = sphi 0, %s80
    %s95 = sphi 0, %s81
    %s99 = sphi 0, %s99
    %s101 = sphi 0, %s99
    %s102 = sphi 0, %s101
    %s116 = sphi 0, %s102
    %s120 = sphi 0, %s120
    %s122 = sphi 0, %s120
    %s123 = sphi 0, %s122
    %s137 = sphi 0, %s123
    %s145 = sphi 0, %s147
    %s148 = sphi 0, %s145
    %s149 = sphi 0, %s148
    %s165 = sphi 0, %s149
  $region4: #{tpu_custom_call.1} parent=0 // loop_header_branch
    %14 = sbr.rel (%p12) target = $region8
  $region5: #{tpu_custom_call.1} parent=0 // loop_body
    %s16 = ssub.s32 %s11, 1
    %s17 = ssub.s32 %s11, 2
    %s24 = sadd.s32 1, %s19
    %p25 = scmp.ge.s32.totalorder %s24, 1
    %s26 = scalar_select %p25, 0, %s24
    %s27 = sadd.s32 1, %s18
    %s28 = scalar_select %p25, %s27, %s18
    %p29 = scmp.ge.s32.totalorder %s28, 2
    %s30 = scalar_select %p29, 0, %s28
    %s31 = ssub.s32 %s18, %s30
    %p32 = scmp.eq.s32.totalorder %s31, 0
    %s34 = sadd.s32 %s33, 1
    %s35 = scalar_select %p32, %s33, %s34
    %p38 = pneg %p32
    %p39 = scmp.eq.s32.totalorder %s11, 1
    %p40 = por %p38, %p39
    %p41 = scmp.ne.s32.totalorder %s33, %s36
    %p42 = scmp.eq.s32.totalorder %s11, 0
    %p43 = por %p41, %p42
    %p44 = scmp.ne.s32.totalorder %s33, %s36
    %p45 = scmp.eq.s32.totalorder %s16, 1
    %p46 = por %p44, %p45
    %p47 = scmp.ne.s32.totalorder %s36, %s37
    %p48 = scmp.eq.s32.totalorder %s16, 0
    %p49 = por %p47, %p48
    %p50 = scmp.ne.s32.totalorder %s36, %s37
    %p51 = scmp.eq.s32.totalorder %s17, 1
    %p52 = por %p50, %p51
    %p54 = scmp.ne.s32.totalorder %s37, %s53
    %p55 = scmp.eq.s32.totalorder %s17, 0
    %p56 = por %p54, %p55
    %s58 = sadd.s32 %s57, 1
    %p61 = scmp.eq.s32.totalorder %s11, 1
    %p62 = scmp.ne.s32.totalorder %s57, %s59
    %p63 = scmp.eq.s32.totalorder %s11, 0
    %p64 = por %p62, %p63
    %p65 = scmp.ne.s32.totalorder %s57, %s59
    %p66 = scmp.eq.s32.totalorder %s16, 1
    %p67 = por %p65, %p66
    %p68 = scmp.ne.s32.totalorder %s59, %s60
    %p69 = scmp.eq.s32.totalorder %s16, 0
    %p70 = por %p68, %p69
    %p71 = scmp.ne.s32.totalorder %s59, %s60
    %p72 = scmp.eq.s32.totalorder %s17, 1
    %p73 = por %p71, %p72
    %p75 = scmp.ne.s32.totalorder %s60, %s74
    %p76 = scmp.eq.s32.totalorder %s17, 0
    %p77 = por %p75, %p76
    %s79 = sadd.s32 %s78, 1
    %p82 = scmp.eq.s32.totalorder %s11, 1
    %p83 = scmp.ne.s32.totalorder %s78, %s80
    %p84 = scmp.eq.s32.totalorder %s11, 0
    %p85 = por %p83, %p84
    %p86 = scmp.ne.s32.totalorder %s78, %s80
    %p87 = scmp.eq.s32.totalorder %s16, 1
    %p88 = por %p86, %p87
    %p89 = scmp.ne.s32.totalorder %s80, %s81
    %p90 = scmp.eq.s32.totalorder %s16, 0
    %p91 = por %p89, %p90
    %p92 = scmp.ne.s32.totalorder %s80, %s81
    %p93 = scmp.eq.s32.totalorder %s17, 1
    %p94 = por %p92, %p93
    %p96 = scmp.ne.s32.totalorder %s81, %s95
    %p97 = scmp.eq.s32.totalorder %s17, 0
    %p98 = por %p96, %p97
    %s100 = sadd.s32 %s99, 1
    %p103 = scmp.eq.s32.totalorder %s11, 1
    %p104 = scmp.ne.s32.totalorder %s99, %s101
    %p105 = scmp.eq.s32.totalorder %s11, 0
    %p106 = por %p104, %p105
    %p107 = scmp.ne.s32.totalorder %s99, %s101
    %p108 = scmp.eq.s32.totalorder %s16, 1
    %p109 = por %p107, %p108
    %p110 = scmp.ne.s32.totalorder %s101, %s102
    %p111 = scmp.eq.s32.totalorder %s16, 0
    %p112 = por %p110, %p111
    %p113 = scmp.ne.s32.totalorder %s101, %s102
    %p114 = scmp.eq.s32.totalorder %s17, 1
    %p115 = por %p113, %p114
    %p117 = scmp.ne.s32.totalorder %s102, %s116
    %p118 = scmp.eq.s32.totalorder %s17, 0
    %p119 = por %p117, %p118
    %s121 = sadd.s32 %s120, 1
    %p124 = scmp.eq.s32.totalorder %s11, 1
    %p125 = scmp.ne.s32.totalorder %s120, %s122
    %p126 = scmp.eq.s32.totalorder %s11, 0
    %p127 = por %p125, %p126
    %p128 = scmp.ne.s32.totalorder %s120, %s122
    %p129 = scmp.eq.s32.totalorder %s16, 1
    %p130 = por %p128, %p129
    %p131 = scmp.ne.s32.totalorder %s122, %s123
    %p132 = scmp.eq.s32.totalorder %s16, 0
    %p133 = por %p131, %p132
    %p134 = scmp.ne.s32.totalorder %s122, %s123
    %p135 = scmp.eq.s32.totalorder %s17, 1
    %p136 = por %p134, %p135
    %p138 = scmp.ne.s32.totalorder %s123, %s137
    %p139 = scmp.eq.s32.totalorder %s17, 0
    %p140 = por %p138, %p139
    %s141 = ssub.s32 %s18, %s30
    %s142 = ssub.s32 %s19, %s26
    %s143 = sor.u32 %s141, %s142
    %p144 = scmp.eq.s32.totalorder %s143, 0
    %s146 = sadd.s32 %s145, 1
    %s147 = scalar_select %p144, %s145, %s146
    %p150 = pneg %p144
    %p151 = scmp.eq.s32.totalorder %s11, 1
    %p152 = por %p150, %p151
    %p153 = scmp.ne.s32.totalorder %s145, %s148
    %p154 = scmp.eq.s32.totalorder %s11, 0
    %p155 = por %p153, %p154
    %p156 = scmp.ne.s32.totalorder %s145, %s148
    %p157 = scmp.eq.s32.totalorder %s16, 1
    %p158 = por %p156, %p157
    %p159 = scmp.ne.s32.totalorder %s148, %s149
    %p160 = scmp.eq.s32.totalorder %s16, 0
    %p161 = por %p159, %p160
    %p162 = scmp.ne.s32.totalorder %s148, %s149
    %p163 = scmp.eq.s32.totalorder %s17, 1
    %p164 = por %p162, %p163
    %p166 = scmp.ne.s32.totalorder %s149, %s165
    %p167 = scmp.eq.s32.totalorder %s17, 0
    %p168 = por %p166, %p167
    %p169 = scmp.le.s32.totalorder 1, %s11
    %p170 = scmp.lt.s32.totalorder %s11, 3
    %p171 = pnand %p169, %p170
    %p172 = pneg %p171
    // Predicated region
    $region9: #{tpu_custom_call.1} parent=5 // pred_check
      _
    $region10: #{tpu_custom_call.1} parent=5 // pred_check_branch
      %174 = sbr.rel (%p171) target = $region12
    $region11: #{tpu_custom_call.1} parent=5 // pred_region
      %s175 = ssub.s32 %s11, 1
      // Predicated region
      $region13: #{tpu_custom_call.1} parent=11 // pred_check
        %p176 = pneg %p70
      $region14: #{tpu_custom_call.1} parent=11 // pred_check_branch
        %178 = sbr.rel (%p176) target = $region16
      $region15: #{tpu_custom_call.1} parent=11 // pred_region
        _
      $region16: #{tpu_custom_call.1} parent=11 // pred_fallthru
        _
      // Predicated region
      $region17: #{tpu_custom_call.1} parent=11 // pred_check
        %p179 = pneg %p91
      $region18: #{tpu_custom_call.1} parent=11 // pred_check_branch
        %181 = sbr.rel (%p179) target = $region20
      $region19: #{tpu_custom_call.1} parent=11 // pred_region
        _
      $region20: #{tpu_custom_call.1} parent=11 // pred_fallthru
        _
      // Predicated region
      $region21: #{tpu_custom_call.1} parent=11 // pred_check
        %p182 = pneg %p112
      $region22: #{tpu_custom_call.1} parent=11 // pred_check_branch
        %184 = sbr.rel (%p182) target = $region24
      $region23: #{tpu_custom_call.1} parent=11 // pred_region
        _
      $region24: #{tpu_custom_call.1} parent=11 // pred_fallthru
        _
      // Predicated region
      $region25: #{tpu_custom_call.1} parent=11 // pred_check
        %p185 = pneg %p133
      $region26: #{tpu_custom_call.1} parent=11 // pred_check_branch
        %187 = sbr.rel (%p185) target = $region28
      $region27: #{tpu_custom_call.1} parent=11 // pred_region
        _
      $region28: #{tpu_custom_call.1} parent=11 // pred_fallthru
        _
    $region12: #{tpu_custom_call.1} parent=5 // pred_fallthru
      _
    %p188 = scmp.lt.s32.totalorder %s11, 2
    // Predicated region
    $region29: #{tpu_custom_call.1} parent=5 // pred_check
      %p189 = pneg %p188
    $region30: #{tpu_custom_call.1} parent=5 // pred_check_branch
      %191 = sbr.rel (%p189) target = $region32
    $region31: #{tpu_custom_call.1} parent=5 // pred_region
      // Predicated region
      $region33: #{tpu_custom_call.1} parent=31 // pred_check
        %p192 = pneg %p43
      $region34: #{tpu_custom_call.1} parent=31 // pred_check_branch
        %194 = sbr.rel (%p192) target = $region36
      $region35: #{tpu_custom_call.1} parent=31 // pred_region
        %p195 = scmp.lt.s32.totalorder %s18, 1
        %s196 = scalar_select %p195, %s18, 1
        %s197 = smul.addr %s196, 16
        %s198 = smul.addr %s197, 8
        %s199 = scalar_lea.vmem %s0, %s198
      $region36: #{tpu_custom_call.1} parent=31 // pred_fallthru
        _
    $region32: #{tpu_custom_call.1} parent=5 // pred_fallthru
      _
    %p200 = scmp.le.s32.totalorder 1, %s11
    %p201 = scmp.lt.s32.totalorder %s11, 3
    %p202 = pnand %p200, %p201
    %p203 = pneg %p202
    // Predicated region
    $region37: #{tpu_custom_call.1} parent=5 // pred_check
      _
    $region38: #{tpu_custom_call.1} parent=5 // pred_check_branch
      %205 = sbr.rel (%p202) target = $region40
    $region39: #{tpu_custom_call.1} parent=5 // pred_region
      %s206 = ssub.s32 %s11, 1
      %p207 = scmp.lt.s32.totalorder %s20, 1
      %s208 = scalar_select %p207, %s20, 1
      %s209 = smul.addr %s208, 16
      %s210 = smul.addr %s209, 8
      %s211 = scalar_lea.vmem %s0, %s210
      %p212 = pneg %p49
      %p213 = pneg %p46
      %p214 = pneg %p70
      %p215 = pneg %p67
      %p216 = pneg %p91
      %p217 = pneg %p88
      %p218 = pneg %p112
      %p219 = pneg %p109
      %p220 = pneg %p133
      %p221 = pneg %p130
      %p222 = pneg %p161
      %p223 = pneg %p158
      %s224 = smul.u32 16, %s21
      %p225 = scmp.lt.s32.totalorder %s20, 1
      %s226 = scalar_select %p225, %s20, 1
      %p227 = scmp.lt.s32.totalorder %s224, 15
      %s228 = scalar_select %p227, %s224, 15
      %s229 = smul.addr %s226, 16
      %s230 = sadd.s32 %s228, %s229
      %s231 = smul.addr %s230, 8
      %s232 = scalar_lea.vmem %s5, %s231
      %p233 = scmp.lt.s32.totalorder %s20, 1
      %s234 = scalar_select %p233, %s20, 1
      %s235 = smul.addr %s234, 16
      %s236 = smul.addr %s235, 8
      %s237 = scalar_lea.vmem %s0, %s236
      %s238 = smul.u32 16, %s21
      %p239 = scmp.lt.s32.totalorder %s20, 1
      %s240 = scalar_select %p239, %s20, 1
      %p241 = scmp.lt.s32.totalorder %s238, 15
      %s242 = scalar_select %p241, %s238, 15
      %s243 = smul.addr %s240, 16
      %s244 = sadd.s32 %s242, %s243
      %s245 = smul.addr %s244, 8
      %s246 = scalar_lea.vmem %s5, %s245
      %s247 = smul.u32 16, %s21
      %v248 = vld [vmem:[%s2] sm:$0x1]
      %v249 = vld [vmem:[%s237] sm:$0xff]
      %v250 = vld [vmem:[%s237 + $0x8] sm:$0xff]
      %v251 = vld [vmem:[%s237 + $0x10] sm:$0xff]
      %v252 = vld [vmem:[%s237 + $0x18] sm:$0xff]
      %v253 = vld [vmem:[%s237 + $0x20] sm:$0xff]
      %v254 = vld [vmem:[%s237 + $0x28] sm:$0xff]
      %v255 = vld [vmem:[%s237 + $0x30] sm:$0xff]
      %v256 = vld [vmem:[%s237 + $0x38] sm:$0xff]
      %v257 = vld [vmem:[%s237 + $0x40] sm:$0xff]
      %v258 = vld [vmem:[%s237 + $0x48] sm:$0xff]
      %v259 = vld [vmem:[%s237 + $0x50] sm:$0xff]
      %v260 = vld [vmem:[%s237 + $0x58] sm:$0xff]
      %v261 = vld [vmem:[%s237 + $0x60] sm:$0xff]
      %v262 = vld [vmem:[%s237 + $0x68] sm:$0xff]
      %v263 = vld [vmem:[%s237 + $0x70] sm:$0xff]
      %v264 = vld [vmem:[%s237 + $0x78] sm:$0xff]
      %v265 = vld [vmem:[%s1] sm:$0xff]
      %v266 = vld [vmem:[%s1 + $0x8] sm:$0xff]
      %v267 = vld [vmem:[%s1 + $0x10] sm:$0xff]
      %v268 = vld [vmem:[%s1 + $0x18] sm:$0xff]
      %v270 = vlaneseq
      %v271 = vshrl.u32 %v270, 7
      %v272 = vsub.s32 0, %v271
      %v273 = vrot.slane %v248, %v272
      %278 = vrot.lane.b32.xlu0 %v265, 96
      %v279 = vpop.permute.xlu0 %278
      %280 = vrot.lane.b32.xlu0 %v266, 96
      %v281 = vpop.permute.xlu0 %280
      %282 = vrot.lane.b32.xlu0 %v267, 96
      %v283 = vpop.permute.xlu0 %282
      %284 = vrot.lane.b32.xlu0 %v268, 96
      %v285 = vpop.permute.xlu0 %284
      %290 = vrot.lane.b32.xlu0 %v273, 96
      %v291 = vpop.permute.xlu0 %290
      %vm293 = vcmask 261120
      %v295 = vsel %vm293, %v249, 0
      %v298 = vsel %vm293, %v250, 0
      %v301 = vsel %vm293, %v251, 0
      %v304 = vsel %vm293, %v252, 0
      %v307 = vsel %vm293, %v253, 0
      %v310 = vsel %vm293, %v254, 0
      %v313 = vsel %vm293, %v255, 0
      %v316 = vsel %vm293, %v256, 0
      %v319 = vsel %vm293, %v257, 0
      %v322 = vsel %vm293, %v258, 0
      %v325 = vsel %vm293, %v259, 0
      %v328 = vsel %vm293, %v260, 0
      %v331 = vsel %vm293, %v261, 0
      %v334 = vsel %vm293, %v262, 0
      %v337 = vsel %vm293, %v263, 0
      %v340 = vsel %vm293, %v264, 0
      %342 = vmatprep.subr.mxu0 0.0
      %343 = vmatpush1.msra.mxu0 0.0
      %344 = vmatprep.subr.mxu0 0.0
      %345 = vmatpush1.msra.mxu0 0.0
      %346 = vmatprep.subr.mxu0 0.0
      %347 = vmatpush1.msra.mxu0 0.0
      %348 = vmatprep.subr.mxu0 0.0
      %349 = vmatpush1.msra.mxu0 0.0
      %350 = vmatprep.subr.mxu0 0.0
      %351 = vmatpush1.msra.mxu0 0.0
      %352 = vmatprep.subr.mxu0 0.0
      %353 = vmatpush1.msra.mxu0 0.0
      %354 = vmatprep.subr.mxu0 0.0
      %355 = vmatpush1.msra.mxu0 0.0
      %356 = vmatprep.subr.mxu0 0.0
      %357 = vmatpush1.msra.mxu0 0.0
      %358 = vmatprep.subr.mxu0 0.0
      %359 = vmatpush1.msra.mxu0 0.0
      %360 = vmatprep.subr.mxu0 0.0
      %361 = vmatpush1.msra.mxu0 0.0
      %362 = vmatprep.subr.mxu0 0.0
      %363 = vmatpush1.msra.mxu0 0.0
      %364 = vmatprep.subr.mxu0 0.0
      %365 = vmatpush1.msra.mxu0 0.0
      %366 = vmatprep.subr.mxu0 0.0
      %367 = vmatpush1.msra.mxu0 %v285
      %368 = vmatprep.subr.mxu0 0.0
      %369 = vmatpush1.msra.mxu0 %v283
      %370 = vmatprep.subr.mxu0 0.0
      %371 = vmatpush1.msra.mxu0 %v281
      %372 = vmatprep.subr.mxu0 0.0
      %373 = vmatpush1.msra.mxu0 %v279
      %374 = vmatprep.subr.mxu0 0.0
      %375 = vmatpush2.msra.mxu0 0.0
      %376 = vmatprep.subr.mxu0 0.0
      %377 = vmatpush2.msra.mxu0 0.0
      %378 = vmatprep.subr.mxu0 0.0
      %379 = vmatpush2.msra.mxu0 0.0
      %380 = vmatprep.subr.mxu0 0.0
      %381 = vmatpush2.msra.mxu0 0.0
      %382 = vmatprep.subr.mxu0 0.0
      %383 = vmatpush2.msra.mxu0 0.0
      %384 = vmatprep.subr.mxu0 0.0
      %385 = vmatpush2.msra.mxu0 0.0
      %386 = vmatprep.subr.mxu0 0.0
      %387 = vmatpush2.msra.mxu0 0.0
      %388 = vmatprep.subr.mxu0 0.0
      %389 = vmatpush2.msra.mxu0 0.0
      %390 = vmatprep.subr.mxu0 0.0
      %391 = vmatpush2.msra.mxu0 0.0
      %392 = vmatprep.subr.mxu0 0.0
      %393 = vmatpush2.msra.mxu0 0.0
      %394 = vmatprep.subr.mxu0 0.0
      %395 = vmatpush2.msra.mxu0 0.0
      %396 = vmatprep.subr.mxu0 0.0
      %397 = vmatpush2.msra.mxu0 0.0
      %398 = vmatprep.subr.mxu0 0.0
      %399 = vmatpush2.msra.mxu0 0.0
      %400 = vmatprep.subr.mxu0 0.0
      %401 = vmatpush2.msra.mxu0 0.0
      %402 = vmatprep.subr.mxu0 0.0
      %403 = vmatpush2.msra.mxu0 0.0
      %404 = vmatprep.subr.mxu0 0.0
      %405 = vmatpush2.msra.mxu0 0.0
      %406 = vmatprep.mubr.f32.mxu0 0.0
      %407 = vmatmul.mubr.f32.gmra.mxu0 %v295
      %v408 = vpop.f32.mrf.mxu0
      %v409 = vadd.f32 %v291, %v408
      %v410 = vpop.f32.mrf.mxu0
      %411 = vmatprep.mubr.f32.mxu0 0.0
      %412 = vmatmul.mubr.f32.gmra.mxu0 %v298
      %v413 = vpop.f32.mrf.mxu0
      %v414 = vadd.f32 %v291, %v413
      %v415 = vpop.f32.mrf.mxu0
      %416 = vmatprep.mubr.f32.mxu0 0.0
      %417 = vmatmul.mubr.f32.gmra.mxu0 %v301
      %v418 = vpop.f32.mrf.mxu0
      %v419 = vadd.f32 %v291, %v418
      %v420 = vpop.f32.mrf.mxu0
      %421 = vmatprep.mubr.f32.mxu0 0.0
      %422 = vmatmul.mubr.f32.gmra.mxu0 %v304
      %v423 = vpop.f32.mrf.mxu0
      %v424 = vadd.f32 %v291, %v423
      %v425 = vpop.f32.mrf.mxu0
      %426 = vmatprep.mubr.f32.mxu0 0.0
      %427 = vmatmul.mubr.f32.gmra.mxu0 %v307
      %v428 = vpop.f32.mrf.mxu0
      %v429 = vadd.f32 %v291, %v428
      %v430 = vpop.f32.mrf.mxu0
      %431 = vmatprep.mubr.f32.mxu0 0.0
      %432 = vmatmul.mubr.f32.gmra.mxu0 %v310
      %v433 = vpop.f32.mrf.mxu0
      %v434 = vadd.f32 %v291, %v433
      %v435 = vpop.f32.mrf.mxu0
      %436 = vmatprep.mubr.f32.mxu0 0.0
      %437 = vmatmul.mubr.f32.gmra.mxu0 %v313
      %v438 = vpop.f32.mrf.mxu0
      %v439 = vadd.f32 %v291, %v438
      %v440 = vpop.f32.mrf.mxu0
      %441 = vmatprep.mubr.f32.mxu0 0.0
      %442 = vmatmul.mubr.f32.gmra.mxu0 %v316
      %v443 = vpop.f32.mrf.mxu0
      %v444 = vadd.f32 %v291, %v443
      %v445 = vpop.f32.mrf.mxu0
      %446 = vmatprep.mubr.f32.mxu0 0.0
      %447 = vmatmul.mubr.f32.gmra.mxu0 %v319
      %v448 = vpop.f32.mrf.mxu0
      %v449 = vadd.f32 %v291, %v448
      %v450 = vpop.f32.mrf.mxu0
      %451 = vmatprep.mubr.f32.mxu0 0.0
      %452 = vmatmul.mubr.f32.gmra.mxu0 %v322
      %v453 = vpop.f32.mrf.mxu0
      %v454 = vadd.f32 %v291, %v453
      %v455 = vpop.f32.mrf.mxu0
      %456 = vmatprep.mubr.f32.mxu0 0.0
      %457 = vmatmul.mubr.f32.gmra.mxu0 %v325
      %v458 = vpop.f32.mrf.mxu0
      %v459 = vadd.f32 %v291, %v458
      %v460 = vpop.f32.mrf.mxu0
      %461 = vmatprep.mubr.f32.mxu0 0.0
      %462 = vmatmul.mubr.f32.gmra.mxu0 %v328
      %v463 = vpop.f32.mrf.mxu0
      %v464 = vadd.f32 %v291, %v463
      %v465 = vpop.f32.mrf.mxu0
      %466 = vmatprep.mubr.f32.mxu0 0.0
      %467 = vmatmul.mubr.f32.gmra.mxu0 %v331
      %v468 = vpop.f32.mrf.mxu0
      %v469 = vadd.f32 %v291, %v468
      %v470 = vpop.f32.mrf.mxu0
      %471 = vmatprep.mubr.f32.mxu0 0.0
      %472 = vmatmul.mubr.f32.gmra.mxu0 %v334
      %v473 = vpop.f32.mrf.mxu0
      %v474 = vadd.f32 %v291, %v473
      %v475 = vpop.f32.mrf.mxu0
      %476 = vmatprep.mubr.f32.mxu0 0.0
      %477 = vmatmul.mubr.f32.gmra.mxu0 %v337
      %v478 = vpop.f32.mrf.mxu0
      %v479 = vadd.f32 %v291, %v478
      %v480 = vpop.f32.mrf.mxu0
      %481 = vmatprep.mubr.f32.mxu0 0.0
      %482 = vmatmul.mubr.f32.gmra.mxu0 %v340
      %v483 = vpop.f32.mrf.mxu0
      %v484 = vadd.f32 %v291, %v483
      %v485 = vpop.f32.mrf.mxu0
      %486 = vdwg.mxu0
      %487 = vst.msk [vmem:[#allocation2] sm:$0xff] %vm293, %v409
      %488 = vst.msk [vmem:[#allocation2 + $0x8] sm:$0xff] %vm293, %v414
      %489 = vst.msk [vmem:[#allocation2 + $0x10] sm:$0xff] %vm293, %v419
      %490 = vst.msk [vmem:[#allocation2 + $0x18] sm:$0xff] %vm293, %v424
      %491 = vst.msk [vmem:[#allocation2 + $0x20] sm:$0xff] %vm293, %v429
      %492 = vst.msk [vmem:[#allocation2 + $0x28] sm:$0xff] %vm293, %v434
      %493 = vst.msk [vmem:[#allocation2 + $0x30] sm:$0xff] %vm293, %v439
      %494 = vst.msk [vmem:[#allocation2 + $0x38] sm:$0xff] %vm293, %v444
      %495 = vst.msk [vmem:[#allocation2 + $0x40] sm:$0xff] %vm293, %v449
      %496 = vst.msk [vmem:[#allocation2 + $0x48] sm:$0xff] %vm293, %v454
      %497 = vst.msk [vmem:[#allocation2 + $0x50] sm:$0xff] %vm293, %v459
      %498 = vst.msk [vmem:[#allocation2 + $0x58] sm:$0xff] %vm293, %v464
      %499 = vst.msk [vmem:[#allocation2 + $0x60] sm:$0xff] %vm293, %v469
      %500 = vst.msk [vmem:[#allocation2 + $0x68] sm:$0xff] %vm293, %v474
      %501 = vst.msk [vmem:[#allocation2 + $0x70] sm:$0xff] %vm293, %v479
      %502 = vst.msk [vmem:[#allocation2 + $0x78] sm:$0xff] %vm293, %v484
      %v503 = vld [vmem:[%s1] sm:$0xff]
      %v504 = vld [vmem:[%s1 + $0x8] sm:$0xff]
      %v505 = vld [vmem:[%s1 + $0x10] sm:$0xff]
      %v506 = vld [vmem:[%s1 + $0x18] sm:$0xff]
      %511 = vrot.lane.b32.xlu0 %v503, 64
      %v512 = vpop.permute.xlu0 %511
      %513 = vrot.lane.b32.xlu0 %v504, 64
      %v514 = vpop.permute.xlu0 %513
      %515 = vrot.lane.b32.xlu0 %v505, 64
      %v516 = vpop.permute.xlu0 %515
      %517 = vrot.lane.b32.xlu0 %v506, 64
      %v518 = vpop.permute.xlu0 %517
      %523 = vrot.lane.b32.xlu0 %v273, 64
      %v524 = vpop.permute.xlu0 %523
      %526 = vmatprep.subr.mxu0 0.0
      %527 = vmatpush1.msra.mxu0 0.0
      %528 = vmatprep.subr.mxu0 0.0
      %529 = vmatpush1.msra.mxu0 0.0
      %530 = vmatprep.subr.mxu0 0.0
      %531 = vmatpush1.msra.mxu0 0.0
      %532 = vmatprep.subr.mxu0 0.0
      %533 = vmatpush1.msra.mxu0 0.0
      %534 = vmatprep.subr.mxu0 0.0
      %535 = vmatpush1.msra.mxu0 0.0
      %536 = vmatprep.subr.mxu0 0.0
      %537 = vmatpush1.msra.mxu0 0.0
      %538 = vmatprep.subr.mxu0 0.0
      %539 = vmatpush1.msra.mxu0 0.0
      %540 = vmatprep.subr.mxu0 0.0
      %541 = vmatpush1.msra.mxu0 0.0
      %542 = vmatprep.subr.mxu0 0.0
      %543 = vmatpush1.msra.mxu0 0.0
      %544 = vmatprep.subr.mxu0 0.0
      %545 = vmatpush1.msra.mxu0 0.0
      %546 = vmatprep.subr.mxu0 0.0
      %547 = vmatpush1.msra.mxu0 0.0
      %548 = vmatprep.subr.mxu0 0.0
      %549 = vmatpush1.msra.mxu0 0.0
      %550 = vmatprep.subr.mxu0 0.0
      %551 = vmatpush1.msra.mxu0 %v518
      %552 = vmatprep.subr.mxu0 0.0
      %553 = vmatpush1.msra.mxu0 %v516
      %554 = vmatprep.subr.mxu0 0.0
      %555 = vmatpush1.msra.mxu0 %v514
      %556 = vmatprep.subr.mxu0 0.0
      %557 = vmatpush1.msra.mxu0 %v512
      %558 = vmatprep.subr.mxu0 0.0
      %559 = vmatpush2.msra.mxu0 0.0
      %560 = vmatprep.subr.mxu0 0.0
      %561 = vmatpush2.msra.mxu0 0.0
      %562 = vmatprep.subr.mxu0 0.0
      %563 = vmatpush2.msra.mxu0 0.0
      %564 = vmatprep.subr.mxu0 0.0
      %565 = vmatpush2.msra.mxu0 0.0
      %566 = vmatprep.subr.mxu0 0.0
      %567 = vmatpush2.msra.mxu0 0.0
      %568 = vmatprep.subr.mxu0 0.0
      %569 = vmatpush2.msra.mxu0 0.0
      %570 = vmatprep.subr.mxu0 0.0
      %571 = vmatpush2.msra.mxu0 0.0
      %572 = vmatprep.subr.mxu0 0.0
      %573 = vmatpush2.msra.mxu0 0.0
      %574 = vmatprep.subr.mxu0 0.0
      %575 = vmatpush2.msra.mxu0 0.0
      %576 = vmatprep.subr.mxu0 0.0
      %577 = vmatpush2.msra.mxu0 0.0
      %578 = vmatprep.subr.mxu0 0.0
      %579 = vmatpush2.msra.mxu0 0.0
      %580 = vmatprep.subr.mxu0 0.0
      %581 = vmatpush2.msra.mxu0 0.0
      %582 = vmatprep.subr.mxu0 0.0
      %583 = vmatpush2.msra.mxu0 0.0
      %584 = vmatprep.subr.mxu0 0.0
      %585 = vmatpush2.msra.mxu0 0.0
      %586 = vmatprep.subr.mxu0 0.0
      %587 = vmatpush2.msra.mxu0 0.0
      %588 = vmatprep.subr.mxu0 0.0
      %589 = vmatpush2.msra.mxu0 0.0
      %590 = vmatprep.mubr.f32.mxu0 0.0
      %591 = vmatmul.mubr.f32.gmra.mxu0 %v295
      %v592 = vpop.f32.mrf.mxu0
      %v593 = vadd.f32 %v524, %v592
      %v594 = vpop.f32.mrf.mxu0
      %595 = vmatprep.mubr.f32.mxu0 0.0
      %596 = vmatmul.mubr.f32.gmra.mxu0 %v298
      %v597 = vpop.f32.mrf.mxu0
      %v598 = vadd.f32 %v524, %v597
      %v599 = vpop.f32.mrf.mxu0
      %600 = vmatprep.mubr.f32.mxu0 0.0
      %601 = vmatmul.mubr.f32.gmra.mxu0 %v301
      %v602 = vpop.f32.mrf.mxu0
      %v603 = vadd.f32 %v524, %v602
      %v604 = vpop.f32.mrf.mxu0
      %605 = vmatprep.mubr.f32.mxu0 0.0
      %606 = vmatmul.mubr.f32.gmra.mxu0 %v304
      %v607 = vpop.f32.mrf.mxu0
      %v608 = vadd.f32 %v524, %v607
      %v609 = vpop.f32.mrf.mxu0
      %610 = vmatprep.mubr.f32.mxu0 0.0
      %611 = vmatmul.mubr.f32.gmra.mxu0 %v307
      %v612 = vpop.f32.mrf.mxu0
      %v613 = vadd.f32 %v524, %v612
      %v614 = vpop.f32.mrf.mxu0
      %615 = vmatprep.mubr.f32.mxu0 0.0
      %616 = vmatmul.mubr.f32.gmra.mxu0 %v310
      %v617 = vpop.f32.mrf.mxu0
      %v618 = vadd.f32 %v524, %v617
      %v619 = vpop.f32.mrf.mxu0
      %620 = vmatprep.mubr.f32.mxu0 0.0
      %621 = vmatmul.mubr.f32.gmra.mxu0 %v313
      %v622 = vpop.f32.mrf.mxu0
      %v623 = vadd.f32 %v524, %v622
      %v624 = vpop.f32.mrf.mxu0
      %625 = vmatprep.mubr.f32.mxu0 0.0
      %626 = vmatmul.mubr.f32.gmra.mxu0 %v316
      %v627 = vpop.f32.mrf.mxu0
      %v628 = vadd.f32 %v524, %v627
      %v629 = vpop.f32.mrf.mxu0
      %630 = vmatprep.mubr.f32.mxu0 0.0
      %631 = vmatmul.mubr.f32.gmra.mxu0 %v319
      %v632 = vpop.f32.mrf.mxu0
      %v633 = vadd.f32 %v524, %v632
      %v634 = vpop.f32.mrf.mxu0
      %635 = vmatprep.mubr.f32.mxu0 0.0
      %636 = vmatmul.mubr.f32.gmra.mxu0 %v322
      %v637 = vpop.f32.mrf.mxu0
      %v638 = vadd.f32 %v524, %v637
      %v639 = vpop.f32.mrf.mxu0
      %640 = vmatprep.mubr.f32.mxu0 0.0
      %641 = vmatmul.mubr.f32.gmra.mxu0 %v325
      %v642 = vpop.f32.mrf.mxu0
      %v643 = vadd.f32 %v524, %v642
      %v644 = vpop.f32.mrf.mxu0
      %645 = vmatprep.mubr.f32.mxu0 0.0
      %646 = vmatmul.mubr.f32.gmra.mxu0 %v328
      %v647 = vpop.f32.mrf.mxu0
      %v648 = vadd.f32 %v524, %v647
      %v649 = vpop.f32.mrf.mxu0
      %650 = vmatprep.mubr.f32.mxu0 0.0
      %651 = vmatmul.mubr.f32.gmra.mxu0 %v331
      %v652 = vpop.f32.mrf.mxu0
      %v653 = vadd.f32 %v524, %v652
      %v654 = vpop.f32.mrf.mxu0
      %655 = vmatprep.mubr.f32.mxu0 0.0
      %656 = vmatmul.mubr.f32.gmra.mxu0 %v334
      %v657 = vpop.f32.mrf.mxu0
      %v658 = vadd.f32 %v524, %v657
      %v659 = vpop.f32.mrf.mxu0
      %660 = vmatprep.mubr.f32.mxu0 0.0
      %661 = vmatmul.mubr.f32.gmra.mxu0 %v337
      %v662 = vpop.f32.mrf.mxu0
      %v663 = vadd.f32 %v524, %v662
      %v664 = vpop.f32.mrf.mxu0
      %665 = vmatprep.mubr.f32.mxu0 0.0
      %666 = vmatmul.mubr.f32.gmra.mxu0 %v340
      %v667 = vpop.f32.mrf.mxu0
      %v668 = vadd.f32 %v524, %v667
      %v669 = vpop.f32.mrf.mxu0
      %670 = vdwg.mxu0
      %671 = vst.msk [vmem:[#allocation3] sm:$0xff] %vm293, %v593
      %672 = vst.msk [vmem:[#allocation3 + $0x8] sm:$0xff] %vm293, %v598
      %673 = vst.msk [vmem:[#allocation3 + $0x10] sm:$0xff] %vm293, %v603
      %674 = vst.msk [vmem:[#allocation3 + $0x18] sm:$0xff] %vm293, %v608
      %675 = vst.msk [vmem:[#allocation3 + $0x20] sm:$0xff] %vm293, %v613
      %676 = vst.msk [vmem:[#allocation3 + $0x28] sm:$0xff] %vm293, %v618
      %677 = vst.msk [vmem:[#allocation3 + $0x30] sm:$0xff] %vm293, %v623
      %678 = vst.msk [vmem:[#allocation3 + $0x38] sm:$0xff] %vm293, %v628
      %679 = vst.msk [vmem:[#allocation3 + $0x40] sm:$0xff] %vm293, %v633
      %680 = vst.msk [vmem:[#allocation3 + $0x48] sm:$0xff] %vm293, %v638
      %681 = vst.msk [vmem:[#allocation3 + $0x50] sm:$0xff] %vm293, %v643
      %682 = vst.msk [vmem:[#allocation3 + $0x58] sm:$0xff] %vm293, %v648
      %683 = vst.msk [vmem:[#allocation3 + $0x60] sm:$0xff] %vm293, %v653
      %684 = vst.msk [vmem:[#allocation3 + $0x68] sm:$0xff] %vm293, %v658
      %685 = vst.msk [vmem:[#allocation3 + $0x70] sm:$0xff] %vm293, %v663
      %686 = vst.msk [vmem:[#allocation3 + $0x78] sm:$0xff] %vm293, %v668
      %s687 = smul.u32 %s21, 128
      %s688 = scalar_lea.vmem %s237, %s687
      %v689 = vld [vmem:[%s688] sm:$0xff]
      %v690 = vld [vmem:[%s688 + $0x8] sm:$0xff]
      %v691 = vld [vmem:[%s688 + $0x10] sm:$0xff]
      %v692 = vld [vmem:[%s688 + $0x18] sm:$0xff]
      %v693 = vld [vmem:[%s688 + $0x20] sm:$0xff]
      %v694 = vld [vmem:[%s688 + $0x28] sm:$0xff]
      %v695 = vld [vmem:[%s688 + $0x30] sm:$0xff]
      %v696 = vld [vmem:[%s688 + $0x38] sm:$0xff]
      %v697 = vld [vmem:[%s688 + $0x40] sm:$0xff]
      %v698 = vld [vmem:[%s688 + $0x48] sm:$0xff]
      %v699 = vld [vmem:[%s688 + $0x50] sm:$0xff]
      %v700 = vld [vmem:[%s688 + $0x58] sm:$0xff]
      %v701 = vld [vmem:[%s688 + $0x60] sm:$0xff]
      %v702 = vld [vmem:[%s688 + $0x68] sm:$0xff]
      %v703 = vld [vmem:[%s688 + $0x70] sm:$0xff]
      %v704 = vld [vmem:[%s688 + $0x78] sm:$0xff]
      %v705 = vld [vmem:[%s1] sm:$0xff]
      %v706 = vld [vmem:[%s1 + $0x8] sm:$0xff]
      %v707 = vld [vmem:[%s1 + $0x10] sm:$0xff]
      %v708 = vld [vmem:[%s1 + $0x18] sm:$0xff]
      %v711 = vsel %vm293, %v689, 0
      %v714 = vsel %vm293, %v690, 0
      %v717 = vsel %vm293, %v691, 0
      %v720 = vsel %vm293, %v692, 0
      %v723 = vsel %vm293, %v693, 0
      %v726 = vsel %vm293, %v694, 0
      %v729 = vsel %vm293, %v695, 0
      %v732 = vsel %vm293, %v696, 0
      %v735 = vsel %vm293, %v697, 0
      %v738 = vsel %vm293, %v698, 0
      %v741 = vsel %vm293, %v699, 0
      %v744 = vsel %vm293, %v700, 0
      %v747 = vsel %vm293, %v701, 0
      %v750 = vsel %vm293, %v702, 0
      %v753 = vsel %vm293, %v703, 0
      %v756 = vsel %vm293, %v704, 0
      %758 = vmatprep.subr.mxu0 0.0
      %759 = vmatpush1.msra.mxu0 0.0
      %760 = vmatprep.subr.mxu0 0.0
      %761 = vmatpush1.msra.mxu0 0.0
      %762 = vmatprep.subr.mxu0 0.0
      %763 = vmatpush1.msra.mxu0 0.0
      %764 = vmatprep.subr.mxu0 0.0
      %765 = vmatpush1.msra.mxu0 0.0
      %766 = vmatprep.subr.mxu0 0.0
      %767 = vmatpush1.msra.mxu0 0.0
      %768 = vmatprep.subr.mxu0 0.0
      %769 = vmatpush1.msra.mxu0 0.0
      %770 = vmatprep.subr.mxu0 0.0
      %771 = vmatpush1.msra.mxu0 0.0
      %772 = vmatprep.subr.mxu0 0.0
      %773 = vmatpush1.msra.mxu0 0.0
      %774 = vmatprep.subr.mxu0 0.0
      %775 = vmatpush1.msra.mxu0 0.0
      %776 = vmatprep.subr.mxu0 0.0
      %777 = vmatpush1.msra.mxu0 0.0
      %778 = vmatprep.subr.mxu0 0.0
      %779 = vmatpush1.msra.mxu0 0.0
      %780 = vmatprep.subr.mxu0 0.0
      %781 = vmatpush1.msra.mxu0 0.0
      %782 = vmatprep.subr.mxu0 0.0
      %783 = vmatpush1.msra.mxu0 %v708
      %784 = vmatprep.subr.mxu0 0.0
      %785 = vmatpush1.msra.mxu0 %v707
      %786 = vmatprep.subr.mxu0 0.0
      %787 = vmatpush1.msra.mxu0 %v706
      %788 = vmatprep.subr.mxu0 0.0
      %789 = vmatpush1.msra.mxu0 %v705
      %790 = vmatprep.subr.mxu0 0.0
      %791 = vmatpush2.msra.mxu0 0.0
      %792 = vmatprep.subr.mxu0 0.0
      %793 = vmatpush2.msra.mxu0 0.0
      %794 = vmatprep.subr.mxu0 0.0
      %795 = vmatpush2.msra.mxu0 0.0
      %796 = vmatprep.subr.mxu0 0.0
      %797 = vmatpush2.msra.mxu0 0.0
      %798 = vmatprep.subr.mxu0 0.0
      %799 = vmatpush2.msra.mxu0 0.0
      %800 = vmatprep.subr.mxu0 0.0
      %801 = vmatpush2.msra.mxu0 0.0
      %802 = vmatprep.subr.mxu0 0.0
      %803 = vmatpush2.msra.mxu0 0.0
      %804 = vmatprep.subr.mxu0 0.0
      %805 = vmatpush2.msra.mxu0 0.0
      %806 = vmatprep.subr.mxu0 0.0
      %807 = vmatpush2.msra.mxu0 0.0
      %808 = vmatprep.subr.mxu0 0.0
      %809 = vmatpush2.msra.mxu0 0.0
      %810 = vmatprep.subr.mxu0 0.0
      %811 = vmatpush2.msra.mxu0 0.0
      %812 = vmatprep.subr.mxu0 0.0
      %813 = vmatpush2.msra.mxu0 0.0
      %814 = vmatprep.subr.mxu0 0.0
      %815 = vmatpush2.msra.mxu0 0.0
      %816 = vmatprep.subr.mxu0 0.0
      %817 = vmatpush2.msra.mxu0 0.0
      %818 = vmatprep.subr.mxu0 0.0
      %819 = vmatpush2.msra.mxu0 0.0
      %820 = vmatprep.subr.mxu0 0.0
      %821 = vmatpush2.msra.mxu0 0.0
      %822 = vmatprep.mubr.f32.mxu0 0.0
      %823 = vmatmul.mubr.f32.gmra.mxu0 %v711
      %v824 = vpop.f32.mrf.mxu0
      %v825 = vadd.f32 %v273, %v824
      %v826 = vpop.f32.mrf.mxu0
      %827 = vmatprep.mubr.f32.mxu0 0.0
      %828 = vmatmul.mubr.f32.gmra.mxu0 %v714
      %v829 = vpop.f32.mrf.mxu0
      %v830 = vadd.f32 %v273, %v829
      %v831 = vpop.f32.mrf.mxu0
      %832 = vmatprep.mubr.f32.mxu0 0.0
      %833 = vmatmul.mubr.f32.gmra.mxu0 %v717
      %v834 = vpop.f32.mrf.mxu0
      %v835 = vadd.f32 %v273, %v834
      %v836 = vpop.f32.mrf.mxu0
      %837 = vmatprep.mubr.f32.mxu0 0.0
      %838 = vmatmul.mubr.f32.gmra.mxu0 %v720
      %v839 = vpop.f32.mrf.mxu0
      %v840 = vadd.f32 %v273, %v839
      %v841 = vpop.f32.mrf.mxu0
      %842 = vmatprep.mubr.f32.mxu0 0.0
      %843 = vmatmul.mubr.f32.gmra.mxu0 %v723
      %v844 = vpop.f32.mrf.mxu0
      %v845 = vadd.f32 %v273, %v844
      %v846 = vpop.f32.mrf.mxu0
      %847 = vmatprep.mubr.f32.mxu0 0.0
      %848 = vmatmul.mubr.f32.gmra.mxu0 %v726
      %v849 = vpop.f32.mrf.mxu0
      %v850 = vadd.f32 %v273, %v849
      %v851 = vpop.f32.mrf.mxu0
      %852 = vmatprep.mubr.f32.mxu0 0.0
      %853 = vmatmul.mubr.f32.gmra.mxu0 %v729
      %v854 = vpop.f32.mrf.mxu0
      %v855 = vadd.f32 %v273, %v854
      %v856 = vpop.f32.mrf.mxu0
      %857 = vmatprep.mubr.f32.mxu0 0.0
      %858 = vmatmul.mubr.f32.gmra.mxu0 %v732
      %v859 = vpop.f32.mrf.mxu0
      %v860 = vadd.f32 %v273, %v859
      %v861 = vpop.f32.mrf.mxu0
      %862 = vmatprep.mubr.f32.mxu0 0.0
      %863 = vmatmul.mubr.f32.gmra.mxu0 %v735
      %v864 = vpop.f32.mrf.mxu0
      %v865 = vadd.f32 %v273, %v864
      %v866 = vpop.f32.mrf.mxu0
      %867 = vmatprep.mubr.f32.mxu0 0.0
      %868 = vmatmul.mubr.f32.gmra.mxu0 %v738
      %v869 = vpop.f32.mrf.mxu0
      %v870 = vadd.f32 %v273, %v869
      %v871 = vpop.f32.mrf.mxu0
      %872 = vmatprep.mubr.f32.mxu0 0.0
      %873 = vmatmul.mubr.f32.gmra.mxu0 %v741
      %v874 = vpop.f32.mrf.mxu0
      %v875 = vadd.f32 %v273, %v874
      %v876 = vpop.f32.mrf.mxu0
      %877 = vmatprep.mubr.f32.mxu0 0.0
      %878 = vmatmul.mubr.f32.gmra.mxu0 %v744
      %v879 = vpop.f32.mrf.mxu0
      %v880 = vadd.f32 %v273, %v879
      %v881 = vpop.f32.mrf.mxu0
      %882 = vmatprep.mubr.f32.mxu0 0.0
      %883 = vmatmul.mubr.f32.gmra.mxu0 %v747
      %v884 = vpop.f32.mrf.mxu0
      %v885 = vadd.f32 %v273, %v884
      %v886 = vpop.f32.mrf.mxu0
      %887 = vmatprep.mubr.f32.mxu0 0.0
      %888 = vmatmul.mubr.f32.gmra.mxu0 %v750
      %v889 = vpop.f32.mrf.mxu0
      %v890 = vadd.f32 %v273, %v889
      %v891 = vpop.f32.mrf.mxu0
      %892 = vmatprep.mubr.f32.mxu0 0.0
      %893 = vmatmul.mubr.f32.gmra.mxu0 %v753
      %v894 = vpop.f32.mrf.mxu0
      %v895 = vadd.f32 %v273, %v894
      %v896 = vpop.f32.mrf.mxu0
      %897 = vmatprep.mubr.f32.mxu0 0.0
      %898 = vmatmul.mubr.f32.gmra.mxu0 %v756
      %v899 = vpop.f32.mrf.mxu0
      %v900 = vadd.f32 %v273, %v899
      %v901 = vpop.f32.mrf.mxu0
      %902 = vdwg.mxu0
      %v903 = vmul.f32 %v825, 0.35355338
      %v904 = vmul.f32 %v830, 0.35355338
      %v905 = vmul.f32 %v835, 0.35355338
      %v906 = vmul.f32 %v840, 0.35355338
      %v907 = vmul.f32 %v845, 0.35355338
      %v908 = vmul.f32 %v850, 0.35355338
      %v909 = vmul.f32 %v855, 0.35355338
      %v910 = vmul.f32 %v860, 0.35355338
      %v911 = vmul.f32 %v865, 0.35355338
      %v912 = vmul.f32 %v870, 0.35355338
      %v913 = vmul.f32 %v875, 0.35355338
      %v914 = vmul.f32 %v880, 0.35355338
      %v915 = vmul.f32 %v885, 0.35355338
      %v916 = vmul.f32 %v890, 0.35355338
      %v917 = vmul.f32 %v895, 0.35355338
      %v918 = vmul.f32 %v900, 0.35355338
      %v919 = vld [vmem:[#allocation2] sm:$0xff]
      %v920 = vld [vmem:[#allocation2 + $0x8] sm:$0xff]
      %v921 = vld [vmem:[#allocation2 + $0x10] sm:$0xff]
      %v922 = vld [vmem:[#allocation2 + $0x18] sm:$0xff]
      %v923 = vld [vmem:[#allocation2 + $0x20] sm:$0xff]
      %v924 = vld [vmem:[#allocation2 + $0x28] sm:$0xff]
      %v925 = vld [vmem:[#allocation2 + $0x30] sm:$0xff]
      %v926 = vld [vmem:[#allocation2 + $0x38] sm:$0xff]
      %v927 = vld [vmem:[#allocation2 + $0x40] sm:$0xff]
      %v928 = vld [vmem:[#allocation2 + $0x48] sm:$0xff]
      %v929 = vld [vmem:[#allocation2 + $0x50] sm:$0xff]
      %v930 = vld [vmem:[#allocation2 + $0x58] sm:$0xff]
      %v931 = vld [vmem:[#allocation2 + $0x60] sm:$0xff]
      %v932 = vld [vmem:[#allocation2 + $0x68] sm:$0xff]
      %v933 = vld [vmem:[#allocation2 + $0x70] sm:$0xff]
      %v934 = vld [vmem:[#allocation2 + $0x78] sm:$0xff]
      %v935 = vld [vmem:[#allocation3] sm:$0xff]
      %v936 = vld [vmem:[#allocation3 + $0x8] sm:$0xff]
      %v937 = vld [vmem:[#allocation3 + $0x10] sm:$0xff]
      %v938 = vld [vmem:[#allocation3 + $0x18] sm:$0xff]
      %v939 = vld [vmem:[#allocation3 + $0x20] sm:$0xff]
      %v940 = vld [vmem:[#allocation3 + $0x28] sm:$0xff]
      %v941 = vld [vmem:[#allocation3 + $0x30] sm:$0xff]
      %v942 = vld [vmem:[#allocation3 + $0x38] sm:$0xff]
      %v943 = vld [vmem:[#allocation3 + $0x40] sm:$0xff]
      %v944 = vld [vmem:[#allocation3 + $0x48] sm:$0xff]
      %v945 = vld [vmem:[#allocation3 + $0x50] sm:$0xff]
      %v946 = vld [vmem:[#allocation3 + $0x58] sm:$0xff]
      %v947 = vld [vmem:[#allocation3 + $0x60] sm:$0xff]
      %v948 = vld [vmem:[#allocation3 + $0x68] sm:$0xff]
      %v949 = vld [vmem:[#allocation3 + $0x70] sm:$0xff]
      %v950 = vld [vmem:[#allocation3 + $0x78] sm:$0xff]
      %v951 = vlaneseq
      %v952 = vand.u32 %v951, 127
      %vm953 = vcmp.lt.s32.totalorder %v952, 8
      %vm954 = vcmask 64512
      %v956 = vsel %vm954, %v903, 0
      %v959 = vsel %vm954, %v904, 0
      %v962 = vsel %vm954, %v905, 0
      %v965 = vsel %vm954, %v906, 0
      %v968 = vsel %vm954, %v907, 0
      %v971 = vsel %vm954, %v908, 0
      %v974 = vsel %vm954, %v909, 0
      %v977 = vsel %vm954, %v910, 0
      %v980 = vsel %vm954, %v911, 0
      %v983 = vsel %vm954, %v912, 0
      %v986 = vsel %vm954, %v913, 0
      %v989 = vsel %vm954, %v914, 0
      %v992 = vsel %vm954, %v915, 0
      %v995 = vsel %vm954, %v916, 0
      %v998 = vsel %vm954, %v917, 0
      %v1001 = vsel %vm954, %v918, 0
      %v1004 = vsel %vm954, %v919, 0
      %v1007 = vsel %vm954, %v920, 0
      %v1010 = vsel %vm954, %v921, 0
      %v1013 = vsel %vm954, %v922, 0
      %v1016 = vsel %vm954, %v923, 0
      %v1019 = vsel %vm954, %v924, 0
      %v1022 = vsel %vm954, %v925, 0
      %v1025 = vsel %vm954, %v926, 0
      %v1028 = vsel %vm954, %v927, 0
      %v1031 = vsel %vm954, %v928, 0
      %v1034 = vsel %vm954, %v929, 0
      %v1037 = vsel %vm954, %v930, 0
      %v1040 = vsel %vm954, %v931, 0
      %v1043 = vsel %vm954, %v932, 0
      %v1046 = vsel %vm954, %v933, 0
      %v1049 = vsel %vm954, %v934, 0
      %1051 = vmatprep.subr.mxu0 0.0
      %1052 = vmatpush1.xpose.msra.mxu0 %v1049
      %1053 = vmatprep.subr.mxu0 0.0
      %1054 = vmatpush1.xpose.msra.mxu0 %v1046
      %1055 = vmatprep.subr.mxu0 0.0
      %1056 = vmatpush1.xpose.msra.mxu0 %v1043
      %1057 = vmatprep.subr.mxu0 0.0
      %1058 = vmatpush1.xpose.msra.mxu0 %v1040
      %1059 = vmatprep.subr.mxu0 0.0
      %1060 = vmatpush1.xpose.msra.mxu0 %v1037
      %1061 = vmatprep.subr.mxu0 0.0
      %1062 = vmatpush1.xpose.msra.mxu0 %v1034
      %1063 = vmatprep.subr.mxu0 0.0
      %1064 = vmatpush1.xpose.msra.mxu0 %v1031
      %1065 = vmatprep.subr.mxu0 0.0
      %1066 = vmatpush1.xpose.msra.mxu0 %v1028
      %1067 = vmatprep.subr.mxu0 0.0
      %1068 = vmatpush1.xpose.msra.mxu0 %v1025
      %1069 = vmatprep.subr.mxu0 0.0
      %1070 = vmatpush1.xpose.msra.mxu0 %v1022
      %1071 = vmatprep.subr.mxu0 0.0
      %1072 = vmatpush1.xpose.msra.mxu0 %v1019
      %1073 = vmatprep.subr.mxu0 0.0
      %1074 = vmatpush1.xpose.msra.mxu0 %v1016
      %1075 = vmatprep.subr.mxu0 0.0
      %1076 = vmatpush1.xpose.msra.mxu0 %v1013
      %1077 = vmatprep.subr.mxu0 0.0
      %1078 = vmatpush1.xpose.msra.mxu0 %v1010
      %1079 = vmatprep.subr.mxu0 0.0
      %1080 = vmatpush1.xpose.msra.mxu0 %v1007
      %1081 = vmatprep.subr.mxu0 0.0
      %1082 = vmatpush1.xpose.msra.mxu0 %v1004
      %1083 = vmatprep.subr.mxu0 0.0
      %1084 = vmatpush2.xpose.msra.mxu0 0.0
      %1085 = vmatprep.subr.mxu0 0.0
      %1086 = vmatpush2.xpose.msra.mxu0 0.0
      %1087 = vmatprep.subr.mxu0 0.0
      %1088 = vmatpush2.xpose.msra.mxu0 0.0
      %1089 = vmatprep.subr.mxu0 0.0
      %1090 = vmatpush2.xpose.msra.mxu0 0.0
      %1091 = vmatprep.subr.mxu0 0.0
      %1092 = vmatpush2.xpose.msra.mxu0 0.0
      %1093 = vmatprep.subr.mxu0 0.0
      %1094 = vmatpush2.xpose.msra.mxu0 0.0
      %1095 = vmatprep.subr.mxu0 0.0
      %1096 = vmatpush2.xpose.msra.mxu0 0.0
      %1097 = vmatprep.subr.mxu0 0.0
      %1098 = vmatpush2.xpose.msra.mxu0 0.0
      %1099 = vmatprep.subr.mxu0 0.0
      %1100 = vmatpush2.xpose.msra.mxu0 0.0
      %1101 = vmatprep.subr.mxu0 0.0
      %1102 = vmatpush2.xpose.msra.mxu0 0.0
      %1103 = vmatprep.subr.mxu0 0.0
      %1104 = vmatpush2.xpose.msra.mxu0 0.0
      %1105 = vmatprep.subr.mxu0 0.0
      %1106 = vmatpush2.xpose.msra.mxu0 0.0
      %1107 = vmatprep.subr.mxu0 0.0
      %1108 = vmatpush2.xpose.msra.mxu0 0.0
      %1109 = vmatprep.subr.mxu0 0.0
      %1110 = vmatpush2.xpose.msra.mxu0 0.0
      %1111 = vmatprep.subr.mxu0 0.0
      %1112 = vmatpush2.xpose.msra.mxu0 0.0
      %1113 = vmatprep.subr.mxu0 0.0
      %1114 = vmatpush2.xpose.msra.mxu0 0.0
      %1115 = vmatprep.mubr.f32.mxu0 0.0
      %1116 = vmatmul.mubr.f32.gmra.mxu0 %v956
      %v1117 = vpop.f32.mrf.mxu0
      %v1118 = vadd.f32 0.0, %v1117
      %v1119 = vpop.f32.mrf.mxu0
      %1120 = vmatprep.mubr.f32.mxu0 0.0
      %1121 = vmatmul.mubr.f32.gmra.mxu0 %v959
      %v1122 = vpop.f32.mrf.mxu0
      %v1123 = vadd.f32 0.0, %v1122
      %v1124 = vpop.f32.mrf.mxu0
      %1125 = vmatprep.mubr.f32.mxu0 0.0
      %1126 = vmatmul.mubr.f32.gmra.mxu0 %v962
      %v1127 = vpop.f32.mrf.mxu0
      %v1128 = vadd.f32 0.0, %v1127
      %v1129 = vpop.f32.mrf.mxu0
      %1130 = vmatprep.mubr.f32.mxu0 0.0
      %1131 = vmatmul.mubr.f32.gmra.mxu0 %v965
      %v1132 = vpop.f32.mrf.mxu0
      %v1133 = vadd.f32 0.0, %v1132
      %v1134 = vpop.f32.mrf.mxu0
      %1135 = vmatprep.mubr.f32.mxu0 0.0
      %1136 = vmatmul.mubr.f32.gmra.mxu0 %v968
      %v1137 = vpop.f32.mrf.mxu0
      %v1138 = vadd.f32 0.0, %v1137
      %v1139 = vpop.f32.mrf.mxu0
      %1140 = vmatprep.mubr.f32.mxu0 0.0
      %1141 = vmatmul.mubr.f32.gmra.mxu0 %v971
      %v1142 = vpop.f32.mrf.mxu0
      %v1143 = vadd.f32 0.0, %v1142
      %v1144 = vpop.f32.mrf.mxu0
      %1145 = vmatprep.mubr.f32.mxu0 0.0
      %1146 = vmatmul.mubr.f32.gmra.mxu0 %v974
      %v1147 = vpop.f32.mrf.mxu0
      %v1148 = vadd.f32 0.0, %v1147
      %v1149 = vpop.f32.mrf.mxu0
      %1150 = vmatprep.mubr.f32.mxu0 0.0
      %1151 = vmatmul.mubr.f32.gmra.mxu0 %v977
      %v1152 = vpop.f32.mrf.mxu0
      %v1153 = vadd.f32 0.0, %v1152
      %v1154 = vpop.f32.mrf.mxu0
      %1155 = vmatprep.mubr.f32.mxu0 0.0
      %1156 = vmatmul.mubr.f32.gmra.mxu0 %v980
      %v1157 = vpop.f32.mrf.mxu0
      %v1158 = vadd.f32 0.0, %v1157
      %v1159 = vpop.f32.mrf.mxu0
      %1160 = vmatprep.mubr.f32.mxu0 0.0
      %1161 = vmatmul.mubr.f32.gmra.mxu0 %v983
      %v1162 = vpop.f32.mrf.mxu0
      %v1163 = vadd.f32 0.0, %v1162
      %v1164 = vpop.f32.mrf.mxu0
      %1165 = vmatprep.mubr.f32.mxu0 0.0
      %1166 = vmatmul.mubr.f32.gmra.mxu0 %v986
      %v1167 = vpop.f32.mrf.mxu0
      %v1168 = vadd.f32 0.0, %v1167
      %v1169 = vpop.f32.mrf.mxu0
      %1170 = vmatprep.mubr.f32.mxu0 0.0
      %1171 = vmatmul.mubr.f32.gmra.mxu0 %v989
      %v1172 = vpop.f32.mrf.mxu0
      %v1173 = vadd.f32 0.0, %v1172
      %v1174 = vpop.f32.mrf.mxu0
      %1175 = vmatprep.mubr.f32.mxu0 0.0
      %1176 = vmatmul.mubr.f32.gmra.mxu0 %v992
      %v1177 = vpop.f32.mrf.mxu0
      %v1178 = vadd.f32 0.0, %v1177
      %v1179 = vpop.f32.mrf.mxu0
      %1180 = vmatprep.mubr.f32.mxu0 0.0
      %1181 = vmatmul.mubr.f32.gmra.mxu0 %v995
      %v1182 = vpop.f32.mrf.mxu0
      %v1183 = vadd.f32 0.0, %v1182
      %v1184 = vpop.f32.mrf.mxu0
      %1185 = vmatprep.mubr.f32.mxu0 0.0
      %1186 = vmatmul.mubr.f32.gmra.mxu0 %v998
      %v1187 = vpop.f32.mrf.mxu0
      %v1188 = vadd.f32 0.0, %v1187
      %v1189 = vpop.f32.mrf.mxu0
      %1190 = vmatprep.mubr.f32.mxu0 0.0
      %1191 = vmatmul.mubr.f32.gmra.mxu0 %v1001
      %v1192 = vpop.f32.mrf.mxu0
      %v1193 = vadd.f32 0.0, %v1192
      %v1194 = vpop.f32.mrf.mxu0
      %1195 = vdwg.mxu0
      %v1196 = vsel %vm953, %v1118, -inf
      %v1197 = vsel %vm953, %v1123, -inf
      %v1198 = vsel %vm953, %v1128, -inf
      %v1199 = vsel %vm953, %v1133, -inf
      %v1200 = vsel %vm953, %v1138, -inf
      %v1201 = vsel %vm953, %v1143, -inf
      %v1202 = vsel %vm953, %v1148, -inf
      %v1203 = vsel %vm953, %v1153, -inf
      %v1204 = vsel %vm953, %v1158, -inf
      %v1205 = vsel %vm953, %v1163, -inf
      %v1206 = vsel %vm953, %v1168, -inf
      %v1207 = vsel %vm953, %v1173, -inf
      %v1208 = vsel %vm953, %v1178, -inf
      %v1209 = vsel %vm953, %v1183, -inf
      %v1210 = vsel %vm953, %v1188, -inf
      %v1211 = vsel %vm953, %v1193, -inf
      %1212 = vmax.xlane.f32.xlu0 %v1196
      %v1213 = vpop.xlane.xlu0 %1212
      %1214 = vmax.xlane.f32.xlu0 %v1197
      %v1215 = vpop.xlane.xlu0 %1214
      %1216 = vmax.xlane.f32.xlu0 %v1198
      %v1217 = vpop.xlane.xlu0 %1216
      %1218 = vmax.xlane.f32.xlu0 %v1199
      %v1219 = vpop.xlane.xlu0 %1218
      %1220 = vmax.xlane.f32.xlu0 %v1200
      %v1221 = vpop.xlane.xlu0 %1220
      %1222 = vmax.xlane.f32.xlu0 %v1201
      %v1223 = vpop.xlane.xlu0 %1222
      %1224 = vmax.xlane.f32.xlu0 %v1202
      %v1225 = vpop.xlane.xlu0 %1224
      %1226 = vmax.xlane.f32.xlu0 %v1203
      %v1227 = vpop.xlane.xlu0 %1226
      %1228 = vmax.xlane.f32.xlu0 %v1204
      %v1229 = vpop.xlane.xlu0 %1228
      %1230 = vmax.xlane.f32.xlu0 %v1205
      %v1231 = vpop.xlane.xlu0 %1230
      %1232 = vmax.xlane.f32.xlu0 %v1206
      %v1233 = vpop.xlane.xlu0 %1232
      %1234 = vmax.xlane.f32.xlu0 %v1207
      %v1235 = vpop.xlane.xlu0 %1234
      %1236 = vmax.xlane.f32.xlu0 %v1208
      %v1237 = vpop.xlane.xlu0 %1236
      %1238 = vmax.xlane.f32.xlu0 %v1209
      %v1239 = vpop.xlane.xlu0 %1238
      %1240 = vmax.xlane.f32.xlu0 %v1210
      %v1241 = vpop.xlane.xlu0 %1240
      %1242 = vmax.xlane.f32.xlu0 %v1211
      %v1243 = vpop.xlane.xlu0 %1242
      %v1244 = vsub.f32 %v1196, %v1213
      %v1245 = vsub.f32 %v1197, %v1215
      %v1246 = vsub.f32 %v1198, %v1217
      %v1247 = vsub.f32 %v1199, %v1219
      %v1248 = vsub.f32 %v1200, %v1221
      %v1249 = vsub.f32 %v1201, %v1223
      %v1250 = vsub.f32 %v1202, %v1225
      %v1251 = vsub.f32 %v1203, %v1227
      %v1252 = vsub.f32 %v1204, %v1229
      %v1253 = vsub.f32 %v1205, %v1231
      %v1254 = vsub.f32 %v1206, %v1233
      %v1255 = vsub.f32 %v1207, %v1235
      %v1256 = vsub.f32 %v1208, %v1237
      %v1257 = vsub.f32 %v1209, %v1239
      %v1258 = vsub.f32 %v1210, %v1241
      %v1259 = vsub.f32 %v1211, %v1243
      %v1260 = vmul.f32 %v1244, 1.442695
      %v1261 = vpow.pop %v1260
      %v1262 = vmul.f32 %v1245, 1.442695
      %v1263 = vpow.pop %v1262
      %v1264 = vmul.f32 %v1246, 1.442695
      %v1265 = vpow.pop %v1264
      %v1266 = vmul.f32 %v1247, 1.442695
      %v1267 = vpow.pop %v1266
      %v1268 = vmul.f32 %v1248, 1.442695
      %v1269 = vpow.pop %v1268
      %v1270 = vmul.f32 %v1249, 1.442695
      %v1271 = vpow.pop %v1270
      %v1272 = vmul.f32 %v1250, 1.442695
      %v1273 = vpow.pop %v1272
      %v1274 = vmul.f32 %v1251, 1.442695
      %v1275 = vpow.pop %v1274
      %v1276 = vmul.f32 %v1252, 1.442695
      %v1277 = vpow.pop %v1276
      %v1278 = vmul.f32 %v1253, 1.442695
      %v1279 = vpow.pop %v1278
      %v1280 = vmul.f32 %v1254, 1.442695
      %v1281 = vpow.pop %v1280
      %v1282 = vmul.f32 %v1255, 1.442695
      %v1283 = vpow.pop %v1282
      %v1284 = vmul.f32 %v1256, 1.442695
      %v1285 = vpow.pop %v1284
      %v1286 = vmul.f32 %v1257, 1.442695
      %v1287 = vpow.pop %v1286
      %v1288 = vmul.f32 %v1258, 1.442695
      %v1289 = vpow.pop %v1288
      %v1290 = vmul.f32 %v1259, 1.442695
      %v1291 = vpow.pop %v1290
      %1292 = vadd.xlane.f32.xlu0 %v1261
      %v1293 = vpop.xlane.xlu0 %1292
      %1294 = vadd.xlane.f32.xlu0 %v1263
      %v1295 = vpop.xlane.xlu0 %1294
      %1296 = vadd.xlane.f32.xlu0 %v1265
      %v1297 = vpop.xlane.xlu0 %1296
      %1298 = vadd.xlane.f32.xlu0 %v1267
      %v1299 = vpop.xlane.xlu0 %1298
      %1300 = vadd.xlane.f32.xlu0 %v1269
      %v1301 = vpop.xlane.xlu0 %1300
      %1302 = vadd.xlane.f32.xlu0 %v1271
      %v1303 = vpop.xlane.xlu0 %1302
      %1304 = vadd.xlane.f32.xlu0 %v1273
      %v1305 = vpop.xlane.xlu0 %1304
      %1306 = vadd.xlane.f32.xlu0 %v1275
      %v1307 = vpop.xlane.xlu0 %1306
      %1308 = vadd.xlane.f32.xlu0 %v1277
      %v1309 = vpop.xlane.xlu0 %1308
      %1310 = vadd.xlane.f32.xlu0 %v1279
      %v1311 = vpop.xlane.xlu0 %1310
      %1312 = vadd.xlane.f32.xlu0 %v1281
      %v1313 = vpop.xlane.xlu0 %1312
      %1314 = vadd.xlane.f32.xlu0 %v1283
      %v1315 = vpop.xlane.xlu0 %1314
      %1316 = vadd.xlane.f32.xlu0 %v1285
      %v1317 = vpop.xlane.xlu0 %1316
      %1318 = vadd.xlane.f32.xlu0 %v1287
      %v1319 = vpop.xlane.xlu0 %1318
      %1320 = vadd.xlane.f32.xlu0 %v1289
      %v1321 = vpop.xlane.xlu0 %1320
      %1322 = vadd.xlane.f32.xlu0 %v1291
      %v1323 = vpop.xlane.xlu0 %1322
      %1324 = vmatprep.subr.mxu0 0.0
      %1325 = vmatpush1.msra.mxu0 %v950
      %1326 = vmatprep.subr.mxu0 0.0
      %1327 = vmatpush1.msra.mxu0 %v949
      %1328 = vmatprep.subr.mxu0 0.0
      %1329 = vmatpush1.msra.mxu0 %v948
      %1330 = vmatprep.subr.mxu0 0.0
      %1331 = vmatpush1.msra.mxu0 %v947
      %1332 = vmatprep.subr.mxu0 0.0
      %1333 = vmatpush1.msra.mxu0 %v946
      %1334 = vmatprep.subr.mxu0 0.0
      %1335 = vmatpush1.msra.mxu0 %v945
      %1336 = vmatprep.subr.mxu0 0.0
      %1337 = vmatpush1.msra.mxu0 %v944
      %1338 = vmatprep.subr.mxu0 0.0
      %1339 = vmatpush1.msra.mxu0 %v943
      %1340 = vmatprep.subr.mxu0 0.0
      %1341 = vmatpush1.msra.mxu0 %v942
      %1342 = vmatprep.subr.mxu0 0.0
      %1343 = vmatpush1.msra.mxu0 %v941
      %1344 = vmatprep.subr.mxu0 0.0
      %1345 = vmatpush1.msra.mxu0 %v940
      %1346 = vmatprep.subr.mxu0 0.0
      %1347 = vmatpush1.msra.mxu0 %v939
      %1348 = vmatprep.subr.mxu0 0.0
      %1349 = vmatpush1.msra.mxu0 %v938
      %1350 = vmatprep.subr.mxu0 0.0
      %1351 = vmatpush1.msra.mxu0 %v937
      %1352 = vmatprep.subr.mxu0 0.0
      %1353 = vmatpush1.msra.mxu0 %v936
      %1354 = vmatprep.subr.mxu0 0.0
      %1355 = vmatpush1.msra.mxu0 %v935
      %1356 = vmatprep.subr.mxu0 0.0
      %1357 = vmatpush2.msra.mxu0 0.0
      %1358 = vmatprep.subr.mxu0 0.0
      %1359 = vmatpush2.msra.mxu0 0.0
      %1360 = vmatprep.subr.mxu0 0.0
      %1361 = vmatpush2.msra.mxu0 0.0
      %1362 = vmatprep.subr.mxu0 0.0
      %1363 = vmatpush2.msra.mxu0 0.0
      %1364 = vmatprep.subr.mxu0 0.0
      %1365 = vmatpush2.msra.mxu0 0.0
      %1366 = vmatprep.subr.mxu0 0.0
      %1367 = vmatpush2.msra.mxu0 0.0
      %1368 = vmatprep.subr.mxu0 0.0
      %1369 = vmatpush2.msra.mxu0 0.0
      %1370 = vmatprep.subr.mxu0 0.0
      %1371 = vmatpush2.msra.mxu0 0.0
      %1372 = vmatprep.subr.mxu0 0.0
      %1373 = vmatpush2.msra.mxu0 0.0
      %1374 = vmatprep.subr.mxu0 0.0
      %1375 = vmatpush2.msra.mxu0 0.0
      %1376 = vmatprep.subr.mxu0 0.0
      %1377 = vmatpush2.msra.mxu0 0.0
      %1378 = vmatprep.subr.mxu0 0.0
      %1379 = vmatpush2.msra.mxu0 0.0
      %1380 = vmatprep.subr.mxu0 0.0
      %1381 = vmatpush2.msra.mxu0 0.0
      %1382 = vmatprep.subr.mxu0 0.0
      %1383 = vmatpush2.msra.mxu0 0.0
      %1384 = vmatprep.subr.mxu0 0.0
      %1385 = vmatpush2.msra.mxu0 0.0
      %1386 = vmatprep.subr.mxu0 0.0
      %1387 = vmatpush2.msra.mxu0 0.0
      %1388 = vmatprep.mubr.f32.mxu0 0.0
      %1389 = vmatmul.mubr.f32.gmra.mxu0 %v1261
      %v1390 = vpop.f32.mrf.mxu0
      %v1391 = vadd.f32 0.0, %v1390
      %v1392 = vpop.f32.mrf.mxu0
      %1393 = vmatprep.mubr.f32.mxu0 0.0
      %1394 = vmatmul.mubr.f32.gmra.mxu0 %v1263
      %v1395 = vpop.f32.mrf.mxu0
      %v1396 = vadd.f32 0.0, %v1395
      %v1397 = vpop.f32.mrf.mxu0
      %1398 = vmatprep.mubr.f32.mxu0 0.0
      %1399 = vmatmul.mubr.f32.gmra.mxu0 %v1265
      %v1400 = vpop.f32.mrf.mxu0
      %v1401 = vadd.f32 0.0, %v1400
      %v1402 = vpop.f32.mrf.mxu0
      %1403 = vmatprep.mubr.f32.mxu0 0.0
      %1404 = vmatmul.mubr.f32.gmra.mxu0 %v1267
      %v1405 = vpop.f32.mrf.mxu0
      %v1406 = vadd.f32 0.0, %v1405
      %v1407 = vpop.f32.mrf.mxu0
      %1408 = vmatprep.mubr.f32.mxu0 0.0
      %1409 = vmatmul.mubr.f32.gmra.mxu0 %v1269
      %v1410 = vpop.f32.mrf.mxu0
      %v1411 = vadd.f32 0.0, %v1410
      %v1412 = vpop.f32.mrf.mxu0
      %1413 = vmatprep.mubr.f32.mxu0 0.0
      %1414 = vmatmul.mubr.f32.gmra.mxu0 %v1271
      %v1415 = vpop.f32.mrf.mxu0
      %v1416 = vadd.f32 0.0, %v1415
      %v1417 = vpop.f32.mrf.mxu0
      %1418 = vmatprep.mubr.f32.mxu0 0.0
      %1419 = vmatmul.mubr.f32.gmra.mxu0 %v1273
      %v1420 = vpop.f32.mrf.mxu0
      %v1421 = vadd.f32 0.0, %v1420
      %v1422 = vpop.f32.mrf.mxu0
      %1423 = vmatprep.mubr.f32.mxu0 0.0
      %1424 = vmatmul.mubr.f32.gmra.mxu0 %v1275
      %v1425 = vpop.f32.mrf.mxu0
      %v1426 = vadd.f32 0.0, %v1425
      %v1427 = vpop.f32.mrf.mxu0
      %1428 = vmatprep.mubr.f32.mxu0 0.0
      %1429 = vmatmul.mubr.f32.gmra.mxu0 %v1277
      %v1430 = vpop.f32.mrf.mxu0
      %v1431 = vadd.f32 0.0, %v1430
      %v1432 = vpop.f32.mrf.mxu0
      %1433 = vmatprep.mubr.f32.mxu0 0.0
      %1434 = vmatmul.mubr.f32.gmra.mxu0 %v1279
      %v1435 = vpop.f32.mrf.mxu0
      %v1436 = vadd.f32 0.0, %v1435
      %v1437 = vpop.f32.mrf.mxu0
      %1438 = vmatprep.mubr.f32.mxu0 0.0
      %1439 = vmatmul.mubr.f32.gmra.mxu0 %v1281
      %v1440 = vpop.f32.mrf.mxu0
      %v1441 = vadd.f32 0.0, %v1440
      %v1442 = vpop.f32.mrf.mxu0
      %1443 = vmatprep.mubr.f32.mxu0 0.0
      %1444 = vmatmul.mubr.f32.gmra.mxu0 %v1283
      %v1445 = vpop.f32.mrf.mxu0
      %v1446 = vadd.f32 0.0, %v1445
      %v1447 = vpop.f32.mrf.mxu0
      %1448 = vmatprep.mubr.f32.mxu0 0.0
      %1449 = vmatmul.mubr.f32.gmra.mxu0 %v1285
      %v1450 = vpop.f32.mrf.mxu0
      %v1451 = vadd.f32 0.0, %v1450
      %v1452 = vpop.f32.mrf.mxu0
      %1453 = vmatprep.mubr.f32.mxu0 0.0
      %1454 = vmatmul.mubr.f32.gmra.mxu0 %v1287
      %v1455 = vpop.f32.mrf.mxu0
      %v1456 = vadd.f32 0.0, %v1455
      %v1457 = vpop.f32.mrf.mxu0
      %1458 = vmatprep.mubr.f32.mxu0 0.0
      %1459 = vmatmul.mubr.f32.gmra.mxu0 %v1289
      %v1460 = vpop.f32.mrf.mxu0
      %v1461 = vadd.f32 0.0, %v1460
      %v1462 = vpop.f32.mrf.mxu0
      %1463 = vmatprep.mubr.f32.mxu0 0.0
      %1464 = vmatmul.mubr.f32.gmra.mxu0 %v1291
      %v1465 = vpop.f32.mrf.mxu0
      %v1466 = vadd.f32 0.0, %v1465
      %v1467 = vpop.f32.mrf.mxu0
      %1468 = vdwg.mxu0
      %v1469 = vrcp.pop %v1293
      %v1470 = vrcp.pop %v1295
      %v1471 = vrcp.pop %v1297
      %v1472 = vrcp.pop %v1299
      %v1473 = vrcp.pop %v1301
      %v1474 = vrcp.pop %v1303
      %v1475 = vrcp.pop %v1305
      %v1476 = vrcp.pop %v1307
      %v1477 = vrcp.pop %v1309
      %v1478 = vrcp.pop %v1311
      %v1479 = vrcp.pop %v1313
      %v1480 = vrcp.pop %v1315
      %v1481 = vrcp.pop %v1317
      %v1482 = vrcp.pop %v1319
      %v1483 = vrcp.pop %v1321
      %v1484 = vrcp.pop %v1323
      %v1485 = vmul.f32 %v1391, %v1469
      %v1486 = vmul.f32 %v1396, %v1470
      %v1487 = vmul.f32 %v1401, %v1471
      %v1488 = vmul.f32 %v1406, %v1472
      %v1489 = vmul.f32 %v1411, %v1473
      %v1490 = vmul.f32 %v1416, %v1474
      %v1491 = vmul.f32 %v1421, %v1475
      %v1492 = vmul.f32 %v1426, %v1476
      %v1493 = vmul.f32 %v1431, %v1477
      %v1494 = vmul.f32 %v1436, %v1478
      %v1495 = vmul.f32 %v1441, %v1479
      %v1496 = vmul.f32 %v1446, %v1480
      %v1497 = vmul.f32 %v1451, %v1481
      %v1498 = vmul.f32 %v1456, %v1482
      %v1499 = vmul.f32 %v1461, %v1483
      %v1500 = vmul.f32 %v1466, %v1484
      %1501 = vrot.lane.b32.xlu0 %v903, 120
      %v1502 = vpop.permute.xlu0 %1501
      %1503 = vrot.lane.b32.xlu0 %v904, 120
      %v1504 = vpop.permute.xlu0 %1503
      %1505 = vrot.lane.b32.xlu0 %v905, 120
      %v1506 = vpop.permute.xlu0 %1505
      %1507 = vrot.lane.b32.xlu0 %v906, 120
      %v1508 = vpop.permute.xlu0 %1507
      %1509 = vrot.lane.b32.xlu0 %v907, 120
      %v1510 = vpop.permute.xlu0 %1509
      %1511 = vrot.lane.b32.xlu0 %v908, 120
      %v1512 = vpop.permute.xlu0 %1511
      %1513 = vrot.lane.b32.xlu0 %v909, 120
      %v1514 = vpop.permute.xlu0 %1513
      %1515 = vrot.lane.b32.xlu0 %v910, 120
      %v1516 = vpop.permute.xlu0 %1515
      %1517 = vrot.lane.b32.xlu0 %v911, 120
      %v1518 = vpop.permute.xlu0 %1517
      %1519 = vrot.lane.b32.xlu0 %v912, 120
      %v1520 = vpop.permute.xlu0 %1519
      %1521 = vrot.lane.b32.xlu0 %v913, 120
      %v1522 = vpop.permute.xlu0 %1521
      %1523 = vrot.lane.b32.xlu0 %v914, 120
      %v1524 = vpop.permute.xlu0 %1523
      %1525 = vrot.lane.b32.xlu0 %v915, 120
      %v1526 = vpop.permute.xlu0 %1525
      %1527 = vrot.lane.b32.xlu0 %v916, 120
      %v1528 = vpop.permute.xlu0 %1527
      %1529 = vrot.lane.b32.xlu0 %v917, 120
      %v1530 = vpop.permute.xlu0 %1529
      %1531 = vrot.lane.b32.xlu0 %v918, 120
      %v1532 = vpop.permute.xlu0 %1531
      %1533 = vrot.lane.b32.xlu0 %v919, 120
      %v1534 = vpop.permute.xlu0 %1533
      %1535 = vrot.lane.b32.xlu0 %v920, 120
      %v1536 = vpop.permute.xlu0 %1535
      %1537 = vrot.lane.b32.xlu0 %v921, 120
      %v1538 = vpop.permute.xlu0 %1537
      %1539 = vrot.lane.b32.xlu0 %v922, 120
      %v1540 = vpop.permute.xlu0 %1539
      %1541 = vrot.lane.b32.xlu0 %v923, 120
      %v1542 = vpop.permute.xlu0 %1541
      %1543 = vrot.lane.b32.xlu0 %v924, 120
      %v1544 = vpop.permute.xlu0 %1543
      %1545 = vrot.lane.b32.xlu0 %v925, 120
      %v1546 = vpop.permute.xlu0 %1545
      %1547 = vrot.lane.b32.xlu0 %v926, 120
      %v1548 = vpop.permute.xlu0 %1547
      %1549 = vrot.lane.b32.xlu0 %v927, 120
      %v1550 = vpop.permute.xlu0 %1549
      %1551 = vrot.lane.b32.xlu0 %v928, 120
      %v1552 = vpop.permute.xlu0 %1551
      %1553 = vrot.lane.b32.xlu0 %v929, 120
      %v1554 = vpop.permute.xlu0 %1553
      %1555 = vrot.lane.b32.xlu0 %v930, 120
      %v1556 = vpop.permute.xlu0 %1555
      %1557 = vrot.lane.b32.xlu0 %v931, 120
      %v1558 = vpop.permute.xlu0 %1557
      %1559 = vrot.lane.b32.xlu0 %v932, 120
      %v1560 = vpop.permute.xlu0 %1559
      %1561 = vrot.lane.b32.xlu0 %v933, 120
      %v1562 = vpop.permute.xlu0 %1561
      %1563 = vrot.lane.b32.xlu0 %v934, 120
      %v1564 = vpop.permute.xlu0 %1563
      %v1565 = vsel %vm954, %v1502, 0
      %v1567 = vsel %vm954, %v1504, 0
      %v1569 = vsel %vm954, %v1506, 0
      %v1571 = vsel %vm954, %v1508, 0
      %v1573 = vsel %vm954, %v1510, 0
      %v1575 = vsel %vm954, %v1512, 0
      %v1577 = vsel %vm954, %v1514, 0
      %v1579 = vsel %vm954, %v1516, 0
      %v1581 = vsel %vm954, %v1518, 0
      %v1583 = vsel %vm954, %v1520, 0
      %v1585 = vsel %vm954, %v1522, 0
      %v1587 = vsel %vm954, %v1524, 0
      %v1589 = vsel %vm954, %v1526, 0
      %v1591 = vsel %vm954, %v1528, 0
      %v1593 = vsel %vm954, %v1530, 0
      %v1595 = vsel %vm954, %v1532, 0
      %v1597 = vsel %vm954, %v1534, 0
      %v1599 = vsel %vm954, %v1536, 0
      %v1601 = vsel %vm954, %v1538, 0
      %v1603 = vsel %vm954, %v1540, 0
      %v1605 = vsel %vm954, %v1542, 0
      %v1607 = vsel %vm954, %v1544, 0
      %v1609 = vsel %vm954, %v1546, 0
      %v1611 = vsel %vm954, %v1548, 0
      %v1613 = vsel %vm954, %v1550, 0
      %v1615 = vsel %vm954, %v1552, 0
      %v1617 = vsel %vm954, %v1554, 0
      %v1619 = vsel %vm954, %v1556, 0
      %v1621 = vsel %vm954, %v1558, 0
      %v1623 = vsel %vm954, %v1560, 0
      %v1625 = vsel %vm954, %v1562, 0
      %v1627 = vsel %vm954, %v1564, 0
      %1629 = vmatprep.subr.mxu0 0.0
      %1630 = vmatpush1.xpose.msra.mxu0 %v1627
      %1631 = vmatprep.subr.mxu0 0.0
      %1632 = vmatpush1.xpose.msra.mxu0 %v1625
      %1633 = vmatprep.subr.mxu0 0.0
      %1634 = vmatpush1.xpose.msra.mxu0 %v1623
      %1635 = vmatprep.subr.mxu0 0.0
      %1636 = vmatpush1.xpose.msra.mxu0 %v1621
      %1637 = vmatprep.subr.mxu0 0.0
      %1638 = vmatpush1.xpose.msra.mxu0 %v1619
      %1639 = vmatprep.subr.mxu0 0.0
      %1640 = vmatpush1.xpose.msra.mxu0 %v1617
      %1641 = vmatprep.subr.mxu0 0.0
      %1642 = vmatpush1.xpose.msra.mxu0 %v1615
      %1643 = vmatprep.subr.mxu0 0.0
      %1644 = vmatpush1.xpose.msra.mxu0 %v1613
      %1645 = vmatprep.subr.mxu0 0.0
      %1646 = vmatpush1.xpose.msra.mxu0 %v1611
      %1647 = vmatprep.subr.mxu0 0.0
      %1648 = vmatpush1.xpose.msra.mxu0 %v1609
      %1649 = vmatprep.subr.mxu0 0.0
      %1650 = vmatpush1.xpose.msra.mxu0 %v1607
      %1651 = vmatprep.subr.mxu0 0.0
      %1652 = vmatpush1.xpose.msra.mxu0 %v1605
      %1653 = vmatprep.subr.mxu0 0.0
      %1654 = vmatpush1.xpose.msra.mxu0 %v1603
      %1655 = vmatprep.subr.mxu0 0.0
      %1656 = vmatpush1.xpose.msra.mxu0 %v1601
      %1657 = vmatprep.subr.mxu0 0.0
      %1658 = vmatpush1.xpose.msra.mxu0 %v1599
      %1659 = vmatprep.subr.mxu0 0.0
      %1660 = vmatpush1.xpose.msra.mxu0 %v1597
      %1661 = vmatprep.subr.mxu0 0.0
      %1662 = vmatpush2.xpose.msra.mxu0 0.0
      %1663 = vmatprep.subr.mxu0 0.0
      %1664 = vmatpush2.xpose.msra.mxu0 0.0
      %1665 = vmatprep.subr.mxu0 0.0
      %1666 = vmatpush2.xpose.msra.mxu0 0.0
      %1667 = vmatprep.subr.mxu0 0.0
      %1668 = vmatpush2.xpose.msra.mxu0 0.0
      %1669 = vmatprep.subr.mxu0 0.0
      %1670 = vmatpush2.xpose.msra.mxu0 0.0
      %1671 = vmatprep.subr.mxu0 0.0
      %1672 = vmatpush2.xpose.msra.mxu0 0.0
      %1673 = vmatprep.subr.mxu0 0.0
      %1674 = vmatpush2.xpose.msra.mxu0 0.0
      %1675 = vmatprep.subr.mxu0 0.0
      %1676 = vmatpush2.xpose.msra.mxu0 0.0
      %1677 = vmatprep.subr.mxu0 0.0
      %1678 = vmatpush2.xpose.msra.mxu0 0.0
      %1679 = vmatprep.subr.mxu0 0.0
      %1680 = vmatpush2.xpose.msra.mxu0 0.0
      %1681 = vmatprep.subr.mxu0 0.0
      %1682 = vmatpush2.xpose.msra.mxu0 0.0
      %1683 = vmatprep.subr.mxu0 0.0
      %1684 = vmatpush2.xpose.msra.mxu0 0.0
      %1685 = vmatprep.subr.mxu0 0.0
      %1686 = vmatpush2.xpose.msra.mxu0 0.0
      %1687 = vmatprep.subr.mxu0 0.0
      %1688 = vmatpush2.xpose.msra.mxu0 0.0
      %1689 = vmatprep.subr.mxu0 0.0
      %1690 = vmatpush2.xpose.msra.mxu0 0.0
      %1691 = vmatprep.subr.mxu0 0.0
      %1692 = vmatpush2.xpose.msra.mxu0 0.0
      %1693 = vmatprep.mubr.f32.mxu0 0.0
      %1694 = vmatmul.mubr.f32.gmra.mxu0 %v1565
      %v1695 = vpop.f32.mrf.mxu0
      %v1696 = vadd.f32 0.0, %v1695
      %v1697 = vpop.f32.mrf.mxu0
      %1698 = vmatprep.mubr.f32.mxu0 0.0
      %1699 = vmatmul.mubr.f32.gmra.mxu0 %v1567
      %v1700 = vpop.f32.mrf.mxu0
      %v1701 = vadd.f32 0.0, %v1700
      %v1702 = vpop.f32.mrf.mxu0
      %1703 = vmatprep.mubr.f32.mxu0 0.0
      %1704 = vmatmul.mubr.f32.gmra.mxu0 %v1569
      %v1705 = vpop.f32.mrf.mxu0
      %v1706 = vadd.f32 0.0, %v1705
      %v1707 = vpop.f32.mrf.mxu0
      %1708 = vmatprep.mubr.f32.mxu0 0.0
      %1709 = vmatmul.mubr.f32.gmra.mxu0 %v1571
      %v1710 = vpop.f32.mrf.mxu0
      %v1711 = vadd.f32 0.0, %v1710
      %v1712 = vpop.f32.mrf.mxu0
      %1713 = vmatprep.mubr.f32.mxu0 0.0
      %1714 = vmatmul.mubr.f32.gmra.mxu0 %v1573
      %v1715 = vpop.f32.mrf.mxu0
      %v1716 = vadd.f32 0.0, %v1715
      %v1717 = vpop.f32.mrf.mxu0
      %1718 = vmatprep.mubr.f32.mxu0 0.0
      %1719 = vmatmul.mubr.f32.gmra.mxu0 %v1575
      %v1720 = vpop.f32.mrf.mxu0
      %v1721 = vadd.f32 0.0, %v1720
      %v1722 = vpop.f32.mrf.mxu0
      %1723 = vmatprep.mubr.f32.mxu0 0.0
      %1724 = vmatmul.mubr.f32.gmra.mxu0 %v1577
      %v1725 = vpop.f32.mrf.mxu0
      %v1726 = vadd.f32 0.0, %v1725
      %v1727 = vpop.f32.mrf.mxu0
      %1728 = vmatprep.mubr.f32.mxu0 0.0
      %1729 = vmatmul.mubr.f32.gmra.mxu0 %v1579
      %v1730 = vpop.f32.mrf.mxu0
      %v1731 = vadd.f32 0.0, %v1730
      %v1732 = vpop.f32.mrf.mxu0
      %1733 = vmatprep.mubr.f32.mxu0 0.0
      %1734 = vmatmul.mubr.f32.gmra.mxu0 %v1581
      %v1735 = vpop.f32.mrf.mxu0
      %v1736 = vadd.f32 0.0, %v1735
      %v1737 = vpop.f32.mrf.mxu0
      %1738 = vmatprep.mubr.f32.mxu0 0.0
      %1739 = vmatmul.mubr.f32.gmra.mxu0 %v1583
      %v1740 = vpop.f32.mrf.mxu0
      %v1741 = vadd.f32 0.0, %v1740
      %v1742 = vpop.f32.mrf.mxu0
      %1743 = vmatprep.mubr.f32.mxu0 0.0
      %1744 = vmatmul.mubr.f32.gmra.mxu0 %v1585
      %v1745 = vpop.f32.mrf.mxu0
      %v1746 = vadd.f32 0.0, %v1745
      %v1747 = vpop.f32.mrf.mxu0
      %1748 = vmatprep.mubr.f32.mxu0 0.0
      %1749 = vmatmul.mubr.f32.gmra.mxu0 %v1587
      %v1750 = vpop.f32.mrf.mxu0
      %v1751 = vadd.f32 0.0, %v1750
      %v1752 = vpop.f32.mrf.mxu0
      %1753 = vmatprep.mubr.f32.mxu0 0.0
      %1754 = vmatmul.mubr.f32.gmra.mxu0 %v1589
      %v1755 = vpop.f32.mrf.mxu0
      %v1756 = vadd.f32 0.0, %v1755
      %v1757 = vpop.f32.mrf.mxu0
      %1758 = vmatprep.mubr.f32.mxu0 0.0
      %1759 = vmatmul.mubr.f32.gmra.mxu0 %v1591
      %v1760 = vpop.f32.mrf.mxu0
      %v1761 = vadd.f32 0.0, %v1760
      %v1762 = vpop.f32.mrf.mxu0
      %1763 = vmatprep.mubr.f32.mxu0 0.0
      %1764 = vmatmul.mubr.f32.gmra.mxu0 %v1593
      %v1765 = vpop.f32.mrf.mxu0
      %v1766 = vadd.f32 0.0, %v1765
      %v1767 = vpop.f32.mrf.mxu0
      %1768 = vmatprep.mubr.f32.mxu0 0.0
      %1769 = vmatmul.mubr.f32.gmra.mxu0 %v1595
      %v1770 = vpop.f32.mrf.mxu0
      %v1771 = vadd.f32 0.0, %v1770
      %v1772 = vpop.f32.mrf.mxu0
      %1773 = vdwg.mxu0
      %v1774 = vsel %vm953, %v1696, -inf
      %v1775 = vsel %vm953, %v1701, -inf
      %v1776 = vsel %vm953, %v1706, -inf
      %v1777 = vsel %vm953, %v1711, -inf
      %v1778 = vsel %vm953, %v1716, -inf
      %v1779 = vsel %vm953, %v1721, -inf
      %v1780 = vsel %vm953, %v1726, -inf
      %v1781 = vsel %vm953, %v1731, -inf
      %v1782 = vsel %vm953, %v1736, -inf
      %v1783 = vsel %vm953, %v1741, -inf
      %v1784 = vsel %vm953, %v1746, -inf
      %v1785 = vsel %vm953, %v1751, -inf
      %v1786 = vsel %vm953, %v1756, -inf
      %v1787 = vsel %vm953, %v1761, -inf
      %v1788 = vsel %vm953, %v1766, -inf
      %v1789 = vsel %vm953, %v1771, -inf
      %1790 = vmax.xlane.f32.xlu0 %v1774
      %v1791 = vpop.xlane.xlu0 %1790
      %1792 = vmax.xlane.f32.xlu0 %v1775
      %v1793 = vpop.xlane.xlu0 %1792
      %1794 = vmax.xlane.f32.xlu0 %v1776
      %v1795 = vpop.xlane.xlu0 %1794
      %1796 = vmax.xlane.f32.xlu0 %v1777
      %v1797 = vpop.xlane.xlu0 %1796
      %1798 = vmax.xlane.f32.xlu0 %v1778
      %v1799 = vpop.xlane.xlu0 %1798
      %1800 = vmax.xlane.f32.xlu0 %v1779
      %v1801 = vpop.xlane.xlu0 %1800
      %1802 = vmax.xlane.f32.xlu0 %v1780
      %v1803 = vpop.xlane.xlu0 %1802
      %1804 = vmax.xlane.f32.xlu0 %v1781
      %v1805 = vpop.xlane.xlu0 %1804
      %1806 = vmax.xlane.f32.xlu0 %v1782
      %v1807 = vpop.xlane.xlu0 %1806
      %1808 = vmax.xlane.f32.xlu0 %v1783
      %v1809 = vpop.xlane.xlu0 %1808
      %1810 = vmax.xlane.f32.xlu0 %v1784
      %v1811 = vpop.xlane.xlu0 %1810
      %1812 = vmax.xlane.f32.xlu0 %v1785
      %v1813 = vpop.xlane.xlu0 %1812
      %1814 = vmax.xlane.f32.xlu0 %v1786
      %v1815 = vpop.xlane.xlu0 %1814
      %1816 = vmax.xlane.f32.xlu0 %v1787
      %v1817 = vpop.xlane.xlu0 %1816
      %1818 = vmax.xlane.f32.xlu0 %v1788
      %v1819 = vpop.xlane.xlu0 %1818
      %1820 = vmax.xlane.f32.xlu0 %v1789
      %v1821 = vpop.xlane.xlu0 %1820
      %v1822 = vsub.f32 %v1774, %v1791
      %v1823 = vsub.f32 %v1775, %v1793
      %v1824 = vsub.f32 %v1776, %v1795
      %v1825 = vsub.f32 %v1777, %v1797
      %v1826 = vsub.f32 %v1778, %v1799
      %v1827 = vsub.f32 %v1779, %v1801
      %v1828 = vsub.f32 %v1780, %v1803
      %v1829 = vsub.f32 %v1781, %v1805
      %v1830 = vsub.f32 %v1782, %v1807
      %v1831 = vsub.f32 %v1783, %v1809
      %v1832 = vsub.f32 %v1784, %v1811
      %v1833 = vsub.f32 %v1785, %v1813
      %v1834 = vsub.f32 %v1786, %v1815
      %v1835 = vsub.f32 %v1787, %v1817
      %v1836 = vsub.f32 %v1788, %v1819
      %v1837 = vsub.f32 %v1789, %v1821
      %v1838 = vmul.f32 %v1822, 1.442695
      %v1839 = vpow.pop %v1838
      %v1840 = vmul.f32 %v1823, 1.442695
      %v1841 = vpow.pop %v1840
      %v1842 = vmul.f32 %v1824, 1.442695
      %v1843 = vpow.pop %v1842
      %v1844 = vmul.f32 %v1825, 1.442695
      %v1845 = vpow.pop %v1844
      %v1846 = vmul.f32 %v1826, 1.442695
      %v1847 = vpow.pop %v1846
      %v1848 = vmul.f32 %v1827, 1.442695
      %v1849 = vpow.pop %v1848
      %v1850 = vmul.f32 %v1828, 1.442695
      %v1851 = vpow.pop %v1850
      %v1852 = vmul.f32 %v1829, 1.442695
      %v1853 = vpow.pop %v1852
      %v1854 = vmul.f32 %v1830, 1.442695
      %v1855 = vpow.pop %v1854
      %v1856 = vmul.f32 %v1831, 1.442695
      %v1857 = vpow.pop %v1856
      %v1858 = vmul.f32 %v1832, 1.442695
      %v1859 = vpow.pop %v1858
      %v1860 = vmul.f32 %v1833, 1.442695
      %v1861 = vpow.pop %v1860
      %v1862 = vmul.f32 %v1834, 1.442695
      %v1863 = vpow.pop %v1862
      %v1864 = vmul.f32 %v1835, 1.442695
      %v1865 = vpow.pop %v1864
      %v1866 = vmul.f32 %v1836, 1.442695
      %v1867 = vpow.pop %v1866
      %v1868 = vmul.f32 %v1837, 1.442695
      %v1869 = vpow.pop %v1868
      %1870 = vadd.xlane.f32.xlu0 %v1839
      %v1871 = vpop.xlane.xlu0 %1870
      %1872 = vadd.xlane.f32.xlu0 %v1841
      %v1873 = vpop.xlane.xlu0 %1872
      %1874 = vadd.xlane.f32.xlu0 %v1843
      %v1875 = vpop.xlane.xlu0 %1874
      %1876 = vadd.xlane.f32.xlu0 %v1845
      %v1877 = vpop.xlane.xlu0 %1876
      %1878 = vadd.xlane.f32.xlu0 %v1847
      %v1879 = vpop.xlane.xlu0 %1878
      %1880 = vadd.xlane.f32.xlu0 %v1849
      %v1881 = vpop.xlane.xlu0 %1880
      %1882 = vadd.xlane.f32.xlu0 %v1851
      %v1883 = vpop.xlane.xlu0 %1882
      %1884 = vadd.xlane.f32.xlu0 %v1853
      %v1885 = vpop.xlane.xlu0 %1884
      %1886 = vadd.xlane.f32.xlu0 %v1855
      %v1887 = vpop.xlane.xlu0 %1886
      %1888 = vadd.xlane.f32.xlu0 %v1857
      %v1889 = vpop.xlane.xlu0 %1888
      %1890 = vadd.xlane.f32.xlu0 %v1859
      %v1891 = vpop.xlane.xlu0 %1890
      %1892 = vadd.xlane.f32.xlu0 %v1861
      %v1893 = vpop.xlane.xlu0 %1892
      %1894 = vadd.xlane.f32.xlu0 %v1863
      %v1895 = vpop.xlane.xlu0 %1894
      %1896 = vadd.xlane.f32.xlu0 %v1865
      %v1897 = vpop.xlane.xlu0 %1896
      %1898 = vadd.xlane.f32.xlu0 %v1867
      %v1899 = vpop.xlane.xlu0 %1898
      %1900 = vadd.xlane.f32.xlu0 %v1869
      %v1901 = vpop.xlane.xlu0 %1900
      %1918 = vrot.lane.b32.xlu0 %v935, 120
      %v1919 = vpop.permute.xlu0 %1918
      %1920 = vrot.lane.b32.xlu0 %v936, 120
      %v1921 = vpop.permute.xlu0 %1920
      %1922 = vrot.lane.b32.xlu0 %v937, 120
      %v1923 = vpop.permute.xlu0 %1922
      %1924 = vrot.lane.b32.xlu0 %v938, 120
      %v1925 = vpop.permute.xlu0 %1924
      %1926 = vrot.lane.b32.xlu0 %v939, 120
      %v1927 = vpop.permute.xlu0 %1926
      %1928 = vrot.lane.b32.xlu0 %v940, 120
      %v1929 = vpop.permute.xlu0 %1928
      %1930 = vrot.lane.b32.xlu0 %v941, 120
      %v1931 = vpop.permute.xlu0 %1930
      %1932 = vrot.lane.b32.xlu0 %v942, 120
      %v1933 = vpop.permute.xlu0 %1932
      %1934 = vrot.lane.b32.xlu0 %v943, 120
      %v1935 = vpop.permute.xlu0 %1934
      %1936 = vrot.lane.b32.xlu0 %v944, 120
      %v1937 = vpop.permute.xlu0 %1936
      %1938 = vrot.lane.b32.xlu0 %v945, 120
      %v1939 = vpop.permute.xlu0 %1938
      %1940 = vrot.lane.b32.xlu0 %v946, 120
      %v1941 = vpop.permute.xlu0 %1940
      %1942 = vrot.lane.b32.xlu0 %v947, 120
      %v1943 = vpop.permute.xlu0 %1942
      %1944 = vrot.lane.b32.xlu0 %v948, 120
      %v1945 = vpop.permute.xlu0 %1944
      %1946 = vrot.lane.b32.xlu0 %v949, 120
      %v1947 = vpop.permute.xlu0 %1946
      %1948 = vrot.lane.b32.xlu0 %v950, 120
      %v1949 = vpop.permute.xlu0 %1948
      %1966 = vmatprep.subr.mxu0 0.0
      %1967 = vmatpush1.msra.mxu0 %v1949
      %1968 = vmatprep.subr.mxu0 0.0
      %1969 = vmatpush1.msra.mxu0 %v1947
      %1970 = vmatprep.subr.mxu0 0.0
      %1971 = vmatpush1.msra.mxu0 %v1945
      %1972 = vmatprep.subr.mxu0 0.0
      %1973 = vmatpush1.msra.mxu0 %v1943
      %1974 = vmatprep.subr.mxu0 0.0
      %1975 = vmatpush1.msra.mxu0 %v1941
      %1976 = vmatprep.subr.mxu0 0.0
      %1977 = vmatpush1.msra.mxu0 %v1939
      %1978 = vmatprep.subr.mxu0 0.0
      %1979 = vmatpush1.msra.mxu0 %v1937
      %1980 = vmatprep.subr.mxu0 0.0
      %1981 = vmatpush1.msra.mxu0 %v1935
      %1982 = vmatprep.subr.mxu0 0.0
      %1983 = vmatpush1.msra.mxu0 %v1933
      %1984 = vmatprep.subr.mxu0 0.0
      %1985 = vmatpush1.msra.mxu0 %v1931
      %1986 = vmatprep.subr.mxu0 0.0
      %1987 = vmatpush1.msra.mxu0 %v1929
      %1988 = vmatprep.subr.mxu0 0.0
      %1989 = vmatpush1.msra.mxu0 %v1927
      %1990 = vmatprep.subr.mxu0 0.0
      %1991 = vmatpush1.msra.mxu0 %v1925
      %1992 = vmatprep.subr.mxu0 0.0
      %1993 = vmatpush1.msra.mxu0 %v1923
      %1994 = vmatprep.subr.mxu0 0.0
      %1995 = vmatpush1.msra.mxu0 %v1921
      %1996 = vmatprep.subr.mxu0 0.0
      %1997 = vmatpush1.msra.mxu0 %v1919
      %1998 = vmatprep.subr.mxu0 0.0
      %1999 = vmatpush2.msra.mxu0 0.0
      %2000 = vmatprep.subr.mxu0 0.0
      %2001 = vmatpush2.msra.mxu0 0.0
      %2002 = vmatprep.subr.mxu0 0.0
      %2003 = vmatpush2.msra.mxu0 0.0
      %2004 = vmatprep.subr.mxu0 0.0
      %2005 = vmatpush2.msra.mxu0 0.0
      %2006 = vmatprep.subr.mxu0 0.0
      %2007 = vmatpush2.msra.mxu0 0.0
      %2008 = vmatprep.subr.mxu0 0.0
      %2009 = vmatpush2.msra.mxu0 0.0
      %2010 = vmatprep.subr.mxu0 0.0
      %2011 = vmatpush2.msra.mxu0 0.0
      %2012 = vmatprep.subr.mxu0 0.0
      %2013 = vmatpush2.msra.mxu0 0.0
      %2014 = vmatprep.subr.mxu0 0.0
      %2015 = vmatpush2.msra.mxu0 0.0
      %2016 = vmatprep.subr.mxu0 0.0
      %2017 = vmatpush2.msra.mxu0 0.0
      %2018 = vmatprep.subr.mxu0 0.0
      %2019 = vmatpush2.msra.mxu0 0.0
      %2020 = vmatprep.subr.mxu0 0.0
      %2021 = vmatpush2.msra.mxu0 0.0
      %2022 = vmatprep.subr.mxu0 0.0
      %2023 = vmatpush2.msra.mxu0 0.0
      %2024 = vmatprep.subr.mxu0 0.0
      %2025 = vmatpush2.msra.mxu0 0.0
      %2026 = vmatprep.subr.mxu0 0.0
      %2027 = vmatpush2.msra.mxu0 0.0
      %2028 = vmatprep.subr.mxu0 0.0
      %2029 = vmatpush2.msra.mxu0 0.0
      %2030 = vmatprep.mubr.f32.mxu0 0.0
      %2031 = vmatmul.mubr.f32.gmra.mxu0 %v1839
      %v2032 = vpop.f32.mrf.mxu0
      %v2033 = vadd.f32 0.0, %v2032
      %v2034 = vpop.f32.mrf.mxu0
      %2035 = vmatprep.mubr.f32.mxu0 0.0
      %2036 = vmatmul.mubr.f32.gmra.mxu0 %v1841
      %v2037 = vpop.f32.mrf.mxu0
      %v2038 = vadd.f32 0.0, %v2037
      %v2039 = vpop.f32.mrf.mxu0
      %2040 = vmatprep.mubr.f32.mxu0 0.0
      %2041 = vmatmul.mubr.f32.gmra.mxu0 %v1843
      %v2042 = vpop.f32.mrf.mxu0
      %v2043 = vadd.f32 0.0, %v2042
      %v2044 = vpop.f32.mrf.mxu0
      %2045 = vmatprep.mubr.f32.mxu0 0.0
      %2046 = vmatmul.mubr.f32.gmra.mxu0 %v1845
      %v2047 = vpop.f32.mrf.mxu0
      %v2048 = vadd.f32 0.0, %v2047
      %v2049 = vpop.f32.mrf.mxu0
      %2050 = vmatprep.mubr.f32.mxu0 0.0
      %2051 = vmatmul.mubr.f32.gmra.mxu0 %v1847
      %v2052 = vpop.f32.mrf.mxu0
      %v2053 = vadd.f32 0.0, %v2052
      %v2054 = vpop.f32.mrf.mxu0
      %2055 = vmatprep.mubr.f32.mxu0 0.0
      %2056 = vmatmul.mubr.f32.gmra.mxu0 %v1849
      %v2057 = vpop.f32.mrf.mxu0
      %v2058 = vadd.f32 0.0, %v2057
      %v2059 = vpop.f32.mrf.mxu0
      %2060 = vmatprep.mubr.f32.mxu0 0.0
      %2061 = vmatmul.mubr.f32.gmra.mxu0 %v1851
      %v2062 = vpop.f32.mrf.mxu0
      %v2063 = vadd.f32 0.0, %v2062
      %v2064 = vpop.f32.mrf.mxu0
      %2065 = vmatprep.mubr.f32.mxu0 0.0
      %2066 = vmatmul.mubr.f32.gmra.mxu0 %v1853
      %v2067 = vpop.f32.mrf.mxu0
      %v2068 = vadd.f32 0.0, %v2067
      %v2069 = vpop.f32.mrf.mxu0
      %2070 = vmatprep.mubr.f32.mxu0 0.0
      %2071 = vmatmul.mubr.f32.gmra.mxu0 %v1855
      %v2072 = vpop.f32.mrf.mxu0
      %v2073 = vadd.f32 0.0, %v2072
      %v2074 = vpop.f32.mrf.mxu0
      %2075 = vmatprep.mubr.f32.mxu0 0.0
      %2076 = vmatmul.mubr.f32.gmra.mxu0 %v1857
      %v2077 = vpop.f32.mrf.mxu0
      %v2078 = vadd.f32 0.0, %v2077
      %v2079 = vpop.f32.mrf.mxu0
      %2080 = vmatprep.mubr.f32.mxu0 0.0
      %2081 = vmatmul.mubr.f32.gmra.mxu0 %v1859
      %v2082 = vpop.f32.mrf.mxu0
      %v2083 = vadd.f32 0.0, %v2082
      %v2084 = vpop.f32.mrf.mxu0
      %2085 = vmatprep.mubr.f32.mxu0 0.0
      %2086 = vmatmul.mubr.f32.gmra.mxu0 %v1861
      %v2087 = vpop.f32.mrf.mxu0
      %v2088 = vadd.f32 0.0, %v2087
      %v2089 = vpop.f32.mrf.mxu0
      %2090 = vmatprep.mubr.f32.mxu0 0.0
      %2091 = vmatmul.mubr.f32.gmra.mxu0 %v1863
      %v2092 = vpop.f32.mrf.mxu0
      %v2093 = vadd.f32 0.0, %v2092
      %v2094 = vpop.f32.mrf.mxu0
      %2095 = vmatprep.mubr.f32.mxu0 0.0
      %2096 = vmatmul.mubr.f32.gmra.mxu0 %v1865
      %v2097 = vpop.f32.mrf.mxu0
      %v2098 = vadd.f32 0.0, %v2097
      %v2099 = vpop.f32.mrf.mxu0
      %2100 = vmatprep.mubr.f32.mxu0 0.0
      %2101 = vmatmul.mubr.f32.gmra.mxu0 %v1867
      %v2102 = vpop.f32.mrf.mxu0
      %v2103 = vadd.f32 0.0, %v2102
      %v2104 = vpop.f32.mrf.mxu0
      %2105 = vmatprep.mubr.f32.mxu0 0.0
      %2106 = vmatmul.mubr.f32.gmra.mxu0 %v1869
      %v2107 = vpop.f32.mrf.mxu0
      %v2108 = vadd.f32 0.0, %v2107
      %v2109 = vpop.f32.mrf.mxu0
      %2110 = vdwg.mxu0
      %v2111 = vrcp.pop %v1871
      %v2112 = vrcp.pop %v1873
      %v2113 = vrcp.pop %v1875
      %v2114 = vrcp.pop %v1877
      %v2115 = vrcp.pop %v1879
      %v2116 = vrcp.pop %v1881
      %v2117 = vrcp.pop %v1883
      %v2118 = vrcp.pop %v1885
      %v2119 = vrcp.pop %v1887
      %v2120 = vrcp.pop %v1889
      %v2121 = vrcp.pop %v1891
      %v2122 = vrcp.pop %v1893
      %v2123 = vrcp.pop %v1895
      %v2124 = vrcp.pop %v1897
      %v2125 = vrcp.pop %v1899
      %v2126 = vrcp.pop %v1901
      %v2127 = vmul.f32 %v2033, %v2111
      %v2128 = vmul.f32 %v2038, %v2112
      %v2129 = vmul.f32 %v2043, %v2113
      %v2130 = vmul.f32 %v2048, %v2114
      %v2131 = vmul.f32 %v2053, %v2115
      %v2132 = vmul.f32 %v2058, %v2116
      %v2133 = vmul.f32 %v2063, %v2117
      %v2134 = vmul.f32 %v2068, %v2118
      %v2135 = vmul.f32 %v2073, %v2119
      %v2136 = vmul.f32 %v2078, %v2120
      %v2137 = vmul.f32 %v2083, %v2121
      %v2138 = vmul.f32 %v2088, %v2122
      %v2139 = vmul.f32 %v2093, %v2123
      %v2140 = vmul.f32 %v2098, %v2124
      %v2141 = vmul.f32 %v2103, %v2125
      %v2142 = vmul.f32 %v2108, %v2126
      %2143 = vrot.lane.b32.xlu0 %v903, 112
      %v2144 = vpop.permute.xlu0 %2143
      %2145 = vrot.lane.b32.xlu0 %v904, 112
      %v2146 = vpop.permute.xlu0 %2145
      %2147 = vrot.lane.b32.xlu0 %v905, 112
      %v2148 = vpop.permute.xlu0 %2147
      %2149 = vrot.lane.b32.xlu0 %v906, 112
      %v2150 = vpop.permute.xlu0 %2149
      %2151 = vrot.lane.b32.xlu0 %v907, 112
      %v2152 = vpop.permute.xlu0 %2151
      %2153 = vrot.lane.b32.xlu0 %v908, 112
      %v2154 = vpop.permute.xlu0 %2153
      %2155 = vrot.lane.b32.xlu0 %v909, 112
      %v2156 = vpop.permute.xlu0 %2155
      %2157 = vrot.lane.b32.xlu0 %v910, 112
      %v2158 = vpop.permute.xlu0 %2157
      %2159 = vrot.lane.b32.xlu0 %v911, 112
      %v2160 = vpop.permute.xlu0 %2159
      %2161 = vrot.lane.b32.xlu0 %v912, 112
      %v2162 = vpop.permute.xlu0 %2161
      %2163 = vrot.lane.b32.xlu0 %v913, 112
      %v2164 = vpop.permute.xlu0 %2163
      %2165 = vrot.lane.b32.xlu0 %v914, 112
      %v2166 = vpop.permute.xlu0 %2165
      %2167 = vrot.lane.b32.xlu0 %v915, 112
      %v2168 = vpop.permute.xlu0 %2167
      %2169 = vrot.lane.b32.xlu0 %v916, 112
      %v2170 = vpop.permute.xlu0 %2169
      %2171 = vrot.lane.b32.xlu0 %v917, 112
      %v2172 = vpop.permute.xlu0 %2171
      %2173 = vrot.lane.b32.xlu0 %v918, 112
      %v2174 = vpop.permute.xlu0 %2173
      %2175 = vrot.lane.b32.xlu0 %v919, 112
      %v2176 = vpop.permute.xlu0 %2175
      %2177 = vrot.lane.b32.xlu0 %v920, 112
      %v2178 = vpop.permute.xlu0 %2177
      %2179 = vrot.lane.b32.xlu0 %v921, 112
      %v2180 = vpop.permute.xlu0 %2179
      %2181 = vrot.lane.b32.xlu0 %v922, 112
      %v2182 = vpop.permute.xlu0 %2181
      %2183 = vrot.lane.b32.xlu0 %v923, 112
      %v2184 = vpop.permute.xlu0 %2183
      %2185 = vrot.lane.b32.xlu0 %v924, 112
      %v2186 = vpop.permute.xlu0 %2185
      %2187 = vrot.lane.b32.xlu0 %v925, 112
      %v2188 = vpop.permute.xlu0 %2187
      %2189 = vrot.lane.b32.xlu0 %v926, 112
      %v2190 = vpop.permute.xlu0 %2189
      %2191 = vrot.lane.b32.xlu0 %v927, 112
      %v2192 = vpop.permute.xlu0 %2191
      %2193 = vrot.lane.b32.xlu0 %v928, 112
      %v2194 = vpop.permute.xlu0 %2193
      %2195 = vrot.lane.b32.xlu0 %v929, 112
      %v2196 = vpop.permute.xlu0 %2195
      %2197 = vrot.lane.b32.xlu0 %v930, 112
      %v2198 = vpop.permute.xlu0 %2197
      %2199 = vrot.lane.b32.xlu0 %v931, 112
      %v2200 = vpop.permute.xlu0 %2199
      %2201 = vrot.lane.b32.xlu0 %v932, 112
      %v2202 = vpop.permute.xlu0 %2201
      %2203 = vrot.lane.b32.xlu0 %v933, 112
      %v2204 = vpop.permute.xlu0 %2203
      %2205 = vrot.lane.b32.xlu0 %v934, 112
      %v2206 = vpop.permute.xlu0 %2205
      %v2207 = vsel %vm954, %v2144, 0
      %v2209 = vsel %vm954, %v2146, 0
      %v2211 = vsel %vm954, %v2148, 0
      %v2213 = vsel %vm954, %v2150, 0
      %v2215 = vsel %vm954, %v2152, 0
      %v2217 = vsel %vm954, %v2154, 0
      %v2219 = vsel %vm954, %v2156, 0
      %v2221 = vsel %vm954, %v2158, 0
      %v2223 = vsel %vm954, %v2160, 0
      %v2225 = vsel %vm954, %v2162, 0
      %v2227 = vsel %vm954, %v2164, 0
      %v2229 = vsel %vm954, %v2166, 0
      %v2231 = vsel %vm954, %v2168, 0
      %v2233 = vsel %vm954, %v2170, 0
      %v2235 = vsel %vm954, %v2172, 0
      %v2237 = vsel %vm954, %v2174, 0
      %v2239 = vsel %vm954, %v2176, 0
      %v2241 = vsel %vm954, %v2178, 0
      %v2243 = vsel %vm954, %v2180, 0
      %v2245 = vsel %vm954, %v2182, 0
      %v2247 = vsel %vm954, %v2184, 0
      %v2249 = vsel %vm954, %v2186, 0
      %v2251 = vsel %vm954, %v2188, 0
      %v2253 = vsel %vm954, %v2190, 0
      %v2255 = vsel %vm954, %v2192, 0
      %v2257 = vsel %vm954, %v2194, 0
      %v2259 = vsel %vm954, %v2196, 0
      %v2261 = vsel %vm954, %v2198, 0
      %v2263 = vsel %vm954, %v2200, 0
      %v2265 = vsel %vm954, %v2202, 0
      %v2267 = vsel %vm954, %v2204, 0
      %v2269 = vsel %vm954, %v2206, 0
      %2271 = vmatprep.subr.mxu0 0.0
      %2272 = vmatpush1.xpose.msra.mxu0 %v2269
      %2273 = vmatprep.subr.mxu0 0.0
      %2274 = vmatpush1.xpose.msra.mxu0 %v2267
      %2275 = vmatprep.subr.mxu0 0.0
      %2276 = vmatpush1.xpose.msra.mxu0 %v2265
      %2277 = vmatprep.subr.mxu0 0.0
      %2278 = vmatpush1.xpose.msra.mxu0 %v2263
      %2279 = vmatprep.subr.mxu0 0.0
      %2280 = vmatpush1.xpose.msra.mxu0 %v2261
      %2281 = vmatprep.subr.mxu0 0.0
      %2282 = vmatpush1.xpose.msra.mxu0 %v2259
      %2283 = vmatprep.subr.mxu0 0.0
      %2284 = vmatpush1.xpose.msra.mxu0 %v2257
      %2285 = vmatprep.subr.mxu0 0.0
      %2286 = vmatpush1.xpose.msra.mxu0 %v2255
      %2287 = vmatprep.subr.mxu0 0.0
      %2288 = vmatpush1.xpose.msra.mxu0 %v2253
      %2289 = vmatprep.subr.mxu0 0.0
      %2290 = vmatpush1.xpose.msra.mxu0 %v2251
      %2291 = vmatprep.subr.mxu0 0.0
      %2292 = vmatpush1.xpose.msra.mxu0 %v2249
      %2293 = vmatprep.subr.mxu0 0.0
      %2294 = vmatpush1.xpose.msra.mxu0 %v2247
      %2295 = vmatprep.subr.mxu0 0.0
      %2296 = vmatpush1.xpose.msra.mxu0 %v2245
      %2297 = vmatprep.subr.mxu0 0.0
      %2298 = vmatpush1.xpose.msra.mxu0 %v2243
      %2299 = vmatprep.subr.mxu0 0.0
      %2300 = vmatpush1.xpose.msra.mxu0 %v2241
      %2301 = vmatprep.subr.mxu0 0.0
      %2302 = vmatpush1.xpose.msra.mxu0 %v2239
      %2303 = vmatprep.subr.mxu0 0.0
      %2304 = vmatpush2.xpose.msra.mxu0 0.0
      %2305 = vmatprep.subr.mxu0 0.0
      %2306 = vmatpush2.xpose.msra.mxu0 0.0
      %2307 = vmatprep.subr.mxu0 0.0
      %2308 = vmatpush2.xpose.msra.mxu0 0.0
      %2309 = vmatprep.subr.mxu0 0.0
      %2310 = vmatpush2.xpose.msra.mxu0 0.0
      %2311 = vmatprep.subr.mxu0 0.0
      %2312 = vmatpush2.xpose.msra.mxu0 0.0
      %2313 = vmatprep.subr.mxu0 0.0
      %2314 = vmatpush2.xpose.msra.mxu0 0.0
      %2315 = vmatprep.subr.mxu0 0.0
      %2316 = vmatpush2.xpose.msra.mxu0 0.0
      %2317 = vmatprep.subr.mxu0 0.0
      %2318 = vmatpush2.xpose.msra.mxu0 0.0
      %2319 = vmatprep.subr.mxu0 0.0
      %2320 = vmatpush2.xpose.msra.mxu0 0.0
      %2321 = vmatprep.subr.mxu0 0.0
      %2322 = vmatpush2.xpose.msra.mxu0 0.0
      %2323 = vmatprep.subr.mxu0 0.0
      %2324 = vmatpush2.xpose.msra.mxu0 0.0
      %2325 = vmatprep.subr.mxu0 0.0
      %2326 = vmatpush2.xpose.msra.mxu0 0.0
      %2327 = vmatprep.subr.mxu0 0.0
      %2328 = vmatpush2.xpose.msra.mxu0 0.0
      %2329 = vmatprep.subr.mxu0 0.0
      %2330 = vmatpush2.xpose.msra.mxu0 0.0
      %2331 = vmatprep.subr.mxu0 0.0
      %2332 = vmatpush2.xpose.msra.mxu0 0.0
      %2333 = vmatprep.subr.mxu0 0.0
      %2334 = vmatpush2.xpose.msra.mxu0 0.0
      %2335 = vmatprep.mubr.f32.mxu0 0.0
      %2336 = vmatmul.mubr.f32.gmra.mxu0 %v2207
      %v2337 = vpop.f32.mrf.mxu0
      %v2338 = vadd.f32 0.0, %v2337
      %v2339 = vpop.f32.mrf.mxu0
      %2340 = vmatprep.mubr.f32.mxu0 0.0
      %2341 = vmatmul.mubr.f32.gmra.mxu0 %v2209
      %v2342 = vpop.f32.mrf.mxu0
      %v2343 = vadd.f32 0.0, %v2342
      %v2344 = vpop.f32.mrf.mxu0
      %2345 = vmatprep.mubr.f32.mxu0 0.0
      %2346 = vmatmul.mubr.f32.gmra.mxu0 %v2211
      %v2347 = vpop.f32.mrf.mxu0
      %v2348 = vadd.f32 0.0, %v2347
      %v2349 = vpop.f32.mrf.mxu0
      %2350 = vmatprep.mubr.f32.mxu0 0.0
      %2351 = vmatmul.mubr.f32.gmra.mxu0 %v2213
      %v2352 = vpop.f32.mrf.mxu0
      %v2353 = vadd.f32 0.0, %v2352
      %v2354 = vpop.f32.mrf.mxu0
      %2355 = vmatprep.mubr.f32.mxu0 0.0
      %2356 = vmatmul.mubr.f32.gmra.mxu0 %v2215
      %v2357 = vpop.f32.mrf.mxu0
      %v2358 = vadd.f32 0.0, %v2357
      %v2359 = vpop.f32.mrf.mxu0
      %2360 = vmatprep.mubr.f32.mxu0 0.0
      %2361 = vmatmul.mubr.f32.gmra.mxu0 %v2217
      %v2362 = vpop.f32.mrf.mxu0
      %v2363 = vadd.f32 0.0, %v2362
      %v2364 = vpop.f32.mrf.mxu0
      %2365 = vmatprep.mubr.f32.mxu0 0.0
      %2366 = vmatmul.mubr.f32.gmra.mxu0 %v2219
      %v2367 = vpop.f32.mrf.mxu0
      %v2368 = vadd.f32 0.0, %v2367
      %v2369 = vpop.f32.mrf.mxu0
      %2370 = vmatprep.mubr.f32.mxu0 0.0
      %2371 = vmatmul.mubr.f32.gmra.mxu0 %v2221
      %v2372 = vpop.f32.mrf.mxu0
      %v2373 = vadd.f32 0.0, %v2372
      %v2374 = vpop.f32.mrf.mxu0
      %2375 = vmatprep.mubr.f32.mxu0 0.0
      %2376 = vmatmul.mubr.f32.gmra.mxu0 %v2223
      %v2377 = vpop.f32.mrf.mxu0
      %v2378 = vadd.f32 0.0, %v2377
      %v2379 = vpop.f32.mrf.mxu0
      %2380 = vmatprep.mubr.f32.mxu0 0.0
      %2381 = vmatmul.mubr.f32.gmra.mxu0 %v2225
      %v2382 = vpop.f32.mrf.mxu0
      %v2383 = vadd.f32 0.0, %v2382
      %v2384 = vpop.f32.mrf.mxu0
      %2385 = vmatprep.mubr.f32.mxu0 0.0
      %2386 = vmatmul.mubr.f32.gmra.mxu0 %v2227
      %v2387 = vpop.f32.mrf.mxu0
      %v2388 = vadd.f32 0.0, %v2387
      %v2389 = vpop.f32.mrf.mxu0
      %2390 = vmatprep.mubr.f32.mxu0 0.0
      %2391 = vmatmul.mubr.f32.gmra.mxu0 %v2229
      %v2392 = vpop.f32.mrf.mxu0
      %v2393 = vadd.f32 0.0, %v2392
      %v2394 = vpop.f32.mrf.mxu0
      %2395 = vmatprep.mubr.f32.mxu0 0.0
      %2396 = vmatmul.mubr.f32.gmra.mxu0 %v2231
      %v2397 = vpop.f32.mrf.mxu0
      %v2398 = vadd.f32 0.0, %v2397
      %v2399 = vpop.f32.mrf.mxu0
      %2400 = vmatprep.mubr.f32.mxu0 0.0
      %2401 = vmatmul.mubr.f32.gmra.mxu0 %v2233
      %v2402 = vpop.f32.mrf.mxu0
      %v2403 = vadd.f32 0.0, %v2402
      %v2404 = vpop.f32.mrf.mxu0
      %2405 = vmatprep.mubr.f32.mxu0 0.0
      %2406 = vmatmul.mubr.f32.gmra.mxu0 %v2235
      %v2407 = vpop.f32.mrf.mxu0
      %v2408 = vadd.f32 0.0, %v2407
      %v2409 = vpop.f32.mrf.mxu0
      %2410 = vmatprep.mubr.f32.mxu0 0.0
      %2411 = vmatmul.mubr.f32.gmra.mxu0 %v2237
      %v2412 = vpop.f32.mrf.mxu0
      %v2413 = vadd.f32 0.0, %v2412
      %v2414 = vpop.f32.mrf.mxu0
      %2415 = vdwg.mxu0
      %v2416 = vsel %vm953, %v2338, -inf
      %v2417 = vsel %vm953, %v2343, -inf
      %v2418 = vsel %vm953, %v2348, -inf
      %v2419 = vsel %vm953, %v2353, -inf
      %v2420 = vsel %vm953, %v2358, -inf
      %v2421 = vsel %vm953, %v2363, -inf
      %v2422 = vsel %vm953, %v2368, -inf
      %v2423 = vsel %vm953, %v2373, -inf
      %v2424 = vsel %vm953, %v2378, -inf
      %v2425 = vsel %vm953, %v2383, -inf
      %v2426 = vsel %vm953, %v2388, -inf
      %v2427 = vsel %vm953, %v2393, -inf
      %v2428 = vsel %vm953, %v2398, -inf
      %v2429 = vsel %vm953, %v2403, -inf
      %v2430 = vsel %vm953, %v2408, -inf
      %v2431 = vsel %vm953, %v2413, -inf
      %2432 = vmax.xlane.f32.xlu0 %v2416
      %v2433 = vpop.xlane.xlu0 %2432
      %2434 = vmax.xlane.f32.xlu0 %v2417
      %v2435 = vpop.xlane.xlu0 %2434
      %2436 = vmax.xlane.f32.xlu0 %v2418
      %v2437 = vpop.xlane.xlu0 %2436
      %2438 = vmax.xlane.f32.xlu0 %v2419
      %v2439 = vpop.xlane.xlu0 %2438
      %2440 = vmax.xlane.f32.xlu0 %v2420
      %v2441 = vpop.xlane.xlu0 %2440
      %2442 = vmax.xlane.f32.xlu0 %v2421
      %v2443 = vpop.xlane.xlu0 %2442
      %2444 = vmax.xlane.f32.xlu0 %v2422
      %v2445 = vpop.xlane.xlu0 %2444
      %2446 = vmax.xlane.f32.xlu0 %v2423
      %v2447 = vpop.xlane.xlu0 %2446
      %2448 = vmax.xlane.f32.xlu0 %v2424
      %v2449 = vpop.xlane.xlu0 %2448
      %2450 = vmax.xlane.f32.xlu0 %v2425
      %v2451 = vpop.xlane.xlu0 %2450
      %2452 = vmax.xlane.f32.xlu0 %v2426
      %v2453 = vpop.xlane.xlu0 %2452
      %2454 = vmax.xlane.f32.xlu0 %v2427
      %v2455 = vpop.xlane.xlu0 %2454
      %2456 = vmax.xlane.f32.xlu0 %v2428
      %v2457 = vpop.xlane.xlu0 %2456
      %2458 = vmax.xlane.f32.xlu0 %v2429
      %v2459 = vpop.xlane.xlu0 %2458
      %2460 = vmax.xlane.f32.xlu0 %v2430
      %v2461 = vpop.xlane.xlu0 %2460
      %2462 = vmax.xlane.f32.xlu0 %v2431
      %v2463 = vpop.xlane.xlu0 %2462
      %v2464 = vsub.f32 %v2416, %v2433
      %v2465 = vsub.f32 %v2417, %v2435
      %v2466 = vsub.f32 %v2418, %v2437
      %v2467 = vsub.f32 %v2419, %v2439
      %v2468 = vsub.f32 %v2420, %v2441
      %v2469 = vsub.f32 %v2421, %v2443
      %v2470 = vsub.f32 %v2422, %v2445
      %v2471 = vsub.f32 %v2423, %v2447
      %v2472 = vsub.f32 %v2424, %v2449
      %v2473 = vsub.f32 %v2425, %v2451
      %v2474 = vsub.f32 %v2426, %v2453
      %v2475 = vsub.f32 %v2427, %v2455
      %v2476 = vsub.f32 %v2428, %v2457
      %v2477 = vsub.f32 %v2429, %v2459
      %v2478 = vsub.f32 %v2430, %v2461
      %v2479 = vsub.f32 %v2431, %v2463
      %v2480 = vmul.f32 %v2464, 1.442695
      %v2481 = vpow.pop %v2480
      %v2482 = vmul.f32 %v2465, 1.442695
      %v2483 = vpow.pop %v2482
      %v2484 = vmul.f32 %v2466, 1.442695
      %v2485 = vpow.pop %v2484
      %v2486 = vmul.f32 %v2467, 1.442695
      %v2487 = vpow.pop %v2486
      %v2488 = vmul.f32 %v2468, 1.442695
      %v2489 = vpow.pop %v2488
      %v2490 = vmul.f32 %v2469, 1.442695
      %v2491 = vpow.pop %v2490
      %v2492 = vmul.f32 %v2470, 1.442695
      %v2493 = vpow.pop %v2492
      %v2494 = vmul.f32 %v2471, 1.442695
      %v2495 = vpow.pop %v2494
      %v2496 = vmul.f32 %v2472, 1.442695
      %v2497 = vpow.pop %v2496
      %v2498 = vmul.f32 %v2473, 1.442695
      %v2499 = vpow.pop %v2498
      %v2500 = vmul.f32 %v2474, 1.442695
      %v2501 = vpow.pop %v2500
      %v2502 = vmul.f32 %v2475, 1.442695
      %v2503 = vpow.pop %v2502
      %v2504 = vmul.f32 %v2476, 1.442695
      %v2505 = vpow.pop %v2504
      %v2506 = vmul.f32 %v2477, 1.442695
      %v2507 = vpow.pop %v2506
      %v2508 = vmul.f32 %v2478, 1.442695
      %v2509 = vpow.pop %v2508
      %v2510 = vmul.f32 %v2479, 1.442695
      %v2511 = vpow.pop %v2510
      %2512 = vadd.xlane.f32.xlu0 %v2481
      %v2513 = vpop.xlane.xlu0 %2512
      %2514 = vadd.xlane.f32.xlu0 %v2483
      %v2515 = vpop.xlane.xlu0 %2514
      %2516 = vadd.xlane.f32.xlu0 %v2485
      %v2517 = vpop.xlane.xlu0 %2516
      %2518 = vadd.xlane.f32.xlu0 %v2487
      %v2519 = vpop.xlane.xlu0 %2518
      %2520 = vadd.xlane.f32.xlu0 %v2489
      %v2521 = vpop.xlane.xlu0 %2520
      %2522 = vadd.xlane.f32.xlu0 %v2491
      %v2523 = vpop.xlane.xlu0 %2522
      %2524 = vadd.xlane.f32.xlu0 %v2493
      %v2525 = vpop.xlane.xlu0 %2524
      %2526 = vadd.xlane.f32.xlu0 %v2495
      %v2527 = vpop.xlane.xlu0 %2526
      %2528 = vadd.xlane.f32.xlu0 %v2497
      %v2529 = vpop.xlane.xlu0 %2528
      %2530 = vadd.xlane.f32.xlu0 %v2499
      %v2531 = vpop.xlane.xlu0 %2530
      %2532 = vadd.xlane.f32.xlu0 %v2501
      %v2533 = vpop.xlane.xlu0 %2532
      %2534 = vadd.xlane.f32.xlu0 %v2503
      %v2535 = vpop.xlane.xlu0 %2534
      %2536 = vadd.xlane.f32.xlu0 %v2505
      %v2537 = vpop.xlane.xlu0 %2536
      %2538 = vadd.xlane.f32.xlu0 %v2507
      %v2539 = vpop.xlane.xlu0 %2538
      %2540 = vadd.xlane.f32.xlu0 %v2509
      %v2541 = vpop.xlane.xlu0 %2540
      %2542 = vadd.xlane.f32.xlu0 %v2511
      %v2543 = vpop.xlane.xlu0 %2542
      %2544 = vrot.lane.b32.xlu0 %v935, 112
      %v2545 = vpop.permute.xlu0 %2544
      %2546 = vrot.lane.b32.xlu0 %v936, 112
      %v2547 = vpop.permute.xlu0 %2546
      %2548 = vrot.lane.b32.xlu0 %v937, 112
      %v2549 = vpop.permute.xlu0 %2548
      %2550 = vrot.lane.b32.xlu0 %v938, 112
      %v2551 = vpop.permute.xlu0 %2550
      %2552 = vrot.lane.b32.xlu0 %v939, 112
      %v2553 = vpop.permute.xlu0 %2552
      %2554 = vrot.lane.b32.xlu0 %v940, 112
      %v2555 = vpop.permute.xlu0 %2554
      %2556 = vrot.lane.b32.xlu0 %v941, 112
      %v2557 = vpop.permute.xlu0 %2556
      %2558 = vrot.lane.b32.xlu0 %v942, 112
      %v2559 = vpop.permute.xlu0 %2558
      %2560 = vrot.lane.b32.xlu0 %v943, 112
      %v2561 = vpop.permute.xlu0 %2560
      %2562 = vrot.lane.b32.xlu0 %v944, 112
      %v2563 = vpop.permute.xlu0 %2562
      %2564 = vrot.lane.b32.xlu0 %v945, 112
      %v2565 = vpop.permute.xlu0 %2564
      %2566 = vrot.lane.b32.xlu0 %v946, 112
      %v2567 = vpop.permute.xlu0 %2566
      %2568 = vrot.lane.b32.xlu0 %v947, 112
      %v2569 = vpop.permute.xlu0 %2568
      %2570 = vrot.lane.b32.xlu0 %v948, 112
      %v2571 = vpop.permute.xlu0 %2570
      %2572 = vrot.lane.b32.xlu0 %v949, 112
      %v2573 = vpop.permute.xlu0 %2572
      %2574 = vrot.lane.b32.xlu0 %v950, 112
      %v2575 = vpop.permute.xlu0 %2574
      %2592 = vmatprep.subr.mxu0 0.0
      %2593 = vmatpush1.msra.mxu0 %v2575
      %2594 = vmatprep.subr.mxu0 0.0
      %2595 = vmatpush1.msra.mxu0 %v2573
      %2596 = vmatprep.subr.mxu0 0.0
      %2597 = vmatpush1.msra.mxu0 %v2571
      %2598 = vmatprep.subr.mxu0 0.0
      %2599 = vmatpush1.msra.mxu0 %v2569
      %2600 = vmatprep.subr.mxu0 0.0
      %2601 = vmatpush1.msra.mxu0 %v2567
      %2602 = vmatprep.subr.mxu0 0.0
      %2603 = vmatpush1.msra.mxu0 %v2565
      %2604 = vmatprep.subr.mxu0 0.0
      %2605 = vmatpush1.msra.mxu0 %v2563
      %2606 = vmatprep.subr.mxu0 0.0
      %2607 = vmatpush1.msra.mxu0 %v2561
      %2608 = vmatprep.subr.mxu0 0.0
      %2609 = vmatpush1.msra.mxu0 %v2559
      %2610 = vmatprep.subr.mxu0 0.0
      %2611 = vmatpush1.msra.mxu0 %v2557
      %2612 = vmatprep.subr.mxu0 0.0
      %2613 = vmatpush1.msra.mxu0 %v2555
      %2614 = vmatprep.subr.mxu0 0.0
      %2615 = vmatpush1.msra.mxu0 %v2553
      %2616 = vmatprep.subr.mxu0 0.0
      %2617 = vmatpush1.msra.mxu0 %v2551
      %2618 = vmatprep.subr.mxu0 0.0
      %2619 = vmatpush1.msra.mxu0 %v2549
      %2620 = vmatprep.subr.mxu0 0.0
      %2621 = vmatpush1.msra.mxu0 %v2547
      %2622 = vmatprep.subr.mxu0 0.0
      %2623 = vmatpush1.msra.mxu0 %v2545
      %2624 = vmatprep.subr.mxu0 0.0
      %2625 = vmatpush2.msra.mxu0 0.0
      %2626 = vmatprep.subr.mxu0 0.0
      %2627 = vmatpush2.msra.mxu0 0.0
      %2628 = vmatprep.subr.mxu0 0.0
      %2629 = vmatpush2.msra.mxu0 0.0
      %2630 = vmatprep.subr.mxu0 0.0
      %2631 = vmatpush2.msra.mxu0 0.0
      %2632 = vmatprep.subr.mxu0 0.0
      %2633 = vmatpush2.msra.mxu0 0.0
      %2634 = vmatprep.subr.mxu0 0.0
      %2635 = vmatpush2.msra.mxu0 0.0
      %2636 = vmatprep.subr.mxu0 0.0
      %2637 = vmatpush2.msra.mxu0 0.0
      %2638 = vmatprep.subr.mxu0 0.0
      %2639 = vmatpush2.msra.mxu0 0.0
      %2640 = vmatprep.subr.mxu0 0.0
      %2641 = vmatpush2.msra.mxu0 0.0
      %2642 = vmatprep.subr.mxu0 0.0
      %2643 = vmatpush2.msra.mxu0 0.0
      %2644 = vmatprep.subr.mxu0 0.0
      %2645 = vmatpush2.msra.mxu0 0.0
      %2646 = vmatprep.subr.mxu0 0.0
      %2647 = vmatpush2.msra.mxu0 0.0
      %2648 = vmatprep.subr.mxu0 0.0
      %2649 = vmatpush2.msra.mxu0 0.0
      %2650 = vmatprep.subr.mxu0 0.0
      %2651 = vmatpush2.msra.mxu0 0.0
      %2652 = vmatprep.subr.mxu0 0.0
      %2653 = vmatpush2.msra.mxu0 0.0
      %2654 = vmatprep.subr.mxu0 0.0
      %2655 = vmatpush2.msra.mxu0 0.0
      %2656 = vmatprep.mubr.f32.mxu0 0.0
      %2657 = vmatmul.mubr.f32.gmra.mxu0 %v2481
      %v2658 = vpop.f32.mrf.mxu0
      %v2659 = vadd.f32 0.0, %v2658
      %v2660 = vpop.f32.mrf.mxu0
      %2661 = vmatprep.mubr.f32.mxu0 0.0
      %2662 = vmatmul.mubr.f32.gmra.mxu0 %v2483
      %v2663 = vpop.f32.mrf.mxu0
      %v2664 = vadd.f32 0.0, %v2663
      %v2665 = vpop.f32.mrf.mxu0
      %2666 = vmatprep.mubr.f32.mxu0 0.0
      %2667 = vmatmul.mubr.f32.gmra.mxu0 %v2485
      %v2668 = vpop.f32.mrf.mxu0
      %v2669 = vadd.f32 0.0, %v2668
      %v2670 = vpop.f32.mrf.mxu0
      %2671 = vmatprep.mubr.f32.mxu0 0.0
      %2672 = vmatmul.mubr.f32.gmra.mxu0 %v2487
      %v2673 = vpop.f32.mrf.mxu0
      %v2674 = vadd.f32 0.0, %v2673
      %v2675 = vpop.f32.mrf.mxu0
      %2676 = vmatprep.mubr.f32.mxu0 0.0
      %2677 = vmatmul.mubr.f32.gmra.mxu0 %v2489
      %v2678 = vpop.f32.mrf.mxu0
      %v2679 = vadd.f32 0.0, %v2678
      %v2680 = vpop.f32.mrf.mxu0
      %2681 = vmatprep.mubr.f32.mxu0 0.0
      %2682 = vmatmul.mubr.f32.gmra.mxu0 %v2491
      %v2683 = vpop.f32.mrf.mxu0
      %v2684 = vadd.f32 0.0, %v2683
      %v2685 = vpop.f32.mrf.mxu0
      %2686 = vmatprep.mubr.f32.mxu0 0.0
      %2687 = vmatmul.mubr.f32.gmra.mxu0 %v2493
      %v2688 = vpop.f32.mrf.mxu0
      %v2689 = vadd.f32 0.0, %v2688
      %v2690 = vpop.f32.mrf.mxu0
      %2691 = vmatprep.mubr.f32.mxu0 0.0
      %2692 = vmatmul.mubr.f32.gmra.mxu0 %v2495
      %v2693 = vpop.f32.mrf.mxu0
      %v2694 = vadd.f32 0.0, %v2693
      %v2695 = vpop.f32.mrf.mxu0
      %2696 = vmatprep.mubr.f32.mxu0 0.0
      %2697 = vmatmul.mubr.f32.gmra.mxu0 %v2497
      %v2698 = vpop.f32.mrf.mxu0
      %v2699 = vadd.f32 0.0, %v2698
      %v2700 = vpop.f32.mrf.mxu0
      %2701 = vmatprep.mubr.f32.mxu0 0.0
      %2702 = vmatmul.mubr.f32.gmra.mxu0 %v2499
      %v2703 = vpop.f32.mrf.mxu0
      %v2704 = vadd.f32 0.0, %v2703
      %v2705 = vpop.f32.mrf.mxu0
      %2706 = vmatprep.mubr.f32.mxu0 0.0
      %2707 = vmatmul.mubr.f32.gmra.mxu0 %v2501
      %v2708 = vpop.f32.mrf.mxu0
      %v2709 = vadd.f32 0.0, %v2708
      %v2710 = vpop.f32.mrf.mxu0
      %2711 = vmatprep.mubr.f32.mxu0 0.0
      %2712 = vmatmul.mubr.f32.gmra.mxu0 %v2503
      %v2713 = vpop.f32.mrf.mxu0
      %v2714 = vadd.f32 0.0, %v2713
      %v2715 = vpop.f32.mrf.mxu0
      %2716 = vmatprep.mubr.f32.mxu0 0.0
      %2717 = vmatmul.mubr.f32.gmra.mxu0 %v2505
      %v2718 = vpop.f32.mrf.mxu0
      %v2719 = vadd.f32 0.0, %v2718
      %v2720 = vpop.f32.mrf.mxu0
      %2721 = vmatprep.mubr.f32.mxu0 0.0
      %2722 = vmatmul.mubr.f32.gmra.mxu0 %v2507
      %v2723 = vpop.f32.mrf.mxu0
      %v2724 = vadd.f32 0.0, %v2723
      %v2725 = vpop.f32.mrf.mxu0
      %2726 = vmatprep.mubr.f32.mxu0 0.0
      %2727 = vmatmul.mubr.f32.gmra.mxu0 %v2509
      %v2728 = vpop.f32.mrf.mxu0
      %v2729 = vadd.f32 0.0, %v2728
      %v2730 = vpop.f32.mrf.mxu0
      %2731 = vmatprep.mubr.f32.mxu0 0.0
      %2732 = vmatmul.mubr.f32.gmra.mxu0 %v2511
      %v2733 = vpop.f32.mrf.mxu0
      %v2734 = vadd.f32 0.0, %v2733
      %v2735 = vpop.f32.mrf.mxu0
      %2736 = vdwg.mxu0
      %v2737 = vrcp.pop %v2513
      %v2738 = vrcp.pop %v2515
      %v2739 = vrcp.pop %v2517
      %v2740 = vrcp.pop %v2519
      %v2741 = vrcp.pop %v2521
      %v2742 = vrcp.pop %v2523
      %v2743 = vrcp.pop %v2525
      %v2744 = vrcp.pop %v2527
      %v2745 = vrcp.pop %v2529
      %v2746 = vrcp.pop %v2531
      %v2747 = vrcp.pop %v2533
      %v2748 = vrcp.pop %v2535
      %v2749 = vrcp.pop %v2537
      %v2750 = vrcp.pop %v2539
      %v2751 = vrcp.pop %v2541
      %v2752 = vrcp.pop %v2543
      %v2753 = vmul.f32 %v2659, %v2737
      %v2754 = vmul.f32 %v2664, %v2738
      %v2755 = vmul.f32 %v2669, %v2739
      %v2756 = vmul.f32 %v2674, %v2740
      %v2757 = vmul.f32 %v2679, %v2741
      %v2758 = vmul.f32 %v2684, %v2742
      %v2759 = vmul.f32 %v2689, %v2743
      %v2760 = vmul.f32 %v2694, %v2744
      %v2761 = vmul.f32 %v2699, %v2745
      %v2762 = vmul.f32 %v2704, %v2746
      %v2763 = vmul.f32 %v2709, %v2747
      %v2764 = vmul.f32 %v2714, %v2748
      %v2765 = vmul.f32 %v2719, %v2749
      %v2766 = vmul.f32 %v2724, %v2750
      %v2767 = vmul.f32 %v2729, %v2751
      %v2768 = vmul.f32 %v2734, %v2752
      %2769 = vrot.lane.b32.xlu0 %v903, 104
      %v2770 = vpop.permute.xlu0 %2769
      %2771 = vrot.lane.b32.xlu0 %v904, 104
      %v2772 = vpop.permute.xlu0 %2771
      %2773 = vrot.lane.b32.xlu0 %v905, 104
      %v2774 = vpop.permute.xlu0 %2773
      %2775 = vrot.lane.b32.xlu0 %v906, 104
      %v2776 = vpop.permute.xlu0 %2775
      %2777 = vrot.lane.b32.xlu0 %v907, 104
      %v2778 = vpop.permute.xlu0 %2777
      %2779 = vrot.lane.b32.xlu0 %v908, 104
      %v2780 = vpop.permute.xlu0 %2779
      %2781 = vrot.lane.b32.xlu0 %v909, 104
      %v2782 = vpop.permute.xlu0 %2781
      %2783 = vrot.lane.b32.xlu0 %v910, 104
      %v2784 = vpop.permute.xlu0 %2783
      %2785 = vrot.lane.b32.xlu0 %v911, 104
      %v2786 = vpop.permute.xlu0 %2785
      %2787 = vrot.lane.b32.xlu0 %v912, 104
      %v2788 = vpop.permute.xlu0 %2787
      %2789 = vrot.lane.b32.xlu0 %v913, 104
      %v2790 = vpop.permute.xlu0 %2789
      %2791 = vrot.lane.b32.xlu0 %v914, 104
      %v2792 = vpop.permute.xlu0 %2791
      %2793 = vrot.lane.b32.xlu0 %v915, 104
      %v2794 = vpop.permute.xlu0 %2793
      %2795 = vrot.lane.b32.xlu0 %v916, 104
      %v2796 = vpop.permute.xlu0 %2795
      %2797 = vrot.lane.b32.xlu0 %v917, 104
      %v2798 = vpop.permute.xlu0 %2797
      %2799 = vrot.lane.b32.xlu0 %v918, 104
      %v2800 = vpop.permute.xlu0 %2799
      %2801 = vrot.lane.b32.xlu0 %v919, 104
      %v2802 = vpop.permute.xlu0 %2801
      %2803 = vrot.lane.b32.xlu0 %v920, 104
      %v2804 = vpop.permute.xlu0 %2803
      %2805 = vrot.lane.b32.xlu0 %v921, 104
      %v2806 = vpop.permute.xlu0 %2805
      %2807 = vrot.lane.b32.xlu0 %v922, 104
      %v2808 = vpop.permute.xlu0 %2807
      %2809 = vrot.lane.b32.xlu0 %v923, 104
      %v2810 = vpop.permute.xlu0 %2809
      %2811 = vrot.lane.b32.xlu0 %v924, 104
      %v2812 = vpop.permute.xlu0 %2811
      %2813 = vrot.lane.b32.xlu0 %v925, 104
      %v2814 = vpop.permute.xlu0 %2813
      %2815 = vrot.lane.b32.xlu0 %v926, 104
      %v2816 = vpop.permute.xlu0 %2815
      %2817 = vrot.lane.b32.xlu0 %v927, 104
      %v2818 = vpop.permute.xlu0 %2817
      %2819 = vrot.lane.b32.xlu0 %v928, 104
      %v2820 = vpop.permute.xlu0 %2819
      %2821 = vrot.lane.b32.xlu0 %v929, 104
      %v2822 = vpop.permute.xlu0 %2821
      %2823 = vrot.lane.b32.xlu0 %v930, 104
      %v2824 = vpop.permute.xlu0 %2823
      %2825 = vrot.lane.b32.xlu0 %v931, 104
      %v2826 = vpop.permute.xlu0 %2825
      %2827 = vrot.lane.b32.xlu0 %v932, 104
      %v2828 = vpop.permute.xlu0 %2827
      %2829 = vrot.lane.b32.xlu0 %v933, 104
      %v2830 = vpop.permute.xlu0 %2829
      %2831 = vrot.lane.b32.xlu0 %v934, 104
      %v2832 = vpop.permute.xlu0 %2831
      %v2833 = vsel %vm954, %v2770, 0
      %v2835 = vsel %vm954, %v2772, 0
      %v2837 = vsel %vm954, %v2774, 0
      %v2839 = vsel %vm954, %v2776, 0
      %v2841 = vsel %vm954, %v2778, 0
      %v2843 = vsel %vm954, %v2780, 0
      %v2845 = vsel %vm954, %v2782, 0
      %v2847 = vsel %vm954, %v2784, 0
      %v2849 = vsel %vm954, %v2786, 0
      %v2851 = vsel %vm954, %v2788, 0
      %v2853 = vsel %vm954, %v2790, 0
      %v2855 = vsel %vm954, %v2792, 0
      %v2857 = vsel %vm954, %v2794, 0
      %v2859 = vsel %vm954, %v2796, 0
      %v2861 = vsel %vm954, %v2798, 0
      %v2863 = vsel %vm954, %v2800, 0
      %v2865 = vsel %vm954, %v2802, 0
      %v2867 = vsel %vm954, %v2804, 0
      %v2869 = vsel %vm954, %v2806, 0
      %v2871 = vsel %vm954, %v2808, 0
      %v2873 = vsel %vm954, %v2810, 0
      %v2875 = vsel %vm954, %v2812, 0
      %v2877 = vsel %vm954, %v2814, 0
      %v2879 = vsel %vm954, %v2816, 0
      %v2881 = vsel %vm954, %v2818, 0
      %v2883 = vsel %vm954, %v2820, 0
      %v2885 = vsel %vm954, %v2822, 0
      %v2887 = vsel %vm954, %v2824, 0
      %v2889 = vsel %vm954, %v2826, 0
      %v2891 = vsel %vm954, %v2828, 0
      %v2893 = vsel %vm954, %v2830, 0
      %v2895 = vsel %vm954, %v2832, 0
      %2897 = vmatprep.subr.mxu0 0.0
      %2898 = vmatpush1.xpose.msra.mxu0 %v2895
      %2899 = vmatprep.subr.mxu0 0.0
      %2900 = vmatpush1.xpose.msra.mxu0 %v2893
      %2901 = vmatprep.subr.mxu0 0.0
      %2902 = vmatpush1.xpose.msra.mxu0 %v2891
      %2903 = vmatprep.subr.mxu0 0.0
      %2904 = vmatpush1.xpose.msra.mxu0 %v2889
      %2905 = vmatprep.subr.mxu0 0.0
      %2906 = vmatpush1.xpose.msra.mxu0 %v2887
      %2907 = vmatprep.subr.mxu0 0.0
      %2908 = vmatpush1.xpose.msra.mxu0 %v2885
      %2909 = vmatprep.subr.mxu0 0.0
      %2910 = vmatpush1.xpose.msra.mxu0 %v2883
      %2911 = vmatprep.subr.mxu0 0.0
      %2912 = vmatpush1.xpose.msra.mxu0 %v2881
      %2913 = vmatprep.subr.mxu0 0.0
      %2914 = vmatpush1.xpose.msra.mxu0 %v2879
      %2915 = vmatprep.subr.mxu0 0.0
      %2916 = vmatpush1.xpose.msra.mxu0 %v2877
      %2917 = vmatprep.subr.mxu0 0.0
      %2918 = vmatpush1.xpose.msra.mxu0 %v2875
      %2919 = vmatprep.subr.mxu0 0.0
      %2920 = vmatpush1.xpose.msra.mxu0 %v2873
      %2921 = vmatprep.subr.mxu0 0.0
      %2922 = vmatpush1.xpose.msra.mxu0 %v2871
      %2923 = vmatprep.subr.mxu0 0.0
      %2924 = vmatpush1.xpose.msra.mxu0 %v2869
      %2925 = vmatprep.subr.mxu0 0.0
      %2926 = vmatpush1.xpose.msra.mxu0 %v2867
      %2927 = vmatprep.subr.mxu0 0.0
      %2928 = vmatpush1.xpose.msra.mxu0 %v2865
      %2929 = vmatprep.subr.mxu0 0.0
      %2930 = vmatpush2.xpose.msra.mxu0 0.0
      %2931 = vmatprep.subr.mxu0 0.0
      %2932 = vmatpush2.xpose.msra.mxu0 0.0
      %2933 = vmatprep.subr.mxu0 0.0
      %2934 = vmatpush2.xpose.msra.mxu0 0.0
      %2935 = vmatprep.subr.mxu0 0.0
      %2936 = vmatpush2.xpose.msra.mxu0 0.0
      %2937 = vmatprep.subr.mxu0 0.0
      %2938 = vmatpush2.xpose.msra.mxu0 0.0
      %2939 = vmatprep.subr.mxu0 0.0
      %2940 = vmatpush2.xpose.msra.mxu0 0.0
      %2941 = vmatprep.subr.mxu0 0.0
      %2942 = vmatpush2.xpose.msra.mxu0 0.0
      %2943 = vmatprep.subr.mxu0 0.0
      %2944 = vmatpush2.xpose.msra.mxu0 0.0
      %2945 = vmatprep.subr.mxu0 0.0
      %2946 = vmatpush2.xpose.msra.mxu0 0.0
      %2947 = vmatprep.subr.mxu0 0.0
      %2948 = vmatpush2.xpose.msra.mxu0 0.0
      %2949 = vmatprep.subr.mxu0 0.0
      %2950 = vmatpush2.xpose.msra.mxu0 0.0
      %2951 = vmatprep.subr.mxu0 0.0
      %2952 = vmatpush2.xpose.msra.mxu0 0.0
      %2953 = vmatprep.subr.mxu0 0.0
      %2954 = vmatpush2.xpose.msra.mxu0 0.0
      %2955 = vmatprep.subr.mxu0 0.0
      %2956 = vmatpush2.xpose.msra.mxu0 0.0
      %2957 = vmatprep.subr.mxu0 0.0
      %2958 = vmatpush2.xpose.msra.mxu0 0.0
      %2959 = vmatprep.subr.mxu0 0.0
      %2960 = vmatpush2.xpose.msra.mxu0 0.0
      %2961 = vmatprep.mubr.f32.mxu0 0.0
      %2962 = vmatmul.mubr.f32.gmra.mxu0 %v2833
      %v2963 = vpop.f32.mrf.mxu0
      %v2964 = vadd.f32 0.0, %v2963
      %v2965 = vpop.f32.mrf.mxu0
      %2966 = vmatprep.mubr.f32.mxu0 0.0
      %2967 = vmatmul.mubr.f32.gmra.mxu0 %v2835
      %v2968 = vpop.f32.mrf.mxu0
      %v2969 = vadd.f32 0.0, %v2968
      %v2970 = vpop.f32.mrf.mxu0
      %2971 = vmatprep.mubr.f32.mxu0 0.0
      %2972 = vmatmul.mubr.f32.gmra.mxu0 %v2837
      %v2973 = vpop.f32.mrf.mxu0
      %v2974 = vadd.f32 0.0, %v2973
      %v2975 = vpop.f32.mrf.mxu0
      %2976 = vmatprep.mubr.f32.mxu0 0.0
      %2977 = vmatmul.mubr.f32.gmra.mxu0 %v2839
      %v2978 = vpop.f32.mrf.mxu0
      %v2979 = vadd.f32 0.0, %v2978
      %v2980 = vpop.f32.mrf.mxu0
      %2981 = vmatprep.mubr.f32.mxu0 0.0
      %2982 = vmatmul.mubr.f32.gmra.mxu0 %v2841
      %v2983 = vpop.f32.mrf.mxu0
      %v2984 = vadd.f32 0.0, %v2983
      %v2985 = vpop.f32.mrf.mxu0
      %2986 = vmatprep.mubr.f32.mxu0 0.0
      %2987 = vmatmul.mubr.f32.gmra.mxu0 %v2843
      %v2988 = vpop.f32.mrf.mxu0
      %v2989 = vadd.f32 0.0, %v2988
      %v2990 = vpop.f32.mrf.mxu0
      %2991 = vmatprep.mubr.f32.mxu0 0.0
      %2992 = vmatmul.mubr.f32.gmra.mxu0 %v2845
      %v2993 = vpop.f32.mrf.mxu0
      %v2994 = vadd.f32 0.0, %v2993
      %v2995 = vpop.f32.mrf.mxu0
      %2996 = vmatprep.mubr.f32.mxu0 0.0
      %2997 = vmatmul.mubr.f32.gmra.mxu0 %v2847
      %v2998 = vpop.f32.mrf.mxu0
      %v2999 = vadd.f32 0.0, %v2998
      %v3000 = vpop.f32.mrf.mxu0
      %3001 = vmatprep.mubr.f32.mxu0 0.0
      %3002 = vmatmul.mubr.f32.gmra.mxu0 %v2849
      %v3003 = vpop.f32.mrf.mxu0
      %v3004 = vadd.f32 0.0, %v3003
      %v3005 = vpop.f32.mrf.mxu0
      %3006 = vmatprep.mubr.f32.mxu0 0.0
      %3007 = vmatmul.mubr.f32.gmra.mxu0 %v2851
      %v3008 = vpop.f32.mrf.mxu0
      %v3009 = vadd.f32 0.0, %v3008
      %v3010 = vpop.f32.mrf.mxu0
      %3011 = vmatprep.mubr.f32.mxu0 0.0
      %3012 = vmatmul.mubr.f32.gmra.mxu0 %v2853
      %v3013 = vpop.f32.mrf.mxu0
      %v3014 = vadd.f32 0.0, %v3013
      %v3015 = vpop.f32.mrf.mxu0
      %3016 = vmatprep.mubr.f32.mxu0 0.0
      %3017 = vmatmul.mubr.f32.gmra.mxu0 %v2855
      %v3018 = vpop.f32.mrf.mxu0
      %v3019 = vadd.f32 0.0, %v3018
      %v3020 = vpop.f32.mrf.mxu0
      %3021 = vmatprep.mubr.f32.mxu0 0.0
      %3022 = vmatmul.mubr.f32.gmra.mxu0 %v2857
      %v3023 = vpop.f32.mrf.mxu0
      %v3024 = vadd.f32 0.0, %v3023
      %v3025 = vpop.f32.mrf.mxu0
      %3026 = vmatprep.mubr.f32.mxu0 0.0
      %3027 = vmatmul.mubr.f32.gmra.mxu0 %v2859
      %v3028 = vpop.f32.mrf.mxu0
      %v3029 = vadd.f32 0.0, %v3028
      %v3030 = vpop.f32.mrf.mxu0
      %3031 = vmatprep.mubr.f32.mxu0 0.0
      %3032 = vmatmul.mubr.f32.gmra.mxu0 %v2861
      %v3033 = vpop.f32.mrf.mxu0
      %v3034 = vadd.f32 0.0, %v3033
      %v3035 = vpop.f32.mrf.mxu0
      %3036 = vmatprep.mubr.f32.mxu0 0.0
      %3037 = vmatmul.mubr.f32.gmra.mxu0 %v2863
      %v3038 = vpop.f32.mrf.mxu0
      %v3039 = vadd.f32 0.0, %v3038
      %v3040 = vpop.f32.mrf.mxu0
      %3041 = vdwg.mxu0
      %v3042 = vsel %vm953, %v2964, -inf
      %v3043 = vsel %vm953, %v2969, -inf
      %v3044 = vsel %vm953, %v2974, -inf
      %v3045 = vsel %vm953, %v2979, -inf
      %v3046 = vsel %vm953, %v2984, -inf
      %v3047 = vsel %vm953, %v2989, -inf
      %v3048 = vsel %vm953, %v2994, -inf
      %v3049 = vsel %vm953, %v2999, -inf
      %v3050 = vsel %vm953, %v3004, -inf
      %v3051 = vsel %vm953, %v3009, -inf
      %v3052 = vsel %vm953, %v3014, -inf
      %v3053 = vsel %vm953, %v3019, -inf
      %v3054 = vsel %vm953, %v3024, -inf
      %v3055 = vsel %vm953, %v3029, -inf
      %v3056 = vsel %vm953, %v3034, -inf
      %v3057 = vsel %vm953, %v3039, -inf
      %3058 = vmax.xlane.f32.xlu0 %v3042
      %v3059 = vpop.xlane.xlu0 %3058
      %3060 = vmax.xlane.f32.xlu0 %v3043
      %v3061 = vpop.xlane.xlu0 %3060
      %3062 = vmax.xlane.f32.xlu0 %v3044
      %v3063 = vpop.xlane.xlu0 %3062
      %3064 = vmax.xlane.f32.xlu0 %v3045
      %v3065 = vpop.xlane.xlu0 %3064
      %3066 = vmax.xlane.f32.xlu0 %v3046
      %v3067 = vpop.xlane.xlu0 %3066
      %3068 = vmax.xlane.f32.xlu0 %v3047
      %v3069 = vpop.xlane.xlu0 %3068
      %3070 = vmax.xlane.f32.xlu0 %v3048
      %v3071 = vpop.xlane.xlu0 %3070
      %3072 = vmax.xlane.f32.xlu0 %v3049
      %v3073 = vpop.xlane.xlu0 %3072
      %3074 = vmax.xlane.f32.xlu0 %v3050
      %v3075 = vpop.xlane.xlu0 %3074
      %3076 = vmax.xlane.f32.xlu0 %v3051
      %v3077 = vpop.xlane.xlu0 %3076
      %3078 = vmax.xlane.f32.xlu0 %v3052
      %v3079 = vpop.xlane.xlu0 %3078
      %3080 = vmax.xlane.f32.xlu0 %v3053
      %v3081 = vpop.xlane.xlu0 %3080
      %3082 = vmax.xlane.f32.xlu0 %v3054
      %v3083 = vpop.xlane.xlu0 %3082
      %3084 = vmax.xlane.f32.xlu0 %v3055
      %v3085 = vpop.xlane.xlu0 %3084
      %3086 = vmax.xlane.f32.xlu0 %v3056
      %v3087 = vpop.xlane.xlu0 %3086
      %3088 = vmax.xlane.f32.xlu0 %v3057
      %v3089 = vpop.xlane.xlu0 %3088
      %v3090 = vsub.f32 %v3042, %v3059
      %v3091 = vsub.f32 %v3043, %v3061
      %v3092 = vsub.f32 %v3044, %v3063
      %v3093 = vsub.f32 %v3045, %v3065
      %v3094 = vsub.f32 %v3046, %v3067
      %v3095 = vsub.f32 %v3047, %v3069
      %v3096 = vsub.f32 %v3048, %v3071
      %v3097 = vsub.f32 %v3049, %v3073
      %v3098 = vsub.f32 %v3050, %v3075
      %v3099 = vsub.f32 %v3051, %v3077
      %v3100 = vsub.f32 %v3052, %v3079
      %v3101 = vsub.f32 %v3053, %v3081
      %v3102 = vsub.f32 %v3054, %v3083
      %v3103 = vsub.f32 %v3055, %v3085
      %v3104 = vsub.f32 %v3056, %v3087
      %v3105 = vsub.f32 %v3057, %v3089
      %v3106 = vmul.f32 %v3090, 1.442695
      %v3107 = vpow.pop %v3106
      %v3108 = vmul.f32 %v3091, 1.442695
      %v3109 = vpow.pop %v3108
      %v3110 = vmul.f32 %v3092, 1.442695
      %v3111 = vpow.pop %v3110
      %v3112 = vmul.f32 %v3093, 1.442695
      %v3113 = vpow.pop %v3112
      %v3114 = vmul.f32 %v3094, 1.442695
      %v3115 = vpow.pop %v3114
      %v3116 = vmul.f32 %v3095, 1.442695
      %v3117 = vpow.pop %v3116
      %v3118 = vmul.f32 %v3096, 1.442695
      %v3119 = vpow.pop %v3118
      %v3120 = vmul.f32 %v3097, 1.442695
      %v3121 = vpow.pop %v3120
      %v3122 = vmul.f32 %v3098, 1.442695
      %v3123 = vpow.pop %v3122
      %v3124 = vmul.f32 %v3099, 1.442695
      %v3125 = vpow.pop %v3124
      %v3126 = vmul.f32 %v3100, 1.442695
      %v3127 = vpow.pop %v3126
      %v3128 = vmul.f32 %v3101, 1.442695
      %v3129 = vpow.pop %v3128
      %v3130 = vmul.f32 %v3102, 1.442695
      %v3131 = vpow.pop %v3130
      %v3132 = vmul.f32 %v3103, 1.442695
      %v3133 = vpow.pop %v3132
      %v3134 = vmul.f32 %v3104, 1.442695
      %v3135 = vpow.pop %v3134
      %v3136 = vmul.f32 %v3105, 1.442695
      %v3137 = vpow.pop %v3136
      %3138 = vadd.xlane.f32.xlu0 %v3107
      %v3139 = vpop.xlane.xlu0 %3138
      %3140 = vadd.xlane.f32.xlu0 %v3109
      %v3141 = vpop.xlane.xlu0 %3140
      %3142 = vadd.xlane.f32.xlu0 %v3111
      %v3143 = vpop.xlane.xlu0 %3142
      %3144 = vadd.xlane.f32.xlu0 %v3113
      %v3145 = vpop.xlane.xlu0 %3144
      %3146 = vadd.xlane.f32.xlu0 %v3115
      %v3147 = vpop.xlane.xlu0 %3146
      %3148 = vadd.xlane.f32.xlu0 %v3117
      %v3149 = vpop.xlane.xlu0 %3148
      %3150 = vadd.xlane.f32.xlu0 %v3119
      %v3151 = vpop.xlane.xlu0 %3150
      %3152 = vadd.xlane.f32.xlu0 %v3121
      %v3153 = vpop.xlane.xlu0 %3152
      %3154 = vadd.xlane.f32.xlu0 %v3123
      %v3155 = vpop.xlane.xlu0 %3154
      %3156 = vadd.xlane.f32.xlu0 %v3125
      %v3157 = vpop.xlane.xlu0 %3156
      %3158 = vadd.xlane.f32.xlu0 %v3127
      %v3159 = vpop.xlane.xlu0 %3158
      %3160 = vadd.xlane.f32.xlu0 %v3129
      %v3161 = vpop.xlane.xlu0 %3160
      %3162 = vadd.xlane.f32.xlu0 %v3131
      %v3163 = vpop.xlane.xlu0 %3162
      %3164 = vadd.xlane.f32.xlu0 %v3133
      %v3165 = vpop.xlane.xlu0 %3164
      %3166 = vadd.xlane.f32.xlu0 %v3135
      %v3167 = vpop.xlane.xlu0 %3166
      %3168 = vadd.xlane.f32.xlu0 %v3137
      %v3169 = vpop.xlane.xlu0 %3168
      %3170 = vrot.lane.b32.xlu0 %v935, 104
      %v3171 = vpop.permute.xlu0 %3170
      %3172 = vrot.lane.b32.xlu0 %v936, 104
      %v3173 = vpop.permute.xlu0 %3172
      %3174 = vrot.lane.b32.xlu0 %v937, 104
      %v3175 = vpop.permute.xlu0 %3174
      %3176 = vrot.lane.b32.xlu0 %v938, 104
      %v3177 = vpop.permute.xlu0 %3176
      %3178 = vrot.lane.b32.xlu0 %v939, 104
      %v3179 = vpop.permute.xlu0 %3178
      %3180 = vrot.lane.b32.xlu0 %v940, 104
      %v3181 = vpop.permute.xlu0 %3180
      %3182 = vrot.lane.b32.xlu0 %v941, 104
      %v3183 = vpop.permute.xlu0 %3182
      %3184 = vrot.lane.b32.xlu0 %v942, 104
      %v3185 = vpop.permute.xlu0 %3184
      %3186 = vrot.lane.b32.xlu0 %v943, 104
      %v3187 = vpop.permute.xlu0 %3186
      %3188 = vrot.lane.b32.xlu0 %v944, 104
      %v3189 = vpop.permute.xlu0 %3188
      %3190 = vrot.lane.b32.xlu0 %v945, 104
      %v3191 = vpop.permute.xlu0 %3190
      %3192 = vrot.lane.b32.xlu0 %v946, 104
      %v3193 = vpop.permute.xlu0 %3192
      %3194 = vrot.lane.b32.xlu0 %v947, 104
      %v3195 = vpop.permute.xlu0 %3194
      %3196 = vrot.lane.b32.xlu0 %v948, 104
      %v3197 = vpop.permute.xlu0 %3196
      %3198 = vrot.lane.b32.xlu0 %v949, 104
      %v3199 = vpop.permute.xlu0 %3198
      %3200 = vrot.lane.b32.xlu0 %v950, 104
      %v3201 = vpop.permute.xlu0 %3200
      %3218 = vmatprep.subr.mxu0 0.0
      %3219 = vmatpush1.msra.mxu0 %v3201
      %3220 = vmatprep.subr.mxu0 0.0
      %3221 = vmatpush1.msra.mxu0 %v3199
      %3222 = vmatprep.subr.mxu0 0.0
      %3223 = vmatpush1.msra.mxu0 %v3197
      %3224 = vmatprep.subr.mxu0 0.0
      %3225 = vmatpush1.msra.mxu0 %v3195
      %3226 = vmatprep.subr.mxu0 0.0
      %3227 = vmatpush1.msra.mxu0 %v3193
      %3228 = vmatprep.subr.mxu0 0.0
      %3229 = vmatpush1.msra.mxu0 %v3191
      %3230 = vmatprep.subr.mxu0 0.0
      %3231 = vmatpush1.msra.mxu0 %v3189
      %3232 = vmatprep.subr.mxu0 0.0
      %3233 = vmatpush1.msra.mxu0 %v3187
      %3234 = vmatprep.subr.mxu0 0.0
      %3235 = vmatpush1.msra.mxu0 %v3185
      %3236 = vmatprep.subr.mxu0 0.0
      %3237 = vmatpush1.msra.mxu0 %v3183
      %3238 = vmatprep.subr.mxu0 0.0
      %3239 = vmatpush1.msra.mxu0 %v3181
      %3240 = vmatprep.subr.mxu0 0.0
      %3241 = vmatpush1.msra.mxu0 %v3179
      %3242 = vmatprep.subr.mxu0 0.0
      %3243 = vmatpush1.msra.mxu0 %v3177
      %3244 = vmatprep.subr.mxu0 0.0
      %3245 = vmatpush1.msra.mxu0 %v3175
      %3246 = vmatprep.subr.mxu0 0.0
      %3247 = vmatpush1.msra.mxu0 %v3173
      %3248 = vmatprep.subr.mxu0 0.0
      %3249 = vmatpush1.msra.mxu0 %v3171
      %3250 = vmatprep.subr.mxu0 0.0
      %3251 = vmatpush2.msra.mxu0 0.0
      %3252 = vmatprep.subr.mxu0 0.0
      %3253 = vmatpush2.msra.mxu0 0.0
      %3254 = vmatprep.subr.mxu0 0.0
      %3255 = vmatpush2.msra.mxu0 0.0
      %3256 = vmatprep.subr.mxu0 0.0
      %3257 = vmatpush2.msra.mxu0 0.0
      %3258 = vmatprep.subr.mxu0 0.0
      %3259 = vmatpush2.msra.mxu0 0.0
      %3260 = vmatprep.subr.mxu0 0.0
      %3261 = vmatpush2.msra.mxu0 0.0
      %3262 = vmatprep.subr.mxu0 0.0
      %3263 = vmatpush2.msra.mxu0 0.0
      %3264 = vmatprep.subr.mxu0 0.0
      %3265 = vmatpush2.msra.mxu0 0.0
      %3266 = vmatprep.subr.mxu0 0.0
      %3267 = vmatpush2.msra.mxu0 0.0
      %3268 = vmatprep.subr.mxu0 0.0
      %3269 = vmatpush2.msra.mxu0 0.0
      %3270 = vmatprep.subr.mxu0 0.0
      %3271 = vmatpush2.msra.mxu0 0.0
      %3272 = vmatprep.subr.mxu0 0.0
      %3273 = vmatpush2.msra.mxu0 0.0
      %3274 = vmatprep.subr.mxu0 0.0
      %3275 = vmatpush2.msra.mxu0 0.0
      %3276 = vmatprep.subr.mxu0 0.0
      %3277 = vmatpush2.msra.mxu0 0.0
      %3278 = vmatprep.subr.mxu0 0.0
      %3279 = vmatpush2.msra.mxu0 0.0
      %3280 = vmatprep.subr.mxu0 0.0
      %3281 = vmatpush2.msra.mxu0 0.0
      %3282 = vmatprep.mubr.f32.mxu0 0.0
      %3283 = vmatmul.mubr.f32.gmra.mxu0 %v3107
      %v3284 = vpop.f32.mrf.mxu0
      %v3285 = vadd.f32 0.0, %v3284
      %v3286 = vpop.f32.mrf.mxu0
      %3287 = vmatprep.mubr.f32.mxu0 0.0
      %3288 = vmatmul.mubr.f32.gmra.mxu0 %v3109
      %v3289 = vpop.f32.mrf.mxu0
      %v3290 = vadd.f32 0.0, %v3289
      %v3291 = vpop.f32.mrf.mxu0
      %3292 = vmatprep.mubr.f32.mxu0 0.0
      %3293 = vmatmul.mubr.f32.gmra.mxu0 %v3111
      %v3294 = vpop.f32.mrf.mxu0
      %v3295 = vadd.f32 0.0, %v3294
      %v3296 = vpop.f32.mrf.mxu0
      %3297 = vmatprep.mubr.f32.mxu0 0.0
      %3298 = vmatmul.mubr.f32.gmra.mxu0 %v3113
      %v3299 = vpop.f32.mrf.mxu0
      %v3300 = vadd.f32 0.0, %v3299
      %v3301 = vpop.f32.mrf.mxu0
      %3302 = vmatprep.mubr.f32.mxu0 0.0
      %3303 = vmatmul.mubr.f32.gmra.mxu0 %v3115
      %v3304 = vpop.f32.mrf.mxu0
      %v3305 = vadd.f32 0.0, %v3304
      %v3306 = vpop.f32.mrf.mxu0
      %3307 = vmatprep.mubr.f32.mxu0 0.0
      %3308 = vmatmul.mubr.f32.gmra.mxu0 %v3117
      %v3309 = vpop.f32.mrf.mxu0
      %v3310 = vadd.f32 0.0, %v3309
      %v3311 = vpop.f32.mrf.mxu0
      %3312 = vmatprep.mubr.f32.mxu0 0.0
      %3313 = vmatmul.mubr.f32.gmra.mxu0 %v3119
      %v3314 = vpop.f32.mrf.mxu0
      %v3315 = vadd.f32 0.0, %v3314
      %v3316 = vpop.f32.mrf.mxu0
      %3317 = vmatprep.mubr.f32.mxu0 0.0
      %3318 = vmatmul.mubr.f32.gmra.mxu0 %v3121
      %v3319 = vpop.f32.mrf.mxu0
      %v3320 = vadd.f32 0.0, %v3319
      %v3321 = vpop.f32.mrf.mxu0
      %3322 = vmatprep.mubr.f32.mxu0 0.0
      %3323 = vmatmul.mubr.f32.gmra.mxu0 %v3123
      %v3324 = vpop.f32.mrf.mxu0
      %v3325 = vadd.f32 0.0, %v3324
      %v3326 = vpop.f32.mrf.mxu0
      %3327 = vmatprep.mubr.f32.mxu0 0.0
      %3328 = vmatmul.mubr.f32.gmra.mxu0 %v3125
      %v3329 = vpop.f32.mrf.mxu0
      %v3330 = vadd.f32 0.0, %v3329
      %v3331 = vpop.f32.mrf.mxu0
      %3332 = vmatprep.mubr.f32.mxu0 0.0
      %3333 = vmatmul.mubr.f32.gmra.mxu0 %v3127
      %v3334 = vpop.f32.mrf.mxu0
      %v3335 = vadd.f32 0.0, %v3334
      %v3336 = vpop.f32.mrf.mxu0
      %3337 = vmatprep.mubr.f32.mxu0 0.0
      %3338 = vmatmul.mubr.f32.gmra.mxu0 %v3129
      %v3339 = vpop.f32.mrf.mxu0
      %v3340 = vadd.f32 0.0, %v3339
      %v3341 = vpop.f32.mrf.mxu0
      %3342 = vmatprep.mubr.f32.mxu0 0.0
      %3343 = vmatmul.mubr.f32.gmra.mxu0 %v3131
      %v3344 = vpop.f32.mrf.mxu0
      %v3345 = vadd.f32 0.0, %v3344
      %v3346 = vpop.f32.mrf.mxu0
      %3347 = vmatprep.mubr.f32.mxu0 0.0
      %3348 = vmatmul.mubr.f32.gmra.mxu0 %v3133
      %v3349 = vpop.f32.mrf.mxu0
      %v3350 = vadd.f32 0.0, %v3349
      %v3351 = vpop.f32.mrf.mxu0
      %3352 = vmatprep.mubr.f32.mxu0 0.0
      %3353 = vmatmul.mubr.f32.gmra.mxu0 %v3135
      %v3354 = vpop.f32.mrf.mxu0
      %v3355 = vadd.f32 0.0, %v3354
      %v3356 = vpop.f32.mrf.mxu0
      %3357 = vmatprep.mubr.f32.mxu0 0.0
      %3358 = vmatmul.mubr.f32.gmra.mxu0 %v3137
      %v3359 = vpop.f32.mrf.mxu0
      %v3360 = vadd.f32 0.0, %v3359
      %v3361 = vpop.f32.mrf.mxu0
      %3362 = vdwg.mxu0
      %v3363 = vrcp.pop %v3139
      %v3364 = vrcp.pop %v3141
      %v3365 = vrcp.pop %v3143
      %v3366 = vrcp.pop %v3145
      %v3367 = vrcp.pop %v3147
      %v3368 = vrcp.pop %v3149
      %v3369 = vrcp.pop %v3151
      %v3370 = vrcp.pop %v3153
      %v3371 = vrcp.pop %v3155
      %v3372 = vrcp.pop %v3157
      %v3373 = vrcp.pop %v3159
      %v3374 = vrcp.pop %v3161
      %v3375 = vrcp.pop %v3163
      %v3376 = vrcp.pop %v3165
      %v3377 = vrcp.pop %v3167
      %v3378 = vrcp.pop %v3169
      %v3379 = vmul.f32 %v3285, %v3363
      %v3380 = vmul.f32 %v3290, %v3364
      %v3381 = vmul.f32 %v3295, %v3365
      %v3382 = vmul.f32 %v3300, %v3366
      %v3383 = vmul.f32 %v3305, %v3367
      %v3384 = vmul.f32 %v3310, %v3368
      %v3385 = vmul.f32 %v3315, %v3369
      %v3386 = vmul.f32 %v3320, %v3370
      %v3387 = vmul.f32 %v3325, %v3371
      %v3388 = vmul.f32 %v3330, %v3372
      %v3389 = vmul.f32 %v3335, %v3373
      %v3390 = vmul.f32 %v3340, %v3374
      %v3391 = vmul.f32 %v3345, %v3375
      %v3392 = vmul.f32 %v3350, %v3376
      %v3393 = vmul.f32 %v3355, %v3377
      %v3394 = vmul.f32 %v3360, %v3378
      %3411 = vrot.lane.b32.xlu0 %v2127, 8
      %v3412 = vpop.permute.xlu0 %3411
      %3413 = vrot.lane.b32.xlu0 %v2128, 8
      %v3414 = vpop.permute.xlu0 %3413
      %3415 = vrot.lane.b32.xlu0 %v2129, 8
      %v3416 = vpop.permute.xlu0 %3415
      %3417 = vrot.lane.b32.xlu0 %v2130, 8
      %v3418 = vpop.permute.xlu0 %3417
      %3419 = vrot.lane.b32.xlu0 %v2131, 8
      %v3420 = vpop.permute.xlu0 %3419
      %3421 = vrot.lane.b32.xlu0 %v2132, 8
      %v3422 = vpop.permute.xlu0 %3421
      %3423 = vrot.lane.b32.xlu0 %v2133, 8
      %v3424 = vpop.permute.xlu0 %3423
      %3425 = vrot.lane.b32.xlu0 %v2134, 8
      %v3426 = vpop.permute.xlu0 %3425
      %3427 = vrot.lane.b32.xlu0 %v2135, 8
      %v3428 = vpop.permute.xlu0 %3427
      %3429 = vrot.lane.b32.xlu0 %v2136, 8
      %v3430 = vpop.permute.xlu0 %3429
      %3431 = vrot.lane.b32.xlu0 %v2137, 8
      %v3432 = vpop.permute.xlu0 %3431
      %3433 = vrot.lane.b32.xlu0 %v2138, 8
      %v3434 = vpop.permute.xlu0 %3433
      %3435 = vrot.lane.b32.xlu0 %v2139, 8
      %v3436 = vpop.permute.xlu0 %3435
      %3437 = vrot.lane.b32.xlu0 %v2140, 8
      %v3438 = vpop.permute.xlu0 %3437
      %3439 = vrot.lane.b32.xlu0 %v2141, 8
      %v3440 = vpop.permute.xlu0 %3439
      %3441 = vrot.lane.b32.xlu0 %v2142, 8
      %v3442 = vpop.permute.xlu0 %3441
      %3475 = vrot.lane.b32.xlu0 %v2753, 16
      %v3476 = vpop.permute.xlu0 %3475
      %3477 = vrot.lane.b32.xlu0 %v2754, 16
      %v3478 = vpop.permute.xlu0 %3477
      %3479 = vrot.lane.b32.xlu0 %v2755, 16
      %v3480 = vpop.permute.xlu0 %3479
      %3481 = vrot.lane.b32.xlu0 %v2756, 16
      %v3482 = vpop.permute.xlu0 %3481
      %3483 = vrot.lane.b32.xlu0 %v2757, 16
      %v3484 = vpop.permute.xlu0 %3483
      %3485 = vrot.lane.b32.xlu0 %v2758, 16
      %v3486 = vpop.permute.xlu0 %3485
      %3487 = vrot.lane.b32.xlu0 %v2759, 16
      %v3488 = vpop.permute.xlu0 %3487
      %3489 = vrot.lane.b32.xlu0 %v2760, 16
      %v3490 = vpop.permute.xlu0 %3489
      %3491 = vrot.lane.b32.xlu0 %v2761, 16
      %v3492 = vpop.permute.xlu0 %3491
      %3493 = vrot.lane.b32.xlu0 %v2762, 16
      %v3494 = vpop.permute.xlu0 %3493
      %3495 = vrot.lane.b32.xlu0 %v2763, 16
      %v3496 = vpop.permute.xlu0 %3495
      %3497 = vrot.lane.b32.xlu0 %v2764, 16
      %v3498 = vpop.permute.xlu0 %3497
      %3499 = vrot.lane.b32.xlu0 %v2765, 16
      %v3500 = vpop.permute.xlu0 %3499
      %3501 = vrot.lane.b32.xlu0 %v2766, 16
      %v3502 = vpop.permute.xlu0 %3501
      %3503 = vrot.lane.b32.xlu0 %v2767, 16
      %v3504 = vpop.permute.xlu0 %3503
      %3505 = vrot.lane.b32.xlu0 %v2768, 16
      %v3506 = vpop.permute.xlu0 %3505
      %3539 = vrot.lane.b32.xlu0 %v3379, 24
      %v3540 = vpop.permute.xlu0 %3539
      %3541 = vrot.lane.b32.xlu0 %v3380, 24
      %v3542 = vpop.permute.xlu0 %3541
      %3543 = vrot.lane.b32.xlu0 %v3381, 24
      %v3544 = vpop.permute.xlu0 %3543
      %3545 = vrot.lane.b32.xlu0 %v3382, 24
      %v3546 = vpop.permute.xlu0 %3545
      %3547 = vrot.lane.b32.xlu0 %v3383, 24
      %v3548 = vpop.permute.xlu0 %3547
      %3549 = vrot.lane.b32.xlu0 %v3384, 24
      %v3550 = vpop.permute.xlu0 %3549
      %3551 = vrot.lane.b32.xlu0 %v3385, 24
      %v3552 = vpop.permute.xlu0 %3551
      %3553 = vrot.lane.b32.xlu0 %v3386, 24
      %v3554 = vpop.permute.xlu0 %3553
      %3555 = vrot.lane.b32.xlu0 %v3387, 24
      %v3556 = vpop.permute.xlu0 %3555
      %3557 = vrot.lane.b32.xlu0 %v3388, 24
      %v3558 = vpop.permute.xlu0 %3557
      %3559 = vrot.lane.b32.xlu0 %v3389, 24
      %v3560 = vpop.permute.xlu0 %3559
      %3561 = vrot.lane.b32.xlu0 %v3390, 24
      %v3562 = vpop.permute.xlu0 %3561
      %3563 = vrot.lane.b32.xlu0 %v3391, 24
      %v3564 = vpop.permute.xlu0 %3563
      %3565 = vrot.lane.b32.xlu0 %v3392, 24
      %v3566 = vpop.permute.xlu0 %3565
      %3567 = vrot.lane.b32.xlu0 %v3393, 24
      %v3568 = vpop.permute.xlu0 %3567
      %3569 = vrot.lane.b32.xlu0 %v3394, 24
      %v3570 = vpop.permute.xlu0 %3569
      %v3587 = vsel %vm954, %v1485, %v3412
      %v3588 = vsel %vm954, %v1486, %v3414
      %v3589 = vsel %vm954, %v1487, %v3416
      %v3590 = vsel %vm954, %v1488, %v3418
      %v3591 = vsel %vm954, %v1489, %v3420
      %v3592 = vsel %vm954, %v1490, %v3422
      %v3593 = vsel %vm954, %v1491, %v3424
      %v3594 = vsel %vm954, %v1492, %v3426
      %v3595 = vsel %vm954, %v1493, %v3428
      %v3596 = vsel %vm954, %v1494, %v3430
      %v3597 = vsel %vm954, %v1495, %v3432
      %v3598 = vsel %vm954, %v1496, %v3434
      %v3599 = vsel %vm954, %v1497, %v3436
      %v3600 = vsel %vm954, %v1498, %v3438
      %v3601 = vsel %vm954, %v1499, %v3440
      %v3602 = vsel %vm954, %v1500, %v3442
      %vm3603 = vcmask 130048
      %v3604 = vsel %vm3603, %v3587, %v3476
      %v3605 = vsel %vm3603, %v3588, %v3478
      %v3606 = vsel %vm3603, %v3589, %v3480
      %v3607 = vsel %vm3603, %v3590, %v3482
      %v3608 = vsel %vm3603, %v3591, %v3484
      %v3609 = vsel %vm3603, %v3592, %v3486
      %v3610 = vsel %vm3603, %v3593, %v3488
      %v3611 = vsel %vm3603, %v3594, %v3490
      %v3612 = vsel %vm3603, %v3595, %v3492
      %v3613 = vsel %vm3603, %v3596, %v3494
      %v3614 = vsel %vm3603, %v3597, %v3496
      %v3615 = vsel %vm3603, %v3598, %v3498
      %v3616 = vsel %vm3603, %v3599, %v3500
      %v3617 = vsel %vm3603, %v3600, %v3502
      %v3618 = vsel %vm3603, %v3601, %v3504
      %v3619 = vsel %vm3603, %v3602, %v3506
      %vm3620 = vcmask 195584
      %v3621 = vsel %vm3620, %v3604, %v3540
      %v3622 = vsel %vm3620, %v3605, %v3542
      %v3623 = vsel %vm3620, %v3606, %v3544
      %v3624 = vsel %vm3620, %v3607, %v3546
      %v3625 = vsel %vm3620, %v3608, %v3548
      %v3626 = vsel %vm3620, %v3609, %v3550
      %v3627 = vsel %vm3620, %v3610, %v3552
      %v3628 = vsel %vm3620, %v3611, %v3554
      %v3629 = vsel %vm3620, %v3612, %v3556
      %v3630 = vsel %vm3620, %v3613, %v3558
      %v3631 = vsel %vm3620, %v3614, %v3560
      %v3632 = vsel %vm3620, %v3615, %v3562
      %v3633 = vsel %vm3620, %v3616, %v3564
      %v3634 = vsel %vm3620, %v3617, %v3566
      %v3635 = vsel %vm3620, %v3618, %v3568
      %v3636 = vsel %vm3620, %v3619, %v3570
      %3637 = vst.msk [vmem:[#allocation4] sm:$0xff] %vm293, %v3621
      %3638 = vst.msk [vmem:[#allocation4 + $0x8] sm:$0xff] %vm293, %v3622
      %3639 = vst.msk [vmem:[#allocation4 + $0x10] sm:$0xff] %vm293, %v3623
      %3640 = vst.msk [vmem:[#allocation4 + $0x18] sm:$0xff] %vm293, %v3624
      %3641 = vst.msk [vmem:[#allocation4 + $0x20] sm:$0xff] %vm293, %v3625
      %3642 = vst.msk [vmem:[#allocation4 + $0x28] sm:$0xff] %vm293, %v3626
      %3643 = vst.msk [vmem:[#allocation4 + $0x30] sm:$0xff] %vm293, %v3627
      %3644 = vst.msk [vmem:[#allocation4 + $0x38] sm:$0xff] %vm293, %v3628
      %3645 = vst.msk [vmem:[#allocation4 + $0x40] sm:$0xff] %vm293, %v3629
      %3646 = vst.msk [vmem:[#allocation4 + $0x48] sm:$0xff] %vm293, %v3630
      %3647 = vst.msk [vmem:[#allocation4 + $0x50] sm:$0xff] %vm293, %v3631
      %3648 = vst.msk [vmem:[#allocation4 + $0x58] sm:$0xff] %vm293, %v3632
      %3649 = vst.msk [vmem:[#allocation4 + $0x60] sm:$0xff] %vm293, %v3633
      %3650 = vst.msk [vmem:[#allocation4 + $0x68] sm:$0xff] %vm293, %v3634
      %3651 = vst.msk [vmem:[#allocation4 + $0x70] sm:$0xff] %vm293, %v3635
      %3652 = vst.msk [vmem:[#allocation4 + $0x78] sm:$0xff] %vm293, %v3636
      %v3653 = vld [vmem:[#allocation4] sm:$0xff]
      %v3654 = vld [vmem:[#allocation4 + $0x8] sm:$0xff]
      %v3655 = vld [vmem:[#allocation4 + $0x10] sm:$0xff]
      %v3656 = vld [vmem:[#allocation4 + $0x18] sm:$0xff]
      %v3657 = vld [vmem:[#allocation4 + $0x20] sm:$0xff]
      %v3658 = vld [vmem:[#allocation4 + $0x28] sm:$0xff]
      %v3659 = vld [vmem:[#allocation4 + $0x30] sm:$0xff]
      %v3660 = vld [vmem:[#allocation4 + $0x38] sm:$0xff]
      %v3661 = vld [vmem:[#allocation4 + $0x40] sm:$0xff]
      %v3662 = vld [vmem:[#allocation4 + $0x48] sm:$0xff]
      %v3663 = vld [vmem:[#allocation4 + $0x50] sm:$0xff]
      %v3664 = vld [vmem:[#allocation4 + $0x58] sm:$0xff]
      %v3665 = vld [vmem:[#allocation4 + $0x60] sm:$0xff]
      %v3666 = vld [vmem:[#allocation4 + $0x68] sm:$0xff]
      %v3667 = vld [vmem:[#allocation4 + $0x70] sm:$0xff]
      %v3668 = vld [vmem:[#allocation4 + $0x78] sm:$0xff]
      %v3669 = vld [vmem:[%s3] sm:$0xff]
      %v3670 = vld [vmem:[%s3 + $0x8] sm:$0xff]
      %v3671 = vld [vmem:[%s3 + $0x10] sm:$0xff]
      %v3672 = vld [vmem:[%s3 + $0x18] sm:$0xff]
      %v3673 = vld [vmem:[%s4] sm:$0x1]
      %v3675 = vlaneseq
      %v3676 = vshrl.u32 %v3675, 7
      %v3677 = vsub.s32 0, %v3676
      %v3678 = vrot.slane %v3673, %v3677
      %v3681 = vsel %vm293, %v3653, 0
      %v3684 = vsel %vm293, %v3654, 0
      %v3687 = vsel %vm293, %v3655, 0
      %v3690 = vsel %vm293, %v3656, 0
      %v3693 = vsel %vm293, %v3657, 0
      %v3696 = vsel %vm293, %v3658, 0
      %v3699 = vsel %vm293, %v3659, 0
      %v3702 = vsel %vm293, %v3660, 0
      %v3705 = vsel %vm293, %v3661, 0
      %v3708 = vsel %vm293, %v3662, 0
      %v3711 = vsel %vm293, %v3663, 0
      %v3714 = vsel %vm293, %v3664, 0
      %v3717 = vsel %vm293, %v3665, 0
      %v3720 = vsel %vm293, %v3666, 0
      %v3723 = vsel %vm293, %v3667, 0
      %v3726 = vsel %vm293, %v3668, 0
      %3728 = vmatprep.subr.mxu0 0.0
      %3729 = vmatpush1.msra.mxu0 0.0
      %3730 = vmatprep.subr.mxu0 0.0
      %3731 = vmatpush1.msra.mxu0 0.0
      %3732 = vmatprep.subr.mxu0 0.0
      %3733 = vmatpush1.msra.mxu0 0.0
      %3734 = vmatprep.subr.mxu0 0.0
      %3735 = vmatpush1.msra.mxu0 0.0
      %3736 = vmatprep.subr.mxu0 0.0
      %3737 = vmatpush1.msra.mxu0 0.0
      %3738 = vmatprep.subr.mxu0 0.0
      %3739 = vmatpush1.msra.mxu0 0.0
      %3740 = vmatprep.subr.mxu0 0.0
      %3741 = vmatpush1.msra.mxu0 0.0
      %3742 = vmatprep.subr.mxu0 0.0
      %3743 = vmatpush1.msra.mxu0 0.0
      %3744 = vmatprep.subr.mxu0 0.0
      %3745 = vmatpush1.msra.mxu0 0.0
      %3746 = vmatprep.subr.mxu0 0.0
      %3747 = vmatpush1.msra.mxu0 0.0
      %3748 = vmatprep.subr.mxu0 0.0
      %3749 = vmatpush1.msra.mxu0 0.0
      %3750 = vmatprep.subr.mxu0 0.0
      %3751 = vmatpush1.msra.mxu0 0.0
      %3752 = vmatprep.subr.mxu0 0.0
      %3753 = vmatpush1.msra.mxu0 %v3672
      %3754 = vmatprep.subr.mxu0 0.0
      %3755 = vmatpush1.msra.mxu0 %v3671
      %3756 = vmatprep.subr.mxu0 0.0
      %3757 = vmatpush1.msra.mxu0 %v3670
      %3758 = vmatprep.subr.mxu0 0.0
      %3759 = vmatpush1.msra.mxu0 %v3669
      %3760 = vmatprep.subr.mxu0 0.0
      %3761 = vmatpush2.msra.mxu0 0.0
      %3762 = vmatprep.subr.mxu0 0.0
      %3763 = vmatpush2.msra.mxu0 0.0
      %3764 = vmatprep.subr.mxu0 0.0
      %3765 = vmatpush2.msra.mxu0 0.0
      %3766 = vmatprep.subr.mxu0 0.0
      %3767 = vmatpush2.msra.mxu0 0.0
      %3768 = vmatprep.subr.mxu0 0.0
      %3769 = vmatpush2.msra.mxu0 0.0
      %3770 = vmatprep.subr.mxu0 0.0
      %3771 = vmatpush2.msra.mxu0 0.0
      %3772 = vmatprep.subr.mxu0 0.0
      %3773 = vmatpush2.msra.mxu0 0.0
      %3774 = vmatprep.subr.mxu0 0.0
      %3775 = vmatpush2.msra.mxu0 0.0
      %3776 = vmatprep.subr.mxu0 0.0
      %3777 = vmatpush2.msra.mxu0 0.0
      %3778 = vmatprep.subr.mxu0 0.0
      %3779 = vmatpush2.msra.mxu0 0.0
      %3780 = vmatprep.subr.mxu0 0.0
      %3781 = vmatpush2.msra.mxu0 0.0
      %3782 = vmatprep.subr.mxu0 0.0
      %3783 = vmatpush2.msra.mxu0 0.0
      %3784 = vmatprep.subr.mxu0 0.0
      %3785 = vmatpush2.msra.mxu0 0.0
      %3786 = vmatprep.subr.mxu0 0.0
      %3787 = vmatpush2.msra.mxu0 0.0
      %3788 = vmatprep.subr.mxu0 0.0
      %3789 = vmatpush2.msra.mxu0 0.0
      %3790 = vmatprep.subr.mxu0 0.0
      %3791 = vmatpush2.msra.mxu0 0.0
      %3792 = vmatprep.mubr.f32.mxu0 0.0
      %3793 = vmatmul.mubr.f32.gmra.mxu0 %v3681
      %v3794 = vpop.f32.mrf.mxu0
      %v3795 = vadd.f32 %v3678, %v3794
      %v3796 = vpop.f32.mrf.mxu0
      %3797 = vmatprep.mubr.f32.mxu0 0.0
      %3798 = vmatmul.mubr.f32.gmra.mxu0 %v3684
      %v3799 = vpop.f32.mrf.mxu0
      %v3800 = vadd.f32 %v3678, %v3799
      %v3801 = vpop.f32.mrf.mxu0
      %3802 = vmatprep.mubr.f32.mxu0 0.0
      %3803 = vmatmul.mubr.f32.gmra.mxu0 %v3687
      %v3804 = vpop.f32.mrf.mxu0
      %v3805 = vadd.f32 %v3678, %v3804
      %v3806 = vpop.f32.mrf.mxu0
      %3807 = vmatprep.mubr.f32.mxu0 0.0
      %3808 = vmatmul.mubr.f32.gmra.mxu0 %v3690
      %v3809 = vpop.f32.mrf.mxu0
      %v3810 = vadd.f32 %v3678, %v3809
      %v3811 = vpop.f32.mrf.mxu0
      %3812 = vmatprep.mubr.f32.mxu0 0.0
      %3813 = vmatmul.mubr.f32.gmra.mxu0 %v3693
      %v3814 = vpop.f32.mrf.mxu0
      %v3815 = vadd.f32 %v3678, %v3814
      %v3816 = vpop.f32.mrf.mxu0
      %3817 = vmatprep.mubr.f32.mxu0 0.0
      %3818 = vmatmul.mubr.f32.gmra.mxu0 %v3696
      %v3819 = vpop.f32.mrf.mxu0
      %v3820 = vadd.f32 %v3678, %v3819
      %v3821 = vpop.f32.mrf.mxu0
      %3822 = vmatprep.mubr.f32.mxu0 0.0
      %3823 = vmatmul.mubr.f32.gmra.mxu0 %v3699
      %v3824 = vpop.f32.mrf.mxu0
      %v3825 = vadd.f32 %v3678, %v3824
      %v3826 = vpop.f32.mrf.mxu0
      %3827 = vmatprep.mubr.f32.mxu0 0.0
      %3828 = vmatmul.mubr.f32.gmra.mxu0 %v3702
      %v3829 = vpop.f32.mrf.mxu0
      %v3830 = vadd.f32 %v3678, %v3829
      %v3831 = vpop.f32.mrf.mxu0
      %3832 = vmatprep.mubr.f32.mxu0 0.0
      %3833 = vmatmul.mubr.f32.gmra.mxu0 %v3705
      %v3834 = vpop.f32.mrf.mxu0
      %v3835 = vadd.f32 %v3678, %v3834
      %v3836 = vpop.f32.mrf.mxu0
      %3837 = vmatprep.mubr.f32.mxu0 0.0
      %3838 = vmatmul.mubr.f32.gmra.mxu0 %v3708
      %v3839 = vpop.f32.mrf.mxu0
      %v3840 = vadd.f32 %v3678, %v3839
      %v3841 = vpop.f32.mrf.mxu0
      %3842 = vmatprep.mubr.f32.mxu0 0.0
      %3843 = vmatmul.mubr.f32.gmra.mxu0 %v3711
      %v3844 = vpop.f32.mrf.mxu0
      %v3845 = vadd.f32 %v3678, %v3844
      %v3846 = vpop.f32.mrf.mxu0
      %3847 = vmatprep.mubr.f32.mxu0 0.0
      %3848 = vmatmul.mubr.f32.gmra.mxu0 %v3714
      %v3849 = vpop.f32.mrf.mxu0
      %v3850 = vadd.f32 %v3678, %v3849
      %v3851 = vpop.f32.mrf.mxu0
      %3852 = vmatprep.mubr.f32.mxu0 0.0
      %3853 = vmatmul.mubr.f32.gmra.mxu0 %v3717
      %v3854 = vpop.f32.mrf.mxu0
      %v3855 = vadd.f32 %v3678, %v3854
      %v3856 = vpop.f32.mrf.mxu0
      %3857 = vmatprep.mubr.f32.mxu0 0.0
      %3858 = vmatmul.mubr.f32.gmra.mxu0 %v3720
      %v3859 = vpop.f32.mrf.mxu0
      %v3860 = vadd.f32 %v3678, %v3859
      %v3861 = vpop.f32.mrf.mxu0
      %3862 = vmatprep.mubr.f32.mxu0 0.0
      %3863 = vmatmul.mubr.f32.gmra.mxu0 %v3723
      %v3864 = vpop.f32.mrf.mxu0
      %v3865 = vadd.f32 %v3678, %v3864
      %v3866 = vpop.f32.mrf.mxu0
      %3867 = vmatprep.mubr.f32.mxu0 0.0
      %3868 = vmatmul.mubr.f32.gmra.mxu0 %v3726
      %v3869 = vpop.f32.mrf.mxu0
      %v3870 = vadd.f32 %v3678, %v3869
      %v3871 = vpop.f32.mrf.mxu0
      %3872 = vdwg.mxu0
      %3873 = vst.msk [vmem:[%s246] sm:$0xff] %vm293, %v3795
      %3874 = vst.msk [vmem:[%s246 + $0x8] sm:$0xff] %vm293, %v3800
      %3875 = vst.msk [vmem:[%s246 + $0x10] sm:$0xff] %vm293, %v3805
      %3876 = vst.msk [vmem:[%s246 + $0x18] sm:$0xff] %vm293, %v3810
      %3877 = vst.msk [vmem:[%s246 + $0x20] sm:$0xff] %vm293, %v3815
      %3878 = vst.msk [vmem:[%s246 + $0x28] sm:$0xff] %vm293, %v3820
      %3879 = vst.msk [vmem:[%s246 + $0x30] sm:$0xff] %vm293, %v3825
      %3880 = vst.msk [vmem:[%s246 + $0x38] sm:$0xff] %vm293, %v3830
      %3881 = vst.msk [vmem:[%s246 + $0x40] sm:$0xff] %vm293, %v3835
      %3882 = vst.msk [vmem:[%s246 + $0x48] sm:$0xff] %vm293, %v3840
      %3883 = vst.msk [vmem:[%s246 + $0x50] sm:$0xff] %vm293, %v3845
      %3884 = vst.msk [vmem:[%s246 + $0x58] sm:$0xff] %vm293, %v3850
      %3885 = vst.msk [vmem:[%s246 + $0x60] sm:$0xff] %vm293, %v3855
      %3886 = vst.msk [vmem:[%s246 + $0x68] sm:$0xff] %vm293, %v3860
      %3887 = vst.msk [vmem:[%s246 + $0x70] sm:$0xff] %vm293, %v3865
      %3888 = vst.msk [vmem:[%s246 + $0x78] sm:$0xff] %vm293, %v3870
      %s3889 = smul.u32 16, %s21
      %p3890 = scmp.lt.s32.totalorder %s20, 1
      %s3891 = scalar_select %p3890, %s20, 1
      %p3892 = scmp.lt.s32.totalorder %s3889, 15
      %s3893 = scalar_select %p3892, %s3889, 15
      %s3894 = smul.addr %s3891, 16
      %s3895 = sadd.s32 %s3893, %s3894
      %s3896 = smul.addr %s3895, 8
      %s3897 = scalar_lea.vmem %s5, %s3896
      // Predicated region
      $region41: #{tpu_custom_call.1} parent=39 // pred_check
        %p3898 = pneg %p158
      $region42: #{tpu_custom_call.1} parent=39 // pred_check_branch
        %3900 = sbr.rel (%p3898) target = $region44
      $region43: #{tpu_custom_call.1} parent=39 // pred_region
        %s3901 = smul.u32 16, %s21
      $region44: #{tpu_custom_call.1} parent=39 // pred_fallthru
        _
    $region40: #{tpu_custom_call.1} parent=5 // pred_fallthru
      _
    %p3902 = scmp.le.s32.totalorder 2, %s11
    // Predicated region
    $region45: #{tpu_custom_call.1} parent=5 // pred_check
      %p3903 = pneg %p3902
    $region46: #{tpu_custom_call.1} parent=5 // pred_check_branch
      %3905 = sbr.rel (%p3903) target = $region48
    $region47: #{tpu_custom_call.1} parent=5 // pred_region
      %s3906 = ssub.s32 %s11, 2
      // Predicated region
      $region49: #{tpu_custom_call.1} parent=47 // pred_check
        %p3907 = pneg %p164
      $region50: #{tpu_custom_call.1} parent=47 // pred_check_branch
        %3909 = sbr.rel (%p3907) target = $region52
      $region51: #{tpu_custom_call.1} parent=47 // pred_region
        %s3910 = smul.u32 16, %s23
        %p3911 = scmp.lt.s32.totalorder %s22, 1
        %s3912 = scalar_select %p3911, %s22, 1
        %p3913 = scmp.lt.s32.totalorder %s3910, 15
        %s3914 = scalar_select %p3913, %s3910, 15
        %s3915 = smul.addr %s3912, 16
        %s3916 = sadd.s32 %s3914, %s3915
        %s3917 = smul.addr %s3916, 8
        %s3918 = scalar_lea.vmem %s5, %s3917
      $region52: #{tpu_custom_call.1} parent=47 // pred_fallthru
        _
    $region48: #{tpu_custom_call.1} parent=5 // pred_fallthru
      _
  $region6: #{tpu_custom_call.1} parent=0 // loop_footer
    %s15 = sadd.s32 1, %s11
  $region7: #{tpu_custom_call.1} parent=0 // loop_footer_branch
    %10 = sbr.rel target = $region3
  $region8: #{tpu_custom_call.1} parent=0 // loop_exit
    _

</llo_original>
